<compile_context>
chip_gen: v6e
topology: v6e:2x2x1
jax: 0.10.0
libtpu: 0.0.40
codegen_flags: <defaults>
</compile_context>

<pallas_src>
import functools

import jax
import jax.numpy as jnp
from jax import lax
from jax.experimental import pallas as pl
from jax.experimental.pallas import tpu as pltpu


def _round_up(x, m):
    return (x + m - 1) // m * m


# ----------------------------- Pallas kernel ------------------------------ #

def _fused_matmul_kernel(w_ref, a_ref, bias_ref, o_ref, *, act):
    # (N, K) @ (K, tm) on the MXU (bf16 operands, f32 accumulation), then a
    # fused per-channel bias + activation.  tm is a multiple of 128, so the
    # output stores are unmasked full-lane stores.
    acc = jnp.dot(w_ref[...], a_ref[...], preferred_element_type=jnp.float32)
    y = acc + bias_ref[...]
    if act == "relu":
        y = jnp.maximum(y, 0.0)
    elif act == "tanh":
        y = jnp.tanh(y)
    o_ref[...] = y.astype(o_ref.dtype)


def fused_matmul_t(w, a_t, bias, act):
    """act(w @ a_t + bias) -> (N, M).

    w    : (N, K)  bf16, BN scale already folded into the rows
    a_t  : (K, M)  bf16 im2col patches, already transposed (lane axis = M)
    bias : (N, 1)  f32 folded BN bias
    """
    N, K = w.shape
    K2, M = a_t.shape
    assert K == K2

    # Lane-dense tile along M (multiple of 128); keep >=2 parallel grid steps
    # on the larger layers (v7x has 2 TensorCores); cap the tile at 2048.
    tm = max(128, min(2048, _round_up(max(1, (M + 1) // 2), 128)))
    m_pad = _round_up(M, tm)
    if m_pad != M:
        a_t = jnp.pad(a_t, ((0, 0), (0, m_pad - M)))
    grid = (m_pad // tm,)

    out = pl.pallas_call(
        functools.partial(_fused_matmul_kernel, act=act),
        out_shape=jax.ShapeDtypeStruct((N, m_pad), jnp.float32),
        grid_spec=pltpu.PrefetchScalarGridSpec(
            num_scalar_prefetch=0,
            grid=grid,
            in_specs=[
                pl.BlockSpec((N, K), lambda i: (0, 0)),    # full (scaled) weights
                pl.BlockSpec((K, tm), lambda i: (0, i)),   # activation tile
                pl.BlockSpec((N, 1), lambda i: (0, 0)),    # folded BN bias
            ],
            out_specs=pl.BlockSpec((N, tm), lambda i: (0, i)),
        ),
        compiler_params=pltpu.CompilerParams(
            dimension_semantics=("parallel",)),
    )(w, a_t, bias)
    return out[:, :M] if m_pad != M else out


# ------------------------- conv-transpose wrapper -------------------------- #

def conv_transpose_layer(x_cn, w, scale, bias, stride, pad, act):
    """x_cn: (Cin, B, H, W) channel-major; w: (Cin, Cout, k, k) PyTorch weight.

    Returns (Cout, B, OH, OW) channel-major, which is exactly the kernel's
    (Cout, M) output reshaped -- no transpose needed between layers.
    """
    Cin, B, H, W = x_cn.shape
    _, Cout, k, _ = w.shape
    # 1) zero-dilate the input by the stride
    if stride > 1:
        Hd, Wd = (H - 1) * stride + 1, (W - 1) * stride + 1
        xd = jnp.zeros((Cin, B, Hd, Wd), x_cn.dtype)
        xd = xd.at[:, :, ::stride, ::stride].set(x_cn)
    else:
        xd = x_cn
    # 2) pad by k-1-p on each side (conv-transpose -> regular conv)
    pp = k - 1 - pad
    xp = jnp.pad(xd, ((0, 0), (0, 0), (pp, pp), (pp, pp)))
    OH = xp.shape[2] - k + 1
    OW = xp.shape[3] - k + 1
    # 3) equivalent forward-conv kernel: flip spatially, swap channel axes,
    #    fold the BN scale into the output-channel rows, cast to bf16.
    w_conv = jnp.transpose(w[:, :, ::-1, ::-1], (1, 0, 2, 3))       # (Cout, Cin, k, k)
    w_mat = w_conv.reshape(Cout, Cin * k * k) * scale[:, None]      # (Cout, K)
    # 4) im2col patches already in (K, M) layout: rows ordered (cin, kh, kw)
    patches = [xp[:, :, kh:kh + OH, kw:kw + OW]
               for kh in range(k) for kw in range(k)]               # each (Cin, B, OH, OW)
    a_t = jnp.stack(patches, axis=1).reshape(Cin * k * k, B * OH * OW)
    # 5) fused matmul + bias + activation on the MXU (bf16 in, f32 out)
    out = fused_matmul_t(w_mat.astype(jnp.bfloat16),
                         a_t.astype(jnp.bfloat16),
                         bias.reshape(Cout, 1).astype(jnp.float32), act)
    return out.reshape(Cout, B, OH, OW)


# ------------------------------ Generator ---------------------------------- #

def init_generator_params(key, nz, nc, ng):
    """Deterministic synthetic parameters; BN (inference-mode) folded to scale/bias."""
    chans = [(nz, ng * 8), (ng * 8, ng * 4), (ng * 4, ng * 2), (ng * 2, ng), (ng, nc)]
    params = []
    for li, (cin, cout) in enumerate(chans):
        key, kw, kg, kb, km, kv = jax.random.split(key, 6)
        w = jax.random.normal(kw, (cin, cout, 4, 4), jnp.float32) * 0.05
        if li < 4:  # layers followed by BatchNorm2d + ReLU
            gamma = 1.0 + 0.1 * jax.random.normal(kg, (cout,), jnp.float32)
            beta = 0.1 * jax.random.normal(kb, (cout,), jnp.float32)
            mean = 0.1 * jax.random.normal(km, (cout,), jnp.float32)
            var = 1.0 + 0.1 * jax.random.uniform(kv, (cout,), jnp.float32)
            inv = gamma / jnp.sqrt(var + 1e-5)
            scale, bias = inv, beta - mean * inv
        else:       # final layer: no BN, Tanh only
            scale = jnp.ones((cout,), jnp.float32)
            bias = jnp.zeros((cout,), jnp.float32)
        params.append((w, scale, bias))
    return params


# (stride, pad, activation) per ConvTranspose2d in Generator.model
_CFGS = [(1, 0, "relu"), (2, 1, "relu"), (2, 1, "relu"), (2, 1, "relu"), (2, 1, "tanh")]


def generator_forward(params, x):
    # TODO(synk): nResBlocks=0 (the default) -> ResidualBlock path not implemented.
    h = jnp.transpose(x, (1, 0, 2, 3))        # NCHW -> channel-major (C, B, H, W)
    for (w, scale, bias), (s, p, act) in zip(params, _CFGS):
        h = conv_transpose_layer(h, w, scale, bias, s, p, act)
    return jnp.transpose(h, (1, 0, 2, 3))     # back to NCHW


def generator_reference(params, x):
    """Pure-JAX/XLA f32 reference (independent of the im2col/Pallas path)."""
    h = x
    for (w, scale, bias), (s, p, act) in zip(params, _CFGS):
        k = w.shape[2]
        w_conv = jnp.transpose(w[:, :, ::-1, ::-1], (1, 0, 2, 3))
        pp = k - 1 - p
        y = lax.conv_general_dilated(
            h, w_conv, window_strides=(1, 1),
            padding=[(pp, pp), (pp, pp)], lhs_dilation=(s, s),
            dimension_numbers=("NCHW", "OIHW", "NCHW"),
            precision=lax.Precision.HIGHEST)
        y = y * scale[None, :, None, None] + bias[None, :, None, None]
        h = jnp.maximum(y, 0.0) if act == "relu" else jnp.tanh(y)
    return h


if __name__ == "__main__":
    # Small shapes consistent with the module: nz=16, ng=8, nc=3, batch=2.
    nz, nc, ng, B = 16, 3, 8, 2

    key = jax.random.PRNGKey(0)
    key_p, key_x = jax.random.split(key)
    params = init_generator_params(key_p, nz, nc, ng)
    x = jax.random.normal(key_x, (B, nz, 1, 1), jnp.float32)  # latent noise, NCHW

    fwd = jax.jit(generator_forward)
    out = jax.block_until_ready(fwd(params, x))

    # DCGAN spatial progression: 1 -> 4 -> 8 -> 16 -> 32 -> 64
    assert out.shape == (B, nc, 64, 64), out.shape
    assert out.dtype == jnp.float32
    assert bool(jnp.all(jnp.isfinite(out)))
    assert bool(jnp.all(jnp.abs(out) <= 1.0 + 1e-6))  # tanh range

    # Correctness vs an independent f32 XLA reference (bf16 operands -> ~1e-2 tol).
    ref = jax.block_until_ready(jax.jit(generator_reference)(params, x))
    max_err = float(jnp.max(jnp.abs(out - ref)))
    assert max_err < 5e-2, f"max abs err vs reference: {max_err}"

    print("KERNEL_OK")
</pallas_src>

<mosaic_0001>
module attributes {stable_mosaic.version = 11 : i64} {
  func.func @_fused_matmul_kernel(%arg0: i32, %arg1: memref<64x256xbf16, #tpu.memory_space<vmem>>, %arg2: memref<256x128xbf16, #tpu.memory_space<vmem>>, %arg3: memref<64x1xf32, #tpu.memory_space<vmem>>, %arg4: memref<64x128xf32, #tpu.memory_space<vmem>>) attributes {dimension_semantics = [#tpu.dimension_semantics<parallel>], iteration_bounds = array<i64: 1>, scalar_prefetch = 0 : i64, scratch_operands = 0 : i64, tpu.core_type = #tpu.core_type<tc>, window_params = [{pipeline_mode = #tpu.pipeline_mode<synchronous>, transform_indices = @transform_0, window_bounds = array<i64: 64, 256>}, {transform_indices = @transform_1, window_bounds = array<i64: 256, 128>}, {pipeline_mode = #tpu.pipeline_mode<synchronous>, transform_indices = @transform_2, window_bounds = array<i64: 64, 1>}, {transform_indices = @transform_3, window_bounds = array<i64: 64, 128>}]} {
    %c0 = arith.constant 0 : index
    %c0_0 = arith.constant 0 : index
    %0 = vector.load %arg1[%c0, %c0_0] : memref<64x256xbf16, #tpu.memory_space<vmem>>, vector<64x256xbf16>
    %c0_1 = arith.constant 0 : index
    %c0_2 = arith.constant 0 : index
    %1 = vector.load %arg2[%c0_1, %c0_2] : memref<256x128xbf16, #tpu.memory_space<vmem>>, vector<256x128xbf16>
    %cst = arith.constant dense<0.000000e+00> : vector<64x128xf32>
    %2 = tpu.matmul %0, %1, %cst {dimension_numbers = #tpu.dot_dimension_numbers<[1], [0], [0], [1], [0, 0, 1, 1], [], []>} : vector<64x256xbf16>, vector<256x128xbf16>, vector<64x128xf32> -> vector<64x128xf32>
    %c0_3 = arith.constant 0 : index
    %c0_4 = arith.constant 0 : index
    %3 = vector.load %arg3[%c0_3, %c0_4] : memref<64x1xf32, #tpu.memory_space<vmem>>, vector<64x1xf32>
    %4 = vector.broadcast %3 : vector<64x1xf32> to vector<64x128xf32>
    %5 = arith.addf %2, %4 : vector<64x128xf32>
    %cst_5 = arith.constant 0.000000e+00 : f32
    %6 = vector.broadcast %cst_5 : f32 to vector<64x128xf32>
    %7 = arith.maximumf %5, %6 : vector<64x128xf32>
    %c0_6 = arith.constant 0 : index
    %c0_7 = arith.constant 0 : index
    %8 = vector.load %arg4[%c0_6, %c0_7] : memref<64x128xf32, #tpu.memory_space<vmem>>, vector<64x128xf32>
    tpu.vector_store %arg4[%c0_6, %c0_7], %7 {strides = array<i32>} : memref<64x128xf32, #tpu.memory_space<vmem>>, vector<64x128xf32>,
    return
  }
  func.func @transform_0(%arg0: i32) -> (i32, i32) {
    %c0_i32 = arith.constant 0 : i32
    %c0_i32_0 = arith.constant 0 : i32
    %c0_i32_1 = arith.constant 0 : i32
    return %c0_i32, %c0_i32_0 : i32, i32
  }
  func.func @transform_1(%arg0: i32) -> (i32, i32) {
    %c0_i32 = arith.constant 0 : i32
    %c0_i32_0 = arith.constant 0 : i32
    return %c0_i32, %arg0 : i32, i32
  }
  func.func @transform_2(%arg0: i32) -> (i32, i32) {
    %c0_i32 = arith.constant 0 : i32
    %c0_i32_0 = arith.constant 0 : i32
    %c0_i32_1 = arith.constant 0 : i32
    return %c0_i32, %c0_i32_0 : i32, i32
  }
  func.func @transform_3(%arg0: i32) -> (i32, i32) {
    %c0_i32 = arith.constant 0 : i32
    %c0_i32_0 = arith.constant 0 : i32
    return %c0_i32, %arg0 : i32, i32
  }
}

module attributes {stable_mosaic.version = 11 : i64} {
  func.func @_fused_matmul_kernel(%arg0: i32, %arg1: memref<32x1024xbf16, #tpu.memory_space<vmem>>, %arg2: memref<1024x128xbf16, #tpu.memory_space<vmem>>, %arg3: memref<32x1xf32, #tpu.memory_space<vmem>>, %arg4: memref<32x128xf32, #tpu.memory_space<vmem>>) attributes {dimension_semantics = [#tpu.dimension_semantics<parallel>], iteration_bounds = array<i64: 1>, scalar_prefetch = 0 : i64, scratch_operands = 0 : i64, tpu.core_type = #tpu.core_type<tc>, window_params = [{pipeline_mode = #tpu.pipeline_mode<synchronous>, transform_indices = @transform_0, window_bounds = array<i64: 32, 1024>}, {transform_indices = @transform_1, window_bounds = array<i64: 1024, 128>}, {pipeline_mode = #tpu.pipeline_mode<synchronous>, transform_indices = @transform_2, window_bounds = array<i64: 32, 1>}, {transform_indices = @transform_3, window_bounds = array<i64: 32, 128>}]} {
    %c0 = arith.constant 0 : index
    %c0_0 = arith.constant 0 : index
    %0 = vector.load %arg1[%c0, %c0_0] : memref<32x1024xbf16, #tpu.memory_space<vmem>>, vector<32x1024xbf16>
    %c0_1 = arith.constant 0 : index
    %c0_2 = arith.constant 0 : index
    %1 = vector.load %arg2[%c0_1, %c0_2] : memref<1024x128xbf16, #tpu.memory_space<vmem>>, vector<1024x128xbf16>
    %cst = arith.constant dense<0.000000e+00> : vector<32x128xf32>
    %2 = tpu.matmul %0, %1, %cst {dimension_numbers = #tpu.dot_dimension_numbers<[1], [0], [0], [1], [0, 0, 1, 1], [], []>} : vector<32x1024xbf16>, vector<1024x128xbf16>, vector<32x128xf32> -> vector<32x128xf32>
    %c0_3 = arith.constant 0 : index
    %c0_4 = arith.constant 0 : index
    %3 = vector.load %arg3[%c0_3, %c0_4] : memref<32x1xf32, #tpu.memory_space<vmem>>, vector<32x1xf32>
    %4 = vector.broadcast %3 : vector<32x1xf32> to vector<32x128xf32>
    %5 = arith.addf %2, %4 : vector<32x128xf32>
    %cst_5 = arith.constant 0.000000e+00 : f32
    %6 = vector.broadcast %cst_5 : f32 to vector<32x128xf32>
    %7 = arith.maximumf %5, %6 : vector<32x128xf32>
    %c0_6 = arith.constant 0 : index
    %c0_7 = arith.constant 0 : index
    %8 = vector.load %arg4[%c0_6, %c0_7] : memref<32x128xf32, #tpu.memory_space<vmem>>, vector<32x128xf32>
    tpu.vector_store %arg4[%c0_6, %c0_7], %7 {strides = array<i32>} : memref<32x128xf32, #tpu.memory_space<vmem>>, vector<32x128xf32>,
    return
  }
  func.func @transform_0(%arg0: i32) -> (i32, i32) {
    %c0_i32 = arith.constant 0 : i32
    %c0_i32_0 = arith.constant 0 : i32
    %c0_i32_1 = arith.constant 0 : i32
    return %c0_i32, %c0_i32_0 : i32, i32
  }
  func.func @transform_1(%arg0: i32) -> (i32, i32) {
    %c0_i32 = arith.constant 0 : i32
    %c0_i32_0 = arith.constant 0 : i32
    return %c0_i32, %arg0 : i32, i32
  }
  func.func @transform_2(%arg0: i32) -> (i32, i32) {
    %c0_i32 = arith.constant 0 : i32
    %c0_i32_0 = arith.constant 0 : i32
    %c0_i32_1 = arith.constant 0 : i32
    return %c0_i32, %c0_i32_0 : i32, i32
  }
  func.func @transform_3(%arg0: i32) -> (i32, i32) {
    %c0_i32 = arith.constant 0 : i32
    %c0_i32_0 = arith.constant 0 : i32
    return %c0_i32, %arg0 : i32, i32
  }
}

module attributes {stable_mosaic.version = 11 : i64} {
  func.func @_fused_matmul_kernel(%arg0: i32, %arg1: memref<16x512xbf16, #tpu.memory_space<vmem>>, %arg2: memref<512x256xbf16, #tpu.memory_space<vmem>>, %arg3: memref<16x1xf32, #tpu.memory_space<vmem>>, %arg4: memref<16x256xf32, #tpu.memory_space<vmem>>) attributes {dimension_semantics = [#tpu.dimension_semantics<parallel>], iteration_bounds = array<i64: 2>, scalar_prefetch = 0 : i64, scratch_operands = 0 : i64, tpu.core_type = #tpu.core_type<tc>, window_params = [{pipeline_mode = #tpu.pipeline_mode<synchronous>, transform_indices = @transform_0, window_bounds = array<i64: 16, 512>}, {transform_indices = @transform_1, window_bounds = array<i64: 512, 256>}, {pipeline_mode = #tpu.pipeline_mode<synchronous>, transform_indices = @transform_2, window_bounds = array<i64: 16, 1>}, {transform_indices = @transform_3, window_bounds = array<i64: 16, 256>}]} {
    %c0 = arith.constant 0 : index
    %c0_0 = arith.constant 0 : index
    %0 = vector.load %arg1[%c0, %c0_0] : memref<16x512xbf16, #tpu.memory_space<vmem>>, vector<16x512xbf16>
    %c0_1 = arith.constant 0 : index
    %c0_2 = arith.constant 0 : index
    %1 = vector.load %arg2[%c0_1, %c0_2] : memref<512x256xbf16, #tpu.memory_space<vmem>>, vector<512x256xbf16>
    %cst = arith.constant dense<0.000000e+00> : vector<16x256xf32>
    %2 = tpu.matmul %0, %1, %cst {dimension_numbers = #tpu.dot_dimension_numbers<[1], [0], [0], [1], [0, 0, 1, 1], [], []>} : vector<16x512xbf16>, vector<512x256xbf16>, vector<16x256xf32> -> vector<16x256xf32>
    %c0_3 = arith.constant 0 : index
    %c0_4 = arith.constant 0 : index
    %3 = vector.load %arg3[%c0_3, %c0_4] : memref<16x1xf32, #tpu.memory_space<vmem>>, vector<16x1xf32>
    %4 = vector.broadcast %3 : vector<16x1xf32> to vector<16x256xf32>
    %5 = arith.addf %2, %4 : vector<16x256xf32>
    %cst_5 = arith.constant 0.000000e+00 : f32
    %6 = vector.broadcast %cst_5 : f32 to vector<16x256xf32>
    %7 = arith.maximumf %5, %6 : vector<16x256xf32>
    %c0_6 = arith.constant 0 : index
    %c0_7 = arith.constant 0 : index
    %8 = vector.load %arg4[%c0_6, %c0_7] : memref<16x256xf32, #tpu.memory_space<vmem>>, vector<16x256xf32>
    tpu.vector_store %arg4[%c0_6, %c0_7], %7 {strides = array<i32>} : memref<16x256xf32, #tpu.memory_space<vmem>>, vector<16x256xf32>,
    return
  }
  func.func @transform_0(%arg0: i32) -> (i32, i32) {
    %c0_i32 = arith.constant 0 : i32
    %c0_i32_0 = arith.constant 0 : i32
    %c0_i32_1 = arith.constant 0 : i32
    return %c0_i32, %c0_i32_0 : i32, i32
  }
  func.func @transform_1(%arg0: i32) -> (i32, i32) {
    %c0_i32 = arith.constant 0 : i32
    %c0_i32_0 = arith.constant 0 : i32
    return %c0_i32, %arg0 : i32, i32
  }
  func.func @transform_2(%arg0: i32) -> (i32, i32) {
    %c0_i32 = arith.constant 0 : i32
    %c0_i32_0 = arith.constant 0 : i32
    %c0_i32_1 = arith.constant 0 : i32
    return %c0_i32, %c0_i32_0 : i32, i32
  }
  func.func @transform_3(%arg0: i32) -> (i32, i32) {
    %c0_i32 = arith.constant 0 : i32
    %c0_i32_0 = arith.constant 0 : i32
    return %c0_i32, %arg0 : i32, i32
  }
}

module attributes {stable_mosaic.version = 11 : i64} {
  func.func @_fused_matmul_kernel(%arg0: i32, %arg1: memref<8x256xbf16, #tpu.memory_space<vmem>>, %arg2: memref<256x1024xbf16, #tpu.memory_space<vmem>>, %arg3: memref<8x1xf32, #tpu.memory_space<vmem>>, %arg4: memref<8x1024xf32, #tpu.memory_space<vmem>>) attributes {dimension_semantics = [#tpu.dimension_semantics<parallel>], iteration_bounds = array<i64: 2>, scalar_prefetch = 0 : i64, scratch_operands = 0 : i64, tpu.core_type = #tpu.core_type<tc>, window_params = [{pipeline_mode = #tpu.pipeline_mode<synchronous>, transform_indices = @transform_0, window_bounds = array<i64: 8, 256>}, {transform_indices = @transform_1, window_bounds = array<i64: 256, 1024>}, {pipeline_mode = #tpu.pipeline_mode<synchronous>, transform_indices = @transform_2, window_bounds = array<i64: 8, 1>}, {transform_indices = @transform_3, window_bounds = array<i64: 8, 1024>}]} {
    %c0 = arith.constant 0 : index
    %c0_0 = arith.constant 0 : index
    %0 = vector.load %arg1[%c0, %c0_0] : memref<8x256xbf16, #tpu.memory_space<vmem>>, vector<8x256xbf16>
    %c0_1 = arith.constant 0 : index
    %c0_2 = arith.constant 0 : index
    %1 = vector.load %arg2[%c0_1, %c0_2] : memref<256x1024xbf16, #tpu.memory_space<vmem>>, vector<256x1024xbf16>
    %cst = arith.constant dense<0.000000e+00> : vector<8x1024xf32>
    %2 = tpu.matmul %0, %1, %cst {dimension_numbers = #tpu.dot_dimension_numbers<[1], [0], [0], [1], [0, 0, 1, 1], [], []>} : vector<8x256xbf16>, vector<256x1024xbf16>, vector<8x1024xf32> -> vector<8x1024xf32>
    %c0_3 = arith.constant 0 : index
    %c0_4 = arith.constant 0 : index
    %3 = vector.load %arg3[%c0_3, %c0_4] : memref<8x1xf32, #tpu.memory_space<vmem>>, vector<8x1xf32>
    %4 = vector.broadcast %3 : vector<8x1xf32> to vector<8x1024xf32>
    %5 = arith.addf %2, %4 : vector<8x1024xf32>
    %cst_5 = arith.constant 0.000000e+00 : f32
    %6 = vector.broadcast %cst_5 : f32 to vector<8x1024xf32>
    %7 = arith.maximumf %5, %6 : vector<8x1024xf32>
    %c0_6 = arith.constant 0 : index
    %c0_7 = arith.constant 0 : index
    %8 = vector.load %arg4[%c0_6, %c0_7] : memref<8x1024xf32, #tpu.memory_space<vmem>>, vector<8x1024xf32>
    tpu.vector_store %arg4[%c0_6, %c0_7], %7 {strides = array<i32>} : memref<8x1024xf32, #tpu.memory_space<vmem>>, vector<8x1024xf32>,
    return
  }
  func.func @transform_0(%arg0: i32) -> (i32, i32) {
    %c0_i32 = arith.constant 0 : i32
    %c0_i32_0 = arith.constant 0 : i32
    %c0_i32_1 = arith.constant 0 : i32
    return %c0_i32, %c0_i32_0 : i32, i32
  }
  func.func @transform_1(%arg0: i32) -> (i32, i32) {
    %c0_i32 = arith.constant 0 : i32
    %c0_i32_0 = arith.constant 0 : i32
    return %c0_i32, %arg0 : i32, i32
  }
  func.func @transform_2(%arg0: i32) -> (i32, i32) {
    %c0_i32 = arith.constant 0 : i32
    %c0_i32_0 = arith.constant 0 : i32
    %c0_i32_1 = arith.constant 0 : i32
    return %c0_i32, %c0_i32_0 : i32, i32
  }
  func.func @transform_3(%arg0: i32) -> (i32, i32) {
    %c0_i32 = arith.constant 0 : i32
    %c0_i32_0 = arith.constant 0 : i32
    return %c0_i32, %arg0 : i32, i32
  }
}

module attributes {stable_mosaic.version = 11 : i64} {
  func.func @_fused_matmul_kernel(%arg0: i32, %arg1: memref<3x128xbf16, #tpu.memory_space<vmem>>, %arg2: memref<128x2048xbf16, #tpu.memory_space<vmem>>, %arg3: memref<3x1xf32, #tpu.memory_space<vmem>>, %arg4: memref<3x2048xf32, #tpu.memory_space<vmem>>) attributes {dimension_semantics = [#tpu.dimension_semantics<parallel>], iteration_bounds = array<i64: 4>, scalar_prefetch = 0 : i64, scratch_operands = 0 : i64, tpu.core_type = #tpu.core_type<tc>, window_params = [{pipeline_mode = #tpu.pipeline_mode<synchronous>, transform_indices = @transform_0, window_bounds = array<i64: 3, 128>}, {transform_indices = @transform_1, window_bounds = array<i64: 128, 2048>}, {pipeline_mode = #tpu.pipeline_mode<synchronous>, transform_indices = @transform_2, window_bounds = array<i64: 3, 1>}, {transform_indices = @transform_3, window_bounds = array<i64: 3, 2048>}]} {
    %c0 = arith.constant 0 : index
    %c0_0 = arith.constant 0 : index
    %0 = vector.load %arg1[%c0, %c0_0] : memref<3x128xbf16, #tpu.memory_space<vmem>>, vector<3x128xbf16>
    %c0_1 = arith.constant 0 : index
    %c0_2 = arith.constant 0 : index
    %1 = vector.load %arg2[%c0_1, %c0_2] : memref<128x2048xbf16, #tpu.memory_space<vmem>>, vector<128x2048xbf16>
    %cst = arith.constant dense<0.000000e+00> : vector<3x2048xf32>
    %2 = tpu.matmul %0, %1, %cst {dimension_numbers = #tpu.dot_dimension_numbers<[1], [0], [0], [1], [0, 0, 1, 1], [], []>} : vector<3x128xbf16>, vector<128x2048xbf16>, vector<3x2048xf32> -> vector<3x2048xf32>
    %c0_3 = arith.constant 0 : index
    %c0_4 = arith.constant 0 : index
    %3 = vector.load %arg3[%c0_3, %c0_4] : memref<3x1xf32, #tpu.memory_space<vmem>>, vector<3x1xf32>
    %4 = vector.broadcast %3 : vector<3x1xf32> to vector<3x2048xf32>
    %5 = arith.addf %2, %4 : vector<3x2048xf32>
    %6 = math.tanh %5 : vector<3x2048xf32>
    %c0_5 = arith.constant 0 : index
    %c0_6 = arith.constant 0 : index
    %7 = vector.load %arg4[%c0_5, %c0_6] : memref<3x2048xf32, #tpu.memory_space<vmem>>, vector<3x2048xf32>
    tpu.vector_store %arg4[%c0_5, %c0_6], %6 {strides = array<i32>} : memref<3x2048xf32, #tpu.memory_space<vmem>>, vector<3x2048xf32>,
    return
  }
  func.func @transform_0(%arg0: i32) -> (i32, i32) {
    %c0_i32 = arith.constant 0 : i32
    %c0_i32_0 = arith.constant 0 : i32
    %c0_i32_1 = arith.constant 0 : i32
    return %c0_i32, %c0_i32_0 : i32, i32
  }
  func.func @transform_1(%arg0: i32) -> (i32, i32) {
    %c0_i32 = arith.constant 0 : i32
    %c0_i32_0 = arith.constant 0 : i32
    return %c0_i32, %arg0 : i32, i32
  }
  func.func @transform_2(%arg0: i32) -> (i32, i32) {
    %c0_i32 = arith.constant 0 : i32
    %c0_i32_0 = arith.constant 0 : i32
    %c0_i32_1 = arith.constant 0 : i32
    return %c0_i32, %c0_i32_0 : i32, i32
  }
  func.func @transform_3(%arg0: i32) -> (i32, i32) {
    %c0_i32 = arith.constant 0 : i32
    %c0_i32_0 = arith.constant 0 : i32
    return %c0_i32, %arg0 : i32, i32
  }
}

</mosaic_0001>

<llo_original>
// kernel: generator_forward.5
$region0: #{generator_forward.5}
  #allocation0 [shape = 'u32[]', space=smem, size = 0x4, offset = 0x4, fixed_abs, tag = 'smem constant byte address 0x4 - core index']
  #allocation1 [shape = 'u32[144,128]{1,0:T(1,128)}', space=vmem, size = 0x12000, scoped, tag = 'internal scratch']
  %s0 = inlined_call_operand.vmem [shape: bf16[64,256], index: 0, kind: input, shape index: {}]
  %s1 = inlined_call_operand.vmem [shape: bf16[256,128], index: 1, kind: input, shape index: {}]
  %s2 = inlined_call_operand.vmem [shape: f32[64,1], index: 2, kind: input, shape index: {}]
  %s3 = inlined_call_operand.vmem [shape: f32[64,128], index: 3, kind: output, shape index: {}]
  %s4 = sld [smem:[#allocation0]]
  $region22: #{generator_forward.5} parent=0
    _
  %s6 = ssub.s32 1, %s4
  %s7 = scalar_select 0, %s6, %s4
  // Predicated region
  $region2: #{generator_forward.5} parent=0 // pred_check
    _
  $region3: #{generator_forward.5} parent=0 // pred_check_branch
    %9 = sbr.rel (0) target = $region5
  $region4: #{generator_forward.5} parent=0 // pred_region
    _
  $region5: #{generator_forward.5} parent=0 // pred_fallthru
    _
  // Predicated region
  $region6: #{generator_forward.5} parent=0 // pred_check
    _
  $region7: #{generator_forward.5} parent=0 // pred_check_branch
    %11 = sbr.rel (0) target = $region9
  $region8: #{generator_forward.5} parent=0 // pred_region
    _
  $region9: #{generator_forward.5} parent=0 // pred_fallthru
    _
  // Predicated region
  $region10: #{generator_forward.5} parent=0 // pred_check
    _
  $region11: #{generator_forward.5} parent=0 // pred_check_branch
    %13 = sbr.rel (0) target = $region13
  $region12: #{generator_forward.5} parent=0 // pred_region
    _
  $region13: #{generator_forward.5} parent=0 // pred_fallthru
    _
  %v15 = vld [vmem:[%s0] sm:$0xff]
  %v16 = vld [vmem:[%s0 + $0x8] sm:$0xff]
  %v17 = vld [vmem:[%s0 + $0x10] sm:$0xff]
  %v18 = vld [vmem:[%s0 + $0x18] sm:$0xff]
  %v19 = vld [vmem:[%s0 + $0x20] sm:$0xff]
  %v20 = vld [vmem:[%s0 + $0x28] sm:$0xff]
  %v21 = vld [vmem:[%s0 + $0x30] sm:$0xff]
  %v22 = vld [vmem:[%s0 + $0x38] sm:$0xff]
  %v23 = vld [vmem:[%s1] sm:$0xf]
  %v24 = vld [vmem:[%s1 + $0x4] sm:$0xf]
  %v25 = vld [vmem:[%s1 + $0x8] sm:$0xf]
  %v26 = vld [vmem:[%s1 + $0xc] sm:$0xf]
  %v27 = vld [vmem:[%s1 + $0x10] sm:$0xf]
  %v28 = vld [vmem:[%s1 + $0x14] sm:$0xf]
  %v29 = vld [vmem:[%s1 + $0x18] sm:$0xf]
  %v30 = vld [vmem:[%s1 + $0x1c] sm:$0xf]
  %v31 = vld [vmem:[%s1 + $0x20] sm:$0xf]
  %v32 = vld [vmem:[%s1 + $0x24] sm:$0xf]
  %v33 = vld [vmem:[%s1 + $0x28] sm:$0xf]
  %v34 = vld [vmem:[%s1 + $0x2c] sm:$0xf]
  %v35 = vld [vmem:[%s1 + $0x30] sm:$0xf]
  %v36 = vld [vmem:[%s1 + $0x34] sm:$0xf]
  %v37 = vld [vmem:[%s1 + $0x38] sm:$0xf]
  %v38 = vld [vmem:[%s1 + $0x3c] sm:$0xf]
  %v39 = vld [vmem:[%s1 + $0x40] sm:$0xf]
  %v40 = vld [vmem:[%s1 + $0x44] sm:$0xf]
  %v41 = vld [vmem:[%s1 + $0x48] sm:$0xf]
  %v42 = vld [vmem:[%s1 + $0x4c] sm:$0xf]
  %v43 = vld [vmem:[%s1 + $0x50] sm:$0xf]
  %v44 = vld [vmem:[%s1 + $0x54] sm:$0xf]
  %v45 = vld [vmem:[%s1 + $0x58] sm:$0xf]
  %v46 = vld [vmem:[%s1 + $0x5c] sm:$0xf]
  %v47 = vld [vmem:[%s1 + $0x60] sm:$0xf]
  %v48 = vld [vmem:[%s1 + $0x64] sm:$0xf]
  %v49 = vld [vmem:[%s1 + $0x68] sm:$0xf]
  %v50 = vld [vmem:[%s1 + $0x6c] sm:$0xf]
  %v51 = vld [vmem:[%s1 + $0x70] sm:$0xf]
  %v52 = vld [vmem:[%s1 + $0x74] sm:$0xf]
  %v53 = vld [vmem:[%s1 + $0x78] sm:$0xf]
  %v54 = vld [vmem:[%s1 + $0x7c] sm:$0xf]
  %v55 = vld [vmem:[%s2] sm:$0xff]
  %v56 = vld [vmem:[%s2 + $0x8] sm:$0xff]
  %v57 = vld [vmem:[%s2 + $0x10] sm:$0xff]
  %v58 = vld [vmem:[%s2 + $0x18] sm:$0xff]
  %v59 = vld [vmem:[%s2 + $0x20] sm:$0xff]
  %v60 = vld [vmem:[%s2 + $0x28] sm:$0xff]
  %v61 = vld [vmem:[%s2 + $0x30] sm:$0xff]
  %v62 = vld [vmem:[%s2 + $0x38] sm:$0xff]
  %64 = vset.pattern.permute.xlu0 0
  %65 = vperm.xlu0 %64, %v55
  %v66 = vpop.permute.xlu0 %65
  %69 = vset.pattern.permute.xlu0 0
  %70 = vperm.xlu0 %69, %v56
  %v71 = vpop.permute.xlu0 %70
  %74 = vset.pattern.permute.xlu0 0
  %75 = vperm.xlu0 %74, %v57
  %v76 = vpop.permute.xlu0 %75
  %79 = vset.pattern.permute.xlu0 0
  %80 = vperm.xlu0 %79, %v58
  %v81 = vpop.permute.xlu0 %80
  %84 = vset.pattern.permute.xlu0 0
  %85 = vperm.xlu0 %84, %v59
  %v86 = vpop.permute.xlu0 %85
  %89 = vset.pattern.permute.xlu0 0
  %90 = vperm.xlu0 %89, %v60
  %v91 = vpop.permute.xlu0 %90
  %94 = vset.pattern.permute.xlu0 0
  %95 = vperm.xlu0 %94, %v61
  %v96 = vpop.permute.xlu0 %95
  %99 = vset.pattern.permute.xlu0 0
  %100 = vperm.xlu0 %99, %v62
  %v101 = vpop.permute.xlu0 %100
  %v111 = vunpack.c.l.b16 %v15
  %v112 = vunpack.c.h.b16 %v15
  %v113 = vunpack.c.l.b16 %v16
  %v114 = vunpack.c.h.b16 %v16
  %v115 = vunpack.c.l.b16 %v17
  %v116 = vunpack.c.h.b16 %v17
  %v117 = vunpack.c.l.b16 %v18
  %v118 = vunpack.c.h.b16 %v18
  %v119 = vunpack.c.l.b16 %v19
  %v120 = vunpack.c.h.b16 %v19
  %v121 = vunpack.c.l.b16 %v20
  %v122 = vunpack.c.h.b16 %v20
  %v123 = vunpack.c.l.b16 %v21
  %v124 = vunpack.c.h.b16 %v21
  %v125 = vunpack.c.l.b16 %v22
  %v126 = vunpack.c.h.b16 %v22
  %v127 = vpack.c.b16 %v113, %v111
  %v128 = vpack.c.b16 %v114, %v112
  %v129 = vpack.c.b16 %v117, %v115
  %v130 = vpack.c.b16 %v118, %v116
  %v131 = vpack.c.b16 %v121, %v119
  %v132 = vpack.c.b16 %v122, %v120
  %v133 = vpack.c.b16 %v125, %v123
  %v134 = vpack.c.b16 %v126, %v124
  %v175 = vunpack.c.l.b16 %v23
  %v176 = vunpack.c.l.b16 %v24
  %v177 = vunpack.c.l.b16 %v25
  %v178 = vunpack.c.l.b16 %v26
  %v179 = vunpack.c.l.b16 %v27
  %v180 = vunpack.c.l.b16 %v28
  %v181 = vunpack.c.l.b16 %v29
  %v182 = vunpack.c.l.b16 %v30
  %v183 = vunpack.c.l.b16 %v31
  %v184 = vunpack.c.l.b16 %v32
  %v185 = vunpack.c.l.b16 %v33
  %v186 = vunpack.c.l.b16 %v34
  %v187 = vunpack.c.l.b16 %v35
  %v188 = vunpack.c.l.b16 %v36
  %v189 = vunpack.c.l.b16 %v37
  %v190 = vunpack.c.l.b16 %v38
  %v191 = vunpack.c.l.b16 %v39
  %v192 = vunpack.c.l.b16 %v40
  %v193 = vunpack.c.l.b16 %v41
  %v194 = vunpack.c.l.b16 %v42
  %v195 = vunpack.c.l.b16 %v43
  %v196 = vunpack.c.l.b16 %v44
  %v197 = vunpack.c.l.b16 %v45
  %v198 = vunpack.c.l.b16 %v46
  %v199 = vunpack.c.l.b16 %v47
  %v200 = vunpack.c.l.b16 %v48
  %v201 = vunpack.c.l.b16 %v49
  %v202 = vunpack.c.l.b16 %v50
  %v203 = vunpack.c.l.b16 %v51
  %v204 = vunpack.c.l.b16 %v52
  %v205 = vunpack.c.l.b16 %v53
  %v206 = vunpack.c.l.b16 %v54
  %v207 = vpack.c.b16 %v176, %v175
  %v208 = vpack.c.b16 %v178, %v177
  %v209 = vpack.c.b16 %v180, %v179
  %v210 = vpack.c.b16 %v182, %v181
  %v211 = vpack.c.b16 %v184, %v183
  %v212 = vpack.c.b16 %v186, %v185
  %v213 = vpack.c.b16 %v188, %v187
  %v214 = vpack.c.b16 %v190, %v189
  %v215 = vpack.c.b16 %v192, %v191
  %v216 = vpack.c.b16 %v194, %v193
  %v217 = vpack.c.b16 %v196, %v195
  %v218 = vpack.c.b16 %v198, %v197
  %v219 = vpack.c.b16 %v200, %v199
  %v220 = vpack.c.b16 %v202, %v201
  %v221 = vpack.c.b16 %v204, %v203
  %v222 = vpack.c.b16 %v206, %v205
  %239 = vmatprep.subr.bf16.mxu0 0
  %240 = vmatpush1.bf16.msra.mxu0 %v214
  %241 = vmatprep.subr.bf16.mxu0 0
  %242 = vmatpush1.bf16.msra.mxu0 %v213
  %243 = vmatprep.subr.bf16.mxu0 0
  %244 = vmatpush1.bf16.msra.mxu0 %v212
  %245 = vmatprep.subr.bf16.mxu0 0
  %246 = vmatpush1.bf16.msra.mxu0 %v211
  %247 = vmatprep.subr.bf16.mxu0 0
  %248 = vmatpush1.bf16.msra.mxu0 %v210
  %249 = vmatprep.subr.bf16.mxu0 0
  %250 = vmatpush1.bf16.msra.mxu0 %v209
  %251 = vmatprep.subr.bf16.mxu0 0
  %252 = vmatpush1.bf16.msra.mxu0 %v208
  %253 = vmatprep.subr.bf16.mxu0 0
  %254 = vmatpush1.bf16.msra.mxu0 %v207
  %255 = vmatprep.subr.bf16.mxu0 0
  %256 = vmatpush2.bf16.msra.mxu0 %v222
  %257 = vmatprep.subr.bf16.mxu0 0
  %258 = vmatpush2.bf16.msra.mxu0 %v221
  %259 = vmatprep.subr.bf16.mxu0 0
  %260 = vmatpush2.bf16.msra.mxu0 %v220
  %261 = vmatprep.subr.bf16.mxu0 0
  %262 = vmatpush2.bf16.msra.mxu0 %v219
  %263 = vmatprep.subr.bf16.mxu0 0
  %264 = vmatpush2.bf16.msra.mxu0 %v218
  %265 = vmatprep.subr.bf16.mxu0 0
  %266 = vmatpush2.bf16.msra.mxu0 %v217
  %267 = vmatprep.subr.bf16.mxu0 0
  %268 = vmatpush2.bf16.msra.mxu0 %v216
  %269 = vmatprep.subr.bf16.mxu0 0
  %270 = vmatpush2.bf16.msra.mxu0 %v215
  %271 = vmatprep.mubr.bf16.mxu0 %v128
  %272 = vmatmul.mubr.bf16.gmra.mxu0 %v127
  %v273 = vpop.f32.mrf.mxu0
  %v274 = vadd.f32 %v66, %v273
  %v275 = vpop.f32.mrf.mxu0
  %v276 = vpop.f32.mrf.mxu0
  %v277 = vadd.f32 %v71, %v276
  %v278 = vpop.f32.mrf.mxu0
  %279 = vmatprep.mubr.bf16.mxu0 %v130
  %280 = vmatmul.mubr.bf16.gmra.mxu0 %v129
  %v281 = vpop.f32.mrf.mxu0
  %v282 = vadd.f32 %v76, %v281
  %v283 = vpop.f32.mrf.mxu0
  %v284 = vpop.f32.mrf.mxu0
  %v285 = vadd.f32 %v81, %v284
  %v286 = vpop.f32.mrf.mxu0
  %287 = vmatprep.mubr.bf16.mxu0 %v132
  %288 = vmatmul.mubr.bf16.gmra.mxu0 %v131
  %v289 = vpop.f32.mrf.mxu0
  %v290 = vadd.f32 %v86, %v289
  %v291 = vpop.f32.mrf.mxu0
  %v292 = vpop.f32.mrf.mxu0
  %v293 = vadd.f32 %v91, %v292
  %v294 = vpop.f32.mrf.mxu0
  %295 = vmatprep.mubr.bf16.mxu0 %v134
  %296 = vmatmul.mubr.bf16.gmra.mxu0 %v133
  %v297 = vpop.f32.mrf.mxu0
  %v298 = vadd.f32 %v96, %v297
  %v299 = vpop.f32.mrf.mxu0
  %v300 = vpop.f32.mrf.mxu0
  %v301 = vadd.f32 %v101, %v300
  %v302 = vpop.f32.mrf.mxu0
  %303 = vdwg.mxu0
  %v304 = vmax.f32 %v274, 0.0
  %v305 = vmax.f32 %v277, 0.0
  %v306 = vmax.f32 %v282, 0.0
  %v307 = vmax.f32 %v285, 0.0
  %v308 = vmax.f32 %v290, 0.0
  %v309 = vmax.f32 %v293, 0.0
  %v310 = vmax.f32 %v298, 0.0
  %v311 = vmax.f32 %v301, 0.0
  %312 = vst [vmem:[%s3] sm:$0xff] %v304
  %313 = vst [vmem:[%s3 + $0x8] sm:$0xff] %v305
  %314 = vst [vmem:[%s3 + $0x10] sm:$0xff] %v306
  %315 = vst [vmem:[%s3 + $0x18] sm:$0xff] %v307
  %316 = vst [vmem:[%s3 + $0x20] sm:$0xff] %v308
  %317 = vst [vmem:[%s3 + $0x28] sm:$0xff] %v309
  %318 = vst [vmem:[%s3 + $0x30] sm:$0xff] %v310
  %319 = vst [vmem:[%s3 + $0x38] sm:$0xff] %v311
  // Predicated region
  $region14: #{generator_forward.5} parent=0 // pred_check
    _
  $region15: #{generator_forward.5} parent=0 // pred_check_branch
    %321 = sbr.rel (0) target = $region17
  $region16: #{generator_forward.5} parent=0 // pred_region
    _
  $region17: #{generator_forward.5} parent=0 // pred_fallthru
    _
  // Predicated region
  $region18: #{generator_forward.5} parent=0 // pred_check
    _
  $region19: #{generator_forward.5} parent=0 // pred_check_branch
    %323 = sbr.rel (0) target = $region21
  $region20: #{generator_forward.5} parent=0 // pred_region
    _
  $region21: #{generator_forward.5} parent=0 // pred_fallthru
    _

// kernel: generator_forward.6
$region0: #{generator_forward.6}
  #allocation0 [shape = 'u32[]', space=smem, size = 0x4, offset = 0x4, fixed_abs, tag = 'smem constant byte address 0x4 - core index']
  #allocation1 [shape = 'u32[144,128]{1,0:T(1,128)}', space=vmem, size = 0x12000, scoped, tag = 'internal scratch']
  %s0 = inlined_call_operand.vmem [shape: bf16[32,1024], index: 0, kind: input, shape index: {}]
  %s1 = inlined_call_operand.vmem [shape: bf16[1024,128], index: 1, kind: input, shape index: {}]
  %s2 = inlined_call_operand.vmem [shape: f32[32,1], index: 2, kind: input, shape index: {}]
  %s3 = inlined_call_operand.vmem [shape: f32[32,128], index: 3, kind: output, shape index: {}]
  %s4 = sld [smem:[#allocation0]]
  $region22: #{generator_forward.6} parent=0
    _
  %s6 = ssub.s32 1, %s4
  %s7 = scalar_select 0, %s6, %s4
  // Predicated region
  $region2: #{generator_forward.6} parent=0 // pred_check
    _
  $region3: #{generator_forward.6} parent=0 // pred_check_branch
    %9 = sbr.rel (0) target = $region5
  $region4: #{generator_forward.6} parent=0 // pred_region
    _
  $region5: #{generator_forward.6} parent=0 // pred_fallthru
    _
  // Predicated region
  $region6: #{generator_forward.6} parent=0 // pred_check
    _
  $region7: #{generator_forward.6} parent=0 // pred_check_branch
    %11 = sbr.rel (0) target = $region9
  $region8: #{generator_forward.6} parent=0 // pred_region
    _
  $region9: #{generator_forward.6} parent=0 // pred_fallthru
    _
  // Predicated region
  $region10: #{generator_forward.6} parent=0 // pred_check
    _
  $region11: #{generator_forward.6} parent=0 // pred_check_branch
    %13 = sbr.rel (0) target = $region13
  $region12: #{generator_forward.6} parent=0 // pred_region
    _
  $region13: #{generator_forward.6} parent=0 // pred_fallthru
    _
  %v15 = vld [vmem:[%s0] sm:$0xff]
  %v16 = vld [vmem:[%s0 + $0x8] sm:$0xff]
  %v17 = vld [vmem:[%s0 + $0x10] sm:$0xff]
  %v18 = vld [vmem:[%s0 + $0x18] sm:$0xff]
  %v19 = vld [vmem:[%s0 + $0x20] sm:$0xff]
  %v20 = vld [vmem:[%s0 + $0x28] sm:$0xff]
  %v21 = vld [vmem:[%s0 + $0x30] sm:$0xff]
  %v22 = vld [vmem:[%s0 + $0x38] sm:$0xff]
  %v23 = vld [vmem:[%s0 + $0x40] sm:$0xff]
  %v24 = vld [vmem:[%s0 + $0x48] sm:$0xff]
  %v25 = vld [vmem:[%s0 + $0x50] sm:$0xff]
  %v26 = vld [vmem:[%s0 + $0x58] sm:$0xff]
  %v27 = vld [vmem:[%s0 + $0x60] sm:$0xff]
  %v28 = vld [vmem:[%s0 + $0x68] sm:$0xff]
  %v29 = vld [vmem:[%s0 + $0x70] sm:$0xff]
  %v30 = vld [vmem:[%s0 + $0x78] sm:$0xff]
  %v31 = vld [vmem:[%s1] sm:$0xf]
  %v32 = vld [vmem:[%s1 + $0x4] sm:$0xf]
  %v33 = vld [vmem:[%s1 + $0x8] sm:$0xf]
  %v34 = vld [vmem:[%s1 + $0xc] sm:$0xf]
  %v35 = vld [vmem:[%s1 + $0x10] sm:$0xf]
  %v36 = vld [vmem:[%s1 + $0x14] sm:$0xf]
  %v37 = vld [vmem:[%s1 + $0x18] sm:$0xf]
  %v38 = vld [vmem:[%s1 + $0x1c] sm:$0xf]
  %v39 = vld [vmem:[%s1 + $0x20] sm:$0xf]
  %v40 = vld [vmem:[%s1 + $0x24] sm:$0xf]
  %v41 = vld [vmem:[%s1 + $0x28] sm:$0xf]
  %v42 = vld [vmem:[%s1 + $0x2c] sm:$0xf]
  %v43 = vld [vmem:[%s1 + $0x30] sm:$0xf]
  %v44 = vld [vmem:[%s1 + $0x34] sm:$0xf]
  %v45 = vld [vmem:[%s1 + $0x38] sm:$0xf]
  %v46 = vld [vmem:[%s1 + $0x3c] sm:$0xf]
  %v47 = vld [vmem:[%s1 + $0x40] sm:$0xf]
  %v48 = vld [vmem:[%s1 + $0x44] sm:$0xf]
  %v49 = vld [vmem:[%s1 + $0x48] sm:$0xf]
  %v50 = vld [vmem:[%s1 + $0x4c] sm:$0xf]
  %v51 = vld [vmem:[%s1 + $0x50] sm:$0xf]
  %v52 = vld [vmem:[%s1 + $0x54] sm:$0xf]
  %v53 = vld [vmem:[%s1 + $0x58] sm:$0xf]
  %v54 = vld [vmem:[%s1 + $0x5c] sm:$0xf]
  %v55 = vld [vmem:[%s1 + $0x60] sm:$0xf]
  %v56 = vld [vmem:[%s1 + $0x64] sm:$0xf]
  %v57 = vld [vmem:[%s1 + $0x68] sm:$0xf]
  %v58 = vld [vmem:[%s1 + $0x6c] sm:$0xf]
  %v59 = vld [vmem:[%s1 + $0x70] sm:$0xf]
  %v60 = vld [vmem:[%s1 + $0x74] sm:$0xf]
  %v61 = vld [vmem:[%s1 + $0x78] sm:$0xf]
  %v62 = vld [vmem:[%s1 + $0x7c] sm:$0xf]
  %v63 = vld [vmem:[%s1 + $0x80] sm:$0xf]
  %v64 = vld [vmem:[%s1 + $0x84] sm:$0xf]
  %v65 = vld [vmem:[%s1 + $0x88] sm:$0xf]
  %v66 = vld [vmem:[%s1 + $0x8c] sm:$0xf]
  %v67 = vld [vmem:[%s1 + $0x90] sm:$0xf]
  %v68 = vld [vmem:[%s1 + $0x94] sm:$0xf]
  %v69 = vld [vmem:[%s1 + $0x98] sm:$0xf]
  %v70 = vld [vmem:[%s1 + $0x9c] sm:$0xf]
  %v71 = vld [vmem:[%s1 + $0xa0] sm:$0xf]
  %v72 = vld [vmem:[%s1 + $0xa4] sm:$0xf]
  %v73 = vld [vmem:[%s1 + $0xa8] sm:$0xf]
  %v74 = vld [vmem:[%s1 + $0xac] sm:$0xf]
  %v75 = vld [vmem:[%s1 + $0xb0] sm:$0xf]
  %v76 = vld [vmem:[%s1 + $0xb4] sm:$0xf]
  %v77 = vld [vmem:[%s1 + $0xb8] sm:$0xf]
  %v78 = vld [vmem:[%s1 + $0xbc] sm:$0xf]
  %v79 = vld [vmem:[%s1 + $0xc0] sm:$0xf]
  %v80 = vld [vmem:[%s1 + $0xc4] sm:$0xf]
  %v81 = vld [vmem:[%s1 + $0xc8] sm:$0xf]
  %v82 = vld [vmem:[%s1 + $0xcc] sm:$0xf]
  %v83 = vld [vmem:[%s1 + $0xd0] sm:$0xf]
  %v84 = vld [vmem:[%s1 + $0xd4] sm:$0xf]
  %v85 = vld [vmem:[%s1 + $0xd8] sm:$0xf]
  %v86 = vld [vmem:[%s1 + $0xdc] sm:$0xf]
  %v87 = vld [vmem:[%s1 + $0xe0] sm:$0xf]
  %v88 = vld [vmem:[%s1 + $0xe4] sm:$0xf]
  %v89 = vld [vmem:[%s1 + $0xe8] sm:$0xf]
  %v90 = vld [vmem:[%s1 + $0xec] sm:$0xf]
  %v91 = vld [vmem:[%s1 + $0xf0] sm:$0xf]
  %v92 = vld [vmem:[%s1 + $0xf4] sm:$0xf]
  %v93 = vld [vmem:[%s1 + $0xf8] sm:$0xf]
  %v94 = vld [vmem:[%s1 + $0xfc] sm:$0xf]
  %v95 = vld [vmem:[%s1 + $0x100] sm:$0xf]
  %v96 = vld [vmem:[%s1 + $0x104] sm:$0xf]
  %v97 = vld [vmem:[%s1 + $0x108] sm:$0xf]
  %v98 = vld [vmem:[%s1 + $0x10c] sm:$0xf]
  %v99 = vld [vmem:[%s1 + $0x110] sm:$0xf]
  %v100 = vld [vmem:[%s1 + $0x114] sm:$0xf]
  %v101 = vld [vmem:[%s1 + $0x118] sm:$0xf]
  %v102 = vld [vmem:[%s1 + $0x11c] sm:$0xf]
  %v103 = vld [vmem:[%s1 + $0x120] sm:$0xf]
  %v104 = vld [vmem:[%s1 + $0x124] sm:$0xf]
  %v105 = vld [vmem:[%s1 + $0x128] sm:$0xf]
  %v106 = vld [vmem:[%s1 + $0x12c] sm:$0xf]
  %v107 = vld [vmem:[%s1 + $0x130] sm:$0xf]
  %v108 = vld [vmem:[%s1 + $0x134] sm:$0xf]
  %v109 = vld [vmem:[%s1 + $0x138] sm:$0xf]
  %v110 = vld [vmem:[%s1 + $0x13c] sm:$0xf]
  %v111 = vld [vmem:[%s1 + $0x140] sm:$0xf]
  %v112 = vld [vmem:[%s1 + $0x144] sm:$0xf]
  %v113 = vld [vmem:[%s1 + $0x148] sm:$0xf]
  %v114 = vld [vmem:[%s1 + $0x14c] sm:$0xf]
  %v115 = vld [vmem:[%s1 + $0x150] sm:$0xf]
  %v116 = vld [vmem:[%s1 + $0x154] sm:$0xf]
  %v117 = vld [vmem:[%s1 + $0x158] sm:$0xf]
  %v118 = vld [vmem:[%s1 + $0x15c] sm:$0xf]
  %v119 = vld [vmem:[%s1 + $0x160] sm:$0xf]
  %v120 = vld [vmem:[%s1 + $0x164] sm:$0xf]
  %v121 = vld [vmem:[%s1 + $0x168] sm:$0xf]
  %v122 = vld [vmem:[%s1 + $0x16c] sm:$0xf]
  %v123 = vld [vmem:[%s1 + $0x170] sm:$0xf]
  %v124 = vld [vmem:[%s1 + $0x174] sm:$0xf]
  %v125 = vld [vmem:[%s1 + $0x178] sm:$0xf]
  %v126 = vld [vmem:[%s1 + $0x17c] sm:$0xf]
  %v127 = vld [vmem:[%s1 + $0x180] sm:$0xf]
  %v128 = vld [vmem:[%s1 + $0x184] sm:$0xf]
  %v129 = vld [vmem:[%s1 + $0x188] sm:$0xf]
  %v130 = vld [vmem:[%s1 + $0x18c] sm:$0xf]
  %v131 = vld [vmem:[%s1 + $0x190] sm:$0xf]
  %v132 = vld [vmem:[%s1 + $0x194] sm:$0xf]
  %v133 = vld [vmem:[%s1 + $0x198] sm:$0xf]
  %v134 = vld [vmem:[%s1 + $0x19c] sm:$0xf]
  %v135 = vld [vmem:[%s1 + $0x1a0] sm:$0xf]
  %v136 = vld [vmem:[%s1 + $0x1a4] sm:$0xf]
  %v137 = vld [vmem:[%s1 + $0x1a8] sm:$0xf]
  %v138 = vld [vmem:[%s1 + $0x1ac] sm:$0xf]
  %v139 = vld [vmem:[%s1 + $0x1b0] sm:$0xf]
  %v140 = vld [vmem:[%s1 + $0x1b4] sm:$0xf]
  %v141 = vld [vmem:[%s1 + $0x1b8] sm:$0xf]
  %v142 = vld [vmem:[%s1 + $0x1bc] sm:$0xf]
  %v143 = vld [vmem:[%s1 + $0x1c0] sm:$0xf]
  %v144 = vld [vmem:[%s1 + $0x1c4] sm:$0xf]
  %v145 = vld [vmem:[%s1 + $0x1c8] sm:$0xf]
  %v146 = vld [vmem:[%s1 + $0x1cc] sm:$0xf]
  %v147 = vld [vmem:[%s1 + $0x1d0] sm:$0xf]
  %v148 = vld [vmem:[%s1 + $0x1d4] sm:$0xf]
  %v149 = vld [vmem:[%s1 + $0x1d8] sm:$0xf]
  %v150 = vld [vmem:[%s1 + $0x1dc] sm:$0xf]
  %v151 = vld [vmem:[%s1 + $0x1e0] sm:$0xf]
  %v152 = vld [vmem:[%s1 + $0x1e4] sm:$0xf]
  %v153 = vld [vmem:[%s1 + $0x1e8] sm:$0xf]
  %v154 = vld [vmem:[%s1 + $0x1ec] sm:$0xf]
  %v155 = vld [vmem:[%s1 + $0x1f0] sm:$0xf]
  %v156 = vld [vmem:[%s1 + $0x1f4] sm:$0xf]
  %v157 = vld [vmem:[%s1 + $0x1f8] sm:$0xf]
  %v158 = vld [vmem:[%s1 + $0x1fc] sm:$0xf]
  %v159 = vld [vmem:[%s2] sm:$0xff]
  %v160 = vld [vmem:[%s2 + $0x8] sm:$0xff]
  %v161 = vld [vmem:[%s2 + $0x10] sm:$0xff]
  %v162 = vld [vmem:[%s2 + $0x18] sm:$0xff]
  %164 = vset.pattern.permute.xlu0 0
  %165 = vperm.xlu0 %164, %v159
  %v166 = vpop.permute.xlu0 %165
  %169 = vset.pattern.permute.xlu0 0
  %170 = vperm.xlu0 %169, %v160
  %v171 = vpop.permute.xlu0 %170
  %174 = vset.pattern.permute.xlu0 0
  %175 = vperm.xlu0 %174, %v161
  %v176 = vpop.permute.xlu0 %175
  %179 = vset.pattern.permute.xlu0 0
  %180 = vperm.xlu0 %179, %v162
  %v181 = vpop.permute.xlu0 %180
  %v199 = vunpack.c.l.b16 %v15
  %v200 = vunpack.c.h.b16 %v15
  %v201 = vunpack.c.l.b16 %v16
  %v202 = vunpack.c.h.b16 %v16
  %v203 = vunpack.c.l.b16 %v17
  %v204 = vunpack.c.h.b16 %v17
  %v205 = vunpack.c.l.b16 %v18
  %v206 = vunpack.c.h.b16 %v18
  %v207 = vunpack.c.l.b16 %v19
  %v208 = vunpack.c.h.b16 %v19
  %v209 = vunpack.c.l.b16 %v20
  %v210 = vunpack.c.h.b16 %v20
  %v211 = vunpack.c.l.b16 %v21
  %v212 = vunpack.c.h.b16 %v21
  %v213 = vunpack.c.l.b16 %v22
  %v214 = vunpack.c.h.b16 %v22
  %v215 = vunpack.c.l.b16 %v23
  %v216 = vunpack.c.h.b16 %v23
  %v217 = vunpack.c.l.b16 %v24
  %v218 = vunpack.c.h.b16 %v24
  %v219 = vunpack.c.l.b16 %v25
  %v220 = vunpack.c.h.b16 %v25
  %v221 = vunpack.c.l.b16 %v26
  %v222 = vunpack.c.h.b16 %v26
  %v223 = vunpack.c.l.b16 %v27
  %v224 = vunpack.c.h.b16 %v27
  %v225 = vunpack.c.l.b16 %v28
  %v226 = vunpack.c.h.b16 %v28
  %v227 = vunpack.c.l.b16 %v29
  %v228 = vunpack.c.h.b16 %v29
  %v229 = vunpack.c.l.b16 %v30
  %v230 = vunpack.c.h.b16 %v30
  %v231 = vpack.c.b16 %v207, %v199
  %v232 = vpack.c.b16 %v208, %v200
  %v233 = vpack.c.b16 %v209, %v201
  %v234 = vpack.c.b16 %v210, %v202
  %v235 = vpack.c.b16 %v211, %v203
  %v236 = vpack.c.b16 %v212, %v204
  %v237 = vpack.c.b16 %v213, %v205
  %v238 = vpack.c.b16 %v214, %v206
  %v239 = vpack.c.b16 %v223, %v215
  %v240 = vpack.c.b16 %v224, %v216
  %v241 = vpack.c.b16 %v225, %v217
  %v242 = vpack.c.b16 %v226, %v218
  %v243 = vpack.c.b16 %v227, %v219
  %v244 = vpack.c.b16 %v228, %v220
  %v245 = vpack.c.b16 %v229, %v221
  %v246 = vpack.c.b16 %v230, %v222
  %v391 = vunpack.c.l.b16 %v31
  %v392 = vunpack.c.l.b16 %v32
  %v393 = vunpack.c.l.b16 %v33
  %v394 = vunpack.c.l.b16 %v34
  %v395 = vunpack.c.l.b16 %v35
  %v396 = vunpack.c.l.b16 %v36
  %v397 = vunpack.c.l.b16 %v37
  %v398 = vunpack.c.l.b16 %v38
  %v399 = vunpack.c.l.b16 %v39
  %v400 = vunpack.c.l.b16 %v40
  %v401 = vunpack.c.l.b16 %v41
  %v402 = vunpack.c.l.b16 %v42
  %v403 = vunpack.c.l.b16 %v43
  %v404 = vunpack.c.l.b16 %v44
  %v405 = vunpack.c.l.b16 %v45
  %v406 = vunpack.c.l.b16 %v46
  %v407 = vunpack.c.l.b16 %v47
  %v408 = vunpack.c.l.b16 %v48
  %v409 = vunpack.c.l.b16 %v49
  %v410 = vunpack.c.l.b16 %v50
  %v411 = vunpack.c.l.b16 %v51
  %v412 = vunpack.c.l.b16 %v52
  %v413 = vunpack.c.l.b16 %v53
  %v414 = vunpack.c.l.b16 %v54
  %v415 = vunpack.c.l.b16 %v55
  %v416 = vunpack.c.l.b16 %v56
  %v417 = vunpack.c.l.b16 %v57
  %v418 = vunpack.c.l.b16 %v58
  %v419 = vunpack.c.l.b16 %v59
  %v420 = vunpack.c.l.b16 %v60
  %v421 = vunpack.c.l.b16 %v61
  %v422 = vunpack.c.l.b16 %v62
  %v423 = vunpack.c.l.b16 %v63
  %v424 = vunpack.c.l.b16 %v64
  %v425 = vunpack.c.l.b16 %v65
  %v426 = vunpack.c.l.b16 %v66
  %v427 = vunpack.c.l.b16 %v67
  %v428 = vunpack.c.l.b16 %v68
  %v429 = vunpack.c.l.b16 %v69
  %v430 = vunpack.c.l.b16 %v70
  %v431 = vunpack.c.l.b16 %v71
  %v432 = vunpack.c.l.b16 %v72
  %v433 = vunpack.c.l.b16 %v73
  %v434 = vunpack.c.l.b16 %v74
  %v435 = vunpack.c.l.b16 %v75
  %v436 = vunpack.c.l.b16 %v76
  %v437 = vunpack.c.l.b16 %v77
  %v438 = vunpack.c.l.b16 %v78
  %v439 = vunpack.c.l.b16 %v79
  %v440 = vunpack.c.l.b16 %v80
  %v441 = vunpack.c.l.b16 %v81
  %v442 = vunpack.c.l.b16 %v82
  %v443 = vunpack.c.l.b16 %v83
  %v444 = vunpack.c.l.b16 %v84
  %v445 = vunpack.c.l.b16 %v85
  %v446 = vunpack.c.l.b16 %v86
  %v447 = vunpack.c.l.b16 %v87
  %v448 = vunpack.c.l.b16 %v88
  %v449 = vunpack.c.l.b16 %v89
  %v450 = vunpack.c.l.b16 %v90
  %v451 = vunpack.c.l.b16 %v91
  %v452 = vunpack.c.l.b16 %v92
  %v453 = vunpack.c.l.b16 %v93
  %v454 = vunpack.c.l.b16 %v94
  %v455 = vunpack.c.l.b16 %v95
  %v456 = vunpack.c.l.b16 %v96
  %v457 = vunpack.c.l.b16 %v97
  %v458 = vunpack.c.l.b16 %v98
  %v459 = vunpack.c.l.b16 %v99
  %v460 = vunpack.c.l.b16 %v100
  %v461 = vunpack.c.l.b16 %v101
  %v462 = vunpack.c.l.b16 %v102
  %v463 = vunpack.c.l.b16 %v103
  %v464 = vunpack.c.l.b16 %v104
  %v465 = vunpack.c.l.b16 %v105
  %v466 = vunpack.c.l.b16 %v106
  %v467 = vunpack.c.l.b16 %v107
  %v468 = vunpack.c.l.b16 %v108
  %v469 = vunpack.c.l.b16 %v109
  %v470 = vunpack.c.l.b16 %v110
  %v471 = vunpack.c.l.b16 %v111
  %v472 = vunpack.c.l.b16 %v112
  %v473 = vunpack.c.l.b16 %v113
  %v474 = vunpack.c.l.b16 %v114
  %v475 = vunpack.c.l.b16 %v115
  %v476 = vunpack.c.l.b16 %v116
  %v477 = vunpack.c.l.b16 %v117
  %v478 = vunpack.c.l.b16 %v118
  %v479 = vunpack.c.l.b16 %v119
  %v480 = vunpack.c.l.b16 %v120
  %v481 = vunpack.c.l.b16 %v121
  %v482 = vunpack.c.l.b16 %v122
  %v483 = vunpack.c.l.b16 %v123
  %v484 = vunpack.c.l.b16 %v124
  %v485 = vunpack.c.l.b16 %v125
  %v486 = vunpack.c.l.b16 %v126
  %v487 = vunpack.c.l.b16 %v127
  %v488 = vunpack.c.l.b16 %v128
  %v489 = vunpack.c.l.b16 %v129
  %v490 = vunpack.c.l.b16 %v130
  %v491 = vunpack.c.l.b16 %v131
  %v492 = vunpack.c.l.b16 %v132
  %v493 = vunpack.c.l.b16 %v133
  %v494 = vunpack.c.l.b16 %v134
  %v495 = vunpack.c.l.b16 %v135
  %v496 = vunpack.c.l.b16 %v136
  %v497 = vunpack.c.l.b16 %v137
  %v498 = vunpack.c.l.b16 %v138
  %v499 = vunpack.c.l.b16 %v139
  %v500 = vunpack.c.l.b16 %v140
  %v501 = vunpack.c.l.b16 %v141
  %v502 = vunpack.c.l.b16 %v142
  %v503 = vunpack.c.l.b16 %v143
  %v504 = vunpack.c.l.b16 %v144
  %v505 = vunpack.c.l.b16 %v145
  %v506 = vunpack.c.l.b16 %v146
  %v507 = vunpack.c.l.b16 %v147
  %v508 = vunpack.c.l.b16 %v148
  %v509 = vunpack.c.l.b16 %v149
  %v510 = vunpack.c.l.b16 %v150
  %v511 = vunpack.c.l.b16 %v151
  %v512 = vunpack.c.l.b16 %v152
  %v513 = vunpack.c.l.b16 %v153
  %v514 = vunpack.c.l.b16 %v154
  %v515 = vunpack.c.l.b16 %v155
  %v516 = vunpack.c.l.b16 %v156
  %v517 = vunpack.c.l.b16 %v157
  %v518 = vunpack.c.l.b16 %v158
  %v519 = vpack.c.b16 %v392, %v391
  %v520 = vpack.c.b16 %v394, %v393
  %v521 = vpack.c.b16 %v396, %v395
  %v522 = vpack.c.b16 %v398, %v397
  %v523 = vpack.c.b16 %v400, %v399
  %v524 = vpack.c.b16 %v402, %v401
  %v525 = vpack.c.b16 %v404, %v403
  %v526 = vpack.c.b16 %v406, %v405
  %v527 = vpack.c.b16 %v408, %v407
  %v528 = vpack.c.b16 %v410, %v409
  %v529 = vpack.c.b16 %v412, %v411
  %v530 = vpack.c.b16 %v414, %v413
  %v531 = vpack.c.b16 %v416, %v415
  %v532 = vpack.c.b16 %v418, %v417
  %v533 = vpack.c.b16 %v420, %v419
  %v534 = vpack.c.b16 %v422, %v421
  %v535 = vpack.c.b16 %v424, %v423
  %v536 = vpack.c.b16 %v426, %v425
  %v537 = vpack.c.b16 %v428, %v427
  %v538 = vpack.c.b16 %v430, %v429
  %v539 = vpack.c.b16 %v432, %v431
  %v540 = vpack.c.b16 %v434, %v433
  %v541 = vpack.c.b16 %v436, %v435
  %v542 = vpack.c.b16 %v438, %v437
  %v543 = vpack.c.b16 %v440, %v439
  %v544 = vpack.c.b16 %v442, %v441
  %v545 = vpack.c.b16 %v444, %v443
  %v546 = vpack.c.b16 %v446, %v445
  %v547 = vpack.c.b16 %v448, %v447
  %v548 = vpack.c.b16 %v450, %v449
  %v549 = vpack.c.b16 %v452, %v451
  %v550 = vpack.c.b16 %v454, %v453
  %v551 = vpack.c.b16 %v456, %v455
  %v552 = vpack.c.b16 %v458, %v457
  %v553 = vpack.c.b16 %v460, %v459
  %v554 = vpack.c.b16 %v462, %v461
  %v555 = vpack.c.b16 %v464, %v463
  %v556 = vpack.c.b16 %v466, %v465
  %v557 = vpack.c.b16 %v468, %v467
  %v558 = vpack.c.b16 %v470, %v469
  %v559 = vpack.c.b16 %v472, %v471
  %v560 = vpack.c.b16 %v474, %v473
  %v561 = vpack.c.b16 %v476, %v475
  %v562 = vpack.c.b16 %v478, %v477
  %v563 = vpack.c.b16 %v480, %v479
  %v564 = vpack.c.b16 %v482, %v481
  %v565 = vpack.c.b16 %v484, %v483
  %v566 = vpack.c.b16 %v486, %v485
  %v567 = vpack.c.b16 %v488, %v487
  %v568 = vpack.c.b16 %v490, %v489
  %v569 = vpack.c.b16 %v492, %v491
  %v570 = vpack.c.b16 %v494, %v493
  %v571 = vpack.c.b16 %v496, %v495
  %v572 = vpack.c.b16 %v498, %v497
  %v573 = vpack.c.b16 %v500, %v499
  %v574 = vpack.c.b16 %v502, %v501
  %v575 = vpack.c.b16 %v504, %v503
  %v576 = vpack.c.b16 %v506, %v505
  %v577 = vpack.c.b16 %v508, %v507
  %v578 = vpack.c.b16 %v510, %v509
  %v579 = vpack.c.b16 %v512, %v511
  %v580 = vpack.c.b16 %v514, %v513
  %v581 = vpack.c.b16 %v516, %v515
  %v582 = vpack.c.b16 %v518, %v517
  %647 = vmatprep.subr.bf16.mxu0 0
  %648 = vmatpush1.bf16.msra.mxu0 %v526
  %649 = vmatprep.subr.bf16.mxu0 0
  %650 = vmatpush1.bf16.msra.mxu0 %v525
  %651 = vmatprep.subr.bf16.mxu0 0
  %652 = vmatpush1.bf16.msra.mxu0 %v524
  %653 = vmatprep.subr.bf16.mxu0 0
  %654 = vmatpush1.bf16.msra.mxu0 %v523
  %655 = vmatprep.subr.bf16.mxu0 0
  %656 = vmatpush1.bf16.msra.mxu0 %v522
  %657 = vmatprep.subr.bf16.mxu0 0
  %658 = vmatpush1.bf16.msra.mxu0 %v521
  %659 = vmatprep.subr.bf16.mxu0 0
  %660 = vmatpush1.bf16.msra.mxu0 %v520
  %661 = vmatprep.subr.bf16.mxu0 0
  %662 = vmatpush1.bf16.msra.mxu0 %v519
  %663 = vmatprep.subr.bf16.mxu0 0
  %664 = vmatpush2.bf16.msra.mxu0 %v534
  %665 = vmatprep.subr.bf16.mxu0 0
  %666 = vmatpush2.bf16.msra.mxu0 %v533
  %667 = vmatprep.subr.bf16.mxu0 0
  %668 = vmatpush2.bf16.msra.mxu0 %v532
  %669 = vmatprep.subr.bf16.mxu0 0
  %670 = vmatpush2.bf16.msra.mxu0 %v531
  %671 = vmatprep.subr.bf16.mxu0 0
  %672 = vmatpush2.bf16.msra.mxu0 %v530
  %673 = vmatprep.subr.bf16.mxu0 0
  %674 = vmatpush2.bf16.msra.mxu0 %v529
  %675 = vmatprep.subr.bf16.mxu0 0
  %676 = vmatpush2.bf16.msra.mxu0 %v528
  %677 = vmatprep.subr.bf16.mxu0 0
  %678 = vmatpush2.bf16.msra.mxu0 %v527
  %679 = vmatprep.mubr.bf16.mxu0 %v232
  %680 = vmatmul.mubr.bf16.gmra.mxu0 %v231
  %v681 = vpop.f32.mrf.mxu0
  %v682 = vadd.f32 %v166, %v681
  %v683 = vpop.f32.mrf.mxu0
  %v684 = vpop.f32.mrf.mxu0
  %v685 = vadd.f32 %v171, %v684
  %v686 = vpop.f32.mrf.mxu0
  %687 = vmatprep.mubr.bf16.mxu0 %v240
  %688 = vmatmul.mubr.bf16.gmra.mxu0 %v239
  %v689 = vpop.f32.mrf.mxu0
  %v690 = vadd.f32 %v176, %v689
  %v691 = vpop.f32.mrf.mxu0
  %v692 = vpop.f32.mrf.mxu0
  %v693 = vadd.f32 %v181, %v692
  %v694 = vpop.f32.mrf.mxu0
  %695 = vdwg.mxu0
  %696 = vmatprep.subr.bf16.mxu0 0
  %697 = vmatpush1.bf16.msra.mxu0 %v542
  %698 = vmatprep.subr.bf16.mxu0 0
  %699 = vmatpush1.bf16.msra.mxu0 %v541
  %700 = vmatprep.subr.bf16.mxu0 0
  %701 = vmatpush1.bf16.msra.mxu0 %v540
  %702 = vmatprep.subr.bf16.mxu0 0
  %703 = vmatpush1.bf16.msra.mxu0 %v539
  %704 = vmatprep.subr.bf16.mxu0 0
  %705 = vmatpush1.bf16.msra.mxu0 %v538
  %706 = vmatprep.subr.bf16.mxu0 0
  %707 = vmatpush1.bf16.msra.mxu0 %v537
  %708 = vmatprep.subr.bf16.mxu0 0
  %709 = vmatpush1.bf16.msra.mxu0 %v536
  %710 = vmatprep.subr.bf16.mxu0 0
  %711 = vmatpush1.bf16.msra.mxu0 %v535
  %712 = vmatprep.subr.bf16.mxu0 0
  %713 = vmatpush2.bf16.msra.mxu0 %v550
  %714 = vmatprep.subr.bf16.mxu0 0
  %715 = vmatpush2.bf16.msra.mxu0 %v549
  %716 = vmatprep.subr.bf16.mxu0 0
  %717 = vmatpush2.bf16.msra.mxu0 %v548
  %718 = vmatprep.subr.bf16.mxu0 0
  %719 = vmatpush2.bf16.msra.mxu0 %v547
  %720 = vmatprep.subr.bf16.mxu0 0
  %721 = vmatpush2.bf16.msra.mxu0 %v546
  %722 = vmatprep.subr.bf16.mxu0 0
  %723 = vmatpush2.bf16.msra.mxu0 %v545
  %724 = vmatprep.subr.bf16.mxu0 0
  %725 = vmatpush2.bf16.msra.mxu0 %v544
  %726 = vmatprep.subr.bf16.mxu0 0
  %727 = vmatpush2.bf16.msra.mxu0 %v543
  %728 = vmatprep.mubr.bf16.mxu0 %v234
  %729 = vmatmul.mubr.bf16.gmra.mxu0 %v233
  %v730 = vpop.f32.mrf.mxu0
  %v731 = vadd.f32 %v682, %v730
  %v732 = vpop.f32.mrf.mxu0
  %v733 = vpop.f32.mrf.mxu0
  %v734 = vadd.f32 %v685, %v733
  %v735 = vpop.f32.mrf.mxu0
  %736 = vmatprep.mubr.bf16.mxu0 %v242
  %737 = vmatmul.mubr.bf16.gmra.mxu0 %v241
  %v738 = vpop.f32.mrf.mxu0
  %v739 = vadd.f32 %v690, %v738
  %v740 = vpop.f32.mrf.mxu0
  %v741 = vpop.f32.mrf.mxu0
  %v742 = vadd.f32 %v693, %v741
  %v743 = vpop.f32.mrf.mxu0
  %744 = vdwg.mxu0
  %745 = vmatprep.subr.bf16.mxu0 0
  %746 = vmatpush1.bf16.msra.mxu0 %v558
  %747 = vmatprep.subr.bf16.mxu0 0
  %748 = vmatpush1.bf16.msra.mxu0 %v557
  %749 = vmatprep.subr.bf16.mxu0 0
  %750 = vmatpush1.bf16.msra.mxu0 %v556
  %751 = vmatprep.subr.bf16.mxu0 0
  %752 = vmatpush1.bf16.msra.mxu0 %v555
  %753 = vmatprep.subr.bf16.mxu0 0
  %754 = vmatpush1.bf16.msra.mxu0 %v554
  %755 = vmatprep.subr.bf16.mxu0 0
  %756 = vmatpush1.bf16.msra.mxu0 %v553
  %757 = vmatprep.subr.bf16.mxu0 0
  %758 = vmatpush1.bf16.msra.mxu0 %v552
  %759 = vmatprep.subr.bf16.mxu0 0
  %760 = vmatpush1.bf16.msra.mxu0 %v551
  %761 = vmatprep.subr.bf16.mxu0 0
  %762 = vmatpush2.bf16.msra.mxu0 %v566
  %763 = vmatprep.subr.bf16.mxu0 0
  %764 = vmatpush2.bf16.msra.mxu0 %v565
  %765 = vmatprep.subr.bf16.mxu0 0
  %766 = vmatpush2.bf16.msra.mxu0 %v564
  %767 = vmatprep.subr.bf16.mxu0 0
  %768 = vmatpush2.bf16.msra.mxu0 %v563
  %769 = vmatprep.subr.bf16.mxu0 0
  %770 = vmatpush2.bf16.msra.mxu0 %v562
  %771 = vmatprep.subr.bf16.mxu0 0
  %772 = vmatpush2.bf16.msra.mxu0 %v561
  %773 = vmatprep.subr.bf16.mxu0 0
  %774 = vmatpush2.bf16.msra.mxu0 %v560
  %775 = vmatprep.subr.bf16.mxu0 0
  %776 = vmatpush2.bf16.msra.mxu0 %v559
  %777 = vmatprep.mubr.bf16.mxu0 %v236
  %778 = vmatmul.mubr.bf16.gmra.mxu0 %v235
  %v779 = vpop.f32.mrf.mxu0
  %v780 = vadd.f32 %v731, %v779
  %v781 = vpop.f32.mrf.mxu0
  %v782 = vpop.f32.mrf.mxu0
  %v783 = vadd.f32 %v734, %v782
  %v784 = vpop.f32.mrf.mxu0
  %785 = vmatprep.mubr.bf16.mxu0 %v244
  %786 = vmatmul.mubr.bf16.gmra.mxu0 %v243
  %v787 = vpop.f32.mrf.mxu0
  %v788 = vadd.f32 %v739, %v787
  %v789 = vpop.f32.mrf.mxu0
  %v790 = vpop.f32.mrf.mxu0
  %v791 = vadd.f32 %v742, %v790
  %v792 = vpop.f32.mrf.mxu0
  %793 = vdwg.mxu0
  %794 = vmatprep.subr.bf16.mxu0 0
  %795 = vmatpush1.bf16.msra.mxu0 %v574
  %796 = vmatprep.subr.bf16.mxu0 0
  %797 = vmatpush1.bf16.msra.mxu0 %v573
  %798 = vmatprep.subr.bf16.mxu0 0
  %799 = vmatpush1.bf16.msra.mxu0 %v572
  %800 = vmatprep.subr.bf16.mxu0 0
  %801 = vmatpush1.bf16.msra.mxu0 %v571
  %802 = vmatprep.subr.bf16.mxu0 0
  %803 = vmatpush1.bf16.msra.mxu0 %v570
  %804 = vmatprep.subr.bf16.mxu0 0
  %805 = vmatpush1.bf16.msra.mxu0 %v569
  %806 = vmatprep.subr.bf16.mxu0 0
  %807 = vmatpush1.bf16.msra.mxu0 %v568
  %808 = vmatprep.subr.bf16.mxu0 0
  %809 = vmatpush1.bf16.msra.mxu0 %v567
  %810 = vmatprep.subr.bf16.mxu0 0
  %811 = vmatpush2.bf16.msra.mxu0 %v582
  %812 = vmatprep.subr.bf16.mxu0 0
  %813 = vmatpush2.bf16.msra.mxu0 %v581
  %814 = vmatprep.subr.bf16.mxu0 0
  %815 = vmatpush2.bf16.msra.mxu0 %v580
  %816 = vmatprep.subr.bf16.mxu0 0
  %817 = vmatpush2.bf16.msra.mxu0 %v579
  %818 = vmatprep.subr.bf16.mxu0 0
  %819 = vmatpush2.bf16.msra.mxu0 %v578
  %820 = vmatprep.subr.bf16.mxu0 0
  %821 = vmatpush2.bf16.msra.mxu0 %v577
  %822 = vmatprep.subr.bf16.mxu0 0
  %823 = vmatpush2.bf16.msra.mxu0 %v576
  %824 = vmatprep.subr.bf16.mxu0 0
  %825 = vmatpush2.bf16.msra.mxu0 %v575
  %826 = vmatprep.mubr.bf16.mxu0 %v238
  %827 = vmatmul.mubr.bf16.gmra.mxu0 %v237
  %v828 = vpop.f32.mrf.mxu0
  %v829 = vadd.f32 %v780, %v828
  %v830 = vpop.f32.mrf.mxu0
  %v831 = vpop.f32.mrf.mxu0
  %v832 = vadd.f32 %v783, %v831
  %v833 = vpop.f32.mrf.mxu0
  %834 = vmatprep.mubr.bf16.mxu0 %v246
  %835 = vmatmul.mubr.bf16.gmra.mxu0 %v245
  %v836 = vpop.f32.mrf.mxu0
  %v837 = vadd.f32 %v788, %v836
  %v838 = vpop.f32.mrf.mxu0
  %v839 = vpop.f32.mrf.mxu0
  %v840 = vadd.f32 %v791, %v839
  %v841 = vpop.f32.mrf.mxu0
  %842 = vdwg.mxu0
  %v843 = vmax.f32 %v829, 0.0
  %v844 = vmax.f32 %v832, 0.0
  %v845 = vmax.f32 %v837, 0.0
  %v846 = vmax.f32 %v840, 0.0
  %847 = vst [vmem:[%s3] sm:$0xff] %v843
  %848 = vst [vmem:[%s3 + $0x8] sm:$0xff] %v844
  %849 = vst [vmem:[%s3 + $0x10] sm:$0xff] %v845
  %850 = vst [vmem:[%s3 + $0x18] sm:$0xff] %v846
  // Predicated region
  $region14: #{generator_forward.6} parent=0 // pred_check
    _
  $region15: #{generator_forward.6} parent=0 // pred_check_branch
    %852 = sbr.rel (0) target = $region17
  $region16: #{generator_forward.6} parent=0 // pred_region
    _
  $region17: #{generator_forward.6} parent=0 // pred_fallthru
    _
  // Predicated region
  $region18: #{generator_forward.6} parent=0 // pred_check
    _
  $region19: #{generator_forward.6} parent=0 // pred_check_branch
    %854 = sbr.rel (0) target = $region21
  $region20: #{generator_forward.6} parent=0 // pred_region
    _
  $region21: #{generator_forward.6} parent=0 // pred_fallthru
    _

// kernel: generator_forward.7
$region0: #{generator_forward.7}
  #allocation0 [shape = 'u32[]', space=smem, size = 0x4, offset = 0x4, fixed_abs, tag = 'smem constant byte address 0x4 - core index']
  #allocation1 [shape = 'u32[144,128]{1,0:T(1,128)}', space=vmem, size = 0x12000, scoped, tag = 'internal scratch']
  %s0 = inlined_call_operand.vmem [shape: bf16[16,512], index: 0, kind: input, shape index: {}]
  %s1 = inlined_call_operand.vmem [shape: bf16[512,512], index: 1, kind: input, shape index: {}]
  %s2 = inlined_call_operand.vmem [shape: f32[16,1], index: 2, kind: input, shape index: {}]
  %s3 = inlined_call_operand.vmem [shape: f32[16,512], index: 3, kind: output, shape index: {}]
  %s4 = sld [smem:[#allocation0]]
  $region102: #{generator_forward.7} parent=0
    _
  %s6 = ssub.s32 1, %s4
  %s7 = scalar_select 0, %s6, %s4
  $region1: #{generator_forward.7} parent=0
    #allocation2 [shape = 'u8[524288]{0}', space=vmem, size = 0x80000, scoped, tag = 'input window, operand 1']
    #allocation3 [shape = 'u8[32768]{0}', space=vmem, size = 0x8000, scoped, tag = 'output window, operand 0']
    loop: start=0, step=1, limit=4
    $region2: #{generator_forward.7} parent=1 // loop_pre_header
      _
    $region3: #{generator_forward.7} parent=1 // loop_header
      %s9 = sphi 0, %s13
      %p10 = scmp.ge.s32.totalorder %s9, 4
      %s17 = sphi 0, %s17
      %s19 = sphi 0, %s17
      %s20 = sphi 0, %s19
      %s34 = sphi 0, %s20
      %s40 = sphi 0, %s42
      %s43 = sphi 0, %s40
      %s44 = sphi 0, %s43
      %s60 = sphi 0, %s44
      %s64 = sphi 0, %s64
      %s66 = sphi 0, %s64
      %s67 = sphi 0, %s66
      %s81 = sphi 0, %s67
      %s87 = sphi 0, %s89
      %s90 = sphi 0, %s87
      %s91 = sphi 0, %s90
      %s107 = sphi 0, %s91
    $region4: #{generator_forward.7} parent=1 // loop_header_branch
      %12 = sbr.rel (%p10) target = $region8
    $region5: #{generator_forward.7} parent=1 // loop_body
      %s14 = ssub.s32 %s9, 1
      %s15 = ssub.s32 %s9, 2
      %s16 = sadd.s32 %s9, 1
      %s18 = sadd.s32 %s17, 1
      %p21 = scmp.eq.s32.totalorder %s9, 1
      %p22 = scmp.ne.s32.totalorder %s17, %s19
      %p23 = scmp.eq.s32.totalorder %s9, 0
      %p24 = por %p22, %p23
      %p25 = scmp.ne.s32.totalorder %s17, %s19
      %p26 = scmp.eq.s32.totalorder %s14, 1
      %p27 = por %p25, %p26
      %p28 = scmp.ne.s32.totalorder %s19, %s20
      %p29 = scmp.eq.s32.totalorder %s14, 0
      %p30 = por %p28, %p29
      %p31 = scmp.ne.s32.totalorder %s19, %s20
      %p32 = scmp.eq.s32.totalorder %s15, 1
      %p33 = por %p31, %p32
      %p35 = scmp.ne.s32.totalorder %s20, %s34
      %p36 = scmp.eq.s32.totalorder %s15, 0
      %p37 = por %p35, %p36
      %s38 = ssub.s32 %s9, %s16
      %p39 = scmp.eq.s32.totalorder %s38, 0
      %s41 = sadd.s32 %s40, 1
      %s42 = scalar_select %p39, %s40, %s41
      %p45 = pneg %p39
      %p46 = scmp.eq.s32.totalorder %s9, 1
      %p47 = por %p45, %p46
      %p48 = scmp.ne.s32.totalorder %s40, %s43
      %p49 = scmp.eq.s32.totalorder %s9, 0
      %p50 = por %p48, %p49
      %p51 = scmp.ne.s32.totalorder %s40, %s43
      %p52 = scmp.eq.s32.totalorder %s14, 1
      %p53 = por %p51, %p52
      %p54 = scmp.ne.s32.totalorder %s43, %s44
      %p55 = scmp.eq.s32.totalorder %s14, 0
      %p56 = por %p54, %p55
      %p57 = scmp.ne.s32.totalorder %s43, %s44
      %p58 = scmp.eq.s32.totalorder %s15, 1
      %p59 = por %p57, %p58
      %p61 = scmp.ne.s32.totalorder %s44, %s60
      %p62 = scmp.eq.s32.totalorder %s15, 0
      %p63 = por %p61, %p62
      %s65 = sadd.s32 %s64, 1
      %p68 = scmp.eq.s32.totalorder %s9, 1
      %p69 = scmp.ne.s32.totalorder %s64, %s66
      %p70 = scmp.eq.s32.totalorder %s9, 0
      %p71 = por %p69, %p70
      %p72 = scmp.ne.s32.totalorder %s64, %s66
      %p73 = scmp.eq.s32.totalorder %s14, 1
      %p74 = por %p72, %p73
      %p75 = scmp.ne.s32.totalorder %s66, %s67
      %p76 = scmp.eq.s32.totalorder %s14, 0
      %p77 = por %p75, %p76
      %p78 = scmp.ne.s32.totalorder %s66, %s67
      %p79 = scmp.eq.s32.totalorder %s15, 1
      %p80 = por %p78, %p79
      %p82 = scmp.ne.s32.totalorder %s67, %s81
      %p83 = scmp.eq.s32.totalorder %s15, 0
      %p84 = por %p82, %p83
      %s85 = ssub.s32 %s9, %s16
      %p86 = scmp.eq.s32.totalorder %s85, 0
      %s88 = sadd.s32 %s87, 1
      %s89 = scalar_select %p86, %s87, %s88
      %p92 = pneg %p86
      %p93 = scmp.eq.s32.totalorder %s9, 1
      %p94 = por %p92, %p93
      %p95 = scmp.ne.s32.totalorder %s87, %s90
      %p96 = scmp.eq.s32.totalorder %s9, 0
      %p97 = por %p95, %p96
      %p98 = scmp.ne.s32.totalorder %s87, %s90
      %p99 = scmp.eq.s32.totalorder %s14, 1
      %p100 = por %p98, %p99
      %p101 = scmp.ne.s32.totalorder %s90, %s91
      %p102 = scmp.eq.s32.totalorder %s14, 0
      %p103 = por %p101, %p102
      %p104 = scmp.ne.s32.totalorder %s90, %s91
      %p105 = scmp.eq.s32.totalorder %s15, 1
      %p106 = por %p104, %p105
      %p108 = scmp.ne.s32.totalorder %s91, %s107
      %p109 = scmp.eq.s32.totalorder %s15, 0
      %p110 = por %p108, %p109
      %p111 = scmp.le.s32.totalorder 1, %s9
      %p112 = scmp.lt.s32.totalorder %s9, 3
      %p113 = pnand %p111, %p112
      %p114 = pneg %p113
      // Predicated region
      $region9: #{generator_forward.7} parent=5 // pred_check
        _
      $region10: #{generator_forward.7} parent=5 // pred_check_branch
        %116 = sbr.rel (%p113) target = $region12
      $region11: #{generator_forward.7} parent=5 // pred_region
        %s117 = ssub.s32 %s9, 1
        // Predicated region
        $region13: #{generator_forward.7} parent=11 // pred_check
          %p118 = pneg %p30
        $region14: #{generator_forward.7} parent=11 // pred_check_branch
          %120 = sbr.rel (%p118) target = $region16
        $region15: #{generator_forward.7} parent=11 // pred_region
          _
        $region16: #{generator_forward.7} parent=11 // pred_fallthru
          _
        // Predicated region
        $region17: #{generator_forward.7} parent=11 // pred_check
          %p121 = pneg %p77
        $region18: #{generator_forward.7} parent=11 // pred_check_branch
          %123 = sbr.rel (%p121) target = $region20
        $region19: #{generator_forward.7} parent=11 // pred_region
          _
        $region20: #{generator_forward.7} parent=11 // pred_fallthru
          _
      $region12: #{generator_forward.7} parent=5 // pred_fallthru
        _
      %p124 = scmp.lt.s32.totalorder %s9, 2
      // Predicated region
      $region21: #{generator_forward.7} parent=5 // pred_check
        %p125 = pneg %p124
      $region22: #{generator_forward.7} parent=5 // pred_check_branch
        %127 = sbr.rel (%p125) target = $region24
      $region23: #{generator_forward.7} parent=5 // pred_region
        // Predicated region
        $region25: #{generator_forward.7} parent=23 // pred_check
          %p128 = pneg %p50
        $region26: #{generator_forward.7} parent=23 // pred_check_branch
          %130 = sbr.rel (%p128) target = $region28
        $region27: #{generator_forward.7} parent=23 // pred_region
          %s131 = sand.u32 %s40, 1
          %s132 = sand.u32 %s40, 1
          %s133 = smul.addr %s132, 512
          %s134 = scalar_lea.vmem [#allocation2], %s133
          %s135 = smul.u32 2, %s9
          %s136 = smul.addr %s135, 4
          %s137 = scalar_lea.vmem %s1, %s136
          // Predicated region
          $region29: #{generator_forward.7} parent=27 // pred_check
            _
          $region30: #{generator_forward.7} parent=27 // pred_check_branch
            %139 = sbr.rel (0) target = $region32
          $region31: #{generator_forward.7} parent=27 // pred_region
            // Predicated region
            $region33: #{generator_forward.7} parent=31 // pred_check
              _
            $region34: #{generator_forward.7} parent=31 // pred_check_branch
              %141 = sbr.rel (0) target = $region36
            $region35: #{generator_forward.7} parent=31 // pred_region
              // Predicated region
              $region48: #{generator_forward.7} parent=35 // pred_check
                _
              $region49: #{generator_forward.7} parent=35 // pred_check_branch
                %283 = sbr.rel (0) target = $region51
              $region50: #{generator_forward.7} parent=35 // pred_region
                loop: start=0, step=1, limit=1
                $region52: #{generator_forward.7} parent=50 // loop_pre_header
                  _
                $region53: #{generator_forward.7} parent=50 // loop_header
                  %s285 = sphi 0, %s289
                  %p286 = scmp.ge.s32.totalorder %s285, 1
                  %s290 = sphi %s137, %s137
                  %s291 = sphi %s134, %s134
                $region54: #{generator_forward.7} parent=50 // loop_header_branch
                  %288 = sbr.rel (%p286) target = $region58
                $region55: #{generator_forward.7} parent=50 // loop_body
                  %v292 = vld [vmem:[%s290] sm:$0xff]
                  %293 = vst [vmem:[%s291] sm:$0xff] %v292
                  %v294 = vld [vmem:[%s290 + $0x10] sm:$0xff]
                  %295 = vst [vmem:[%s291 + $0x8] sm:$0xff] %v294
                  %v296 = vld [vmem:[%s290 + $0x20] sm:$0xff]
                  %297 = vst [vmem:[%s291 + $0x10] sm:$0xff] %v296
                  %v298 = vld [vmem:[%s290 + $0x30] sm:$0xff]
                  %299 = vst [vmem:[%s291 + $0x18] sm:$0xff] %v298
                  %v300 = vld [vmem:[%s290 + $0x40] sm:$0xff]
                  %301 = vst [vmem:[%s291 + $0x20] sm:$0xff] %v300
                  %v302 = vld [vmem:[%s290 + $0x50] sm:$0xff]
                  %303 = vst [vmem:[%s291 + $0x28] sm:$0xff] %v302
                  %v304 = vld [vmem:[%s290 + $0x60] sm:$0xff]
                  %305 = vst [vmem:[%s291 + $0x30] sm:$0xff] %v304
                  %v306 = vld [vmem:[%s290 + $0x70] sm:$0xff]
                  %307 = vst [vmem:[%s291 + $0x38] sm:$0xff] %v306
                  %v308 = vld [vmem:[%s290 + $0x80] sm:$0xff]
                  %309 = vst [vmem:[%s291 + $0x40] sm:$0xff] %v308
                  %v310 = vld [vmem:[%s290 + $0x90] sm:$0xff]
                  %311 = vst [vmem:[%s291 + $0x48] sm:$0xff] %v310
                  %v312 = vld [vmem:[%s290 + $0xa0] sm:$0xff]
                  %313 = vst [vmem:[%s291 + $0x50] sm:$0xff] %v312
                  %v314 = vld [vmem:[%s290 + $0xb0] sm:$0xff]
                  %315 = vst [vmem:[%s291 + $0x58] sm:$0xff] %v314
                  %v316 = vld [vmem:[%s290 + $0xc0] sm:$0xff]
                  %317 = vst [vmem:[%s291 + $0x60] sm:$0xff] %v316
                  %v318 = vld [vmem:[%s290 + $0xd0] sm:$0xff]
                  %319 = vst [vmem:[%s291 + $0x68] sm:$0xff] %v318
                  %v320 = vld [vmem:[%s290 + $0xe0] sm:$0xff]
                  %321 = vst [vmem:[%s291 + $0x70] sm:$0xff] %v320
                  %v322 = vld [vmem:[%s290 + $0xf0] sm:$0xff]
                  %323 = vst [vmem:[%s291 + $0x78] sm:$0xff] %v322
                  %v324 = vld [vmem:[%s290 + $0x100] sm:$0xff]
                  %325 = vst [vmem:[%s291 + $0x80] sm:$0xff] %v324
                  %v326 = vld [vmem:[%s290 + $0x110] sm:$0xff]
                  %327 = vst [vmem:[%s291 + $0x88] sm:$0xff] %v326
                  %v328 = vld [vmem:[%s290 + $0x120] sm:$0xff]
                  %329 = vst [vmem:[%s291 + $0x90] sm:$0xff] %v328
                  %v330 = vld [vmem:[%s290 + $0x130] sm:$0xff]
                  %331 = vst [vmem:[%s291 + $0x98] sm:$0xff] %v330
                  %v332 = vld [vmem:[%s290 + $0x140] sm:$0xff]
                  %333 = vst [vmem:[%s291 + $0xa0] sm:$0xff] %v332
                  %v334 = vld [vmem:[%s290 + $0x150] sm:$0xff]
                  %335 = vst [vmem:[%s291 + $0xa8] sm:$0xff] %v334
                  %v336 = vld [vmem:[%s290 + $0x160] sm:$0xff]
                  %337 = vst [vmem:[%s291 + $0xb0] sm:$0xff] %v336
                  %v338 = vld [vmem:[%s290 + $0x170] sm:$0xff]
                  %339 = vst [vmem:[%s291 + $0xb8] sm:$0xff] %v338
                  %v340 = vld [vmem:[%s290 + $0x180] sm:$0xff]
                  %341 = vst [vmem:[%s291 + $0xc0] sm:$0xff] %v340
                  %v342 = vld [vmem:[%s290 + $0x190] sm:$0xff]
                  %343 = vst [vmem:[%s291 + $0xc8] sm:$0xff] %v342
                  %v344 = vld [vmem:[%s290 + $0x1a0] sm:$0xff]
                  %345 = vst [vmem:[%s291 + $0xd0] sm:$0xff] %v344
                  %v346 = vld [vmem:[%s290 + $0x1b0] sm:$0xff]
                  %347 = vst [vmem:[%s291 + $0xd8] sm:$0xff] %v346
                  %v348 = vld [vmem:[%s290 + $0x1c0] sm:$0xff]
                  %349 = vst [vmem:[%s291 + $0xe0] sm:$0xff] %v348
                  %v350 = vld [vmem:[%s290 + $0x1d0] sm:$0xff]
                  %351 = vst [vmem:[%s291 + $0xe8] sm:$0xff] %v350
                  %v352 = vld [vmem:[%s290 + $0x1e0] sm:$0xff]
                  %353 = vst [vmem:[%s291 + $0xf0] sm:$0xff] %v352
                  %v354 = vld [vmem:[%s290 + $0x1f0] sm:$0xff]
                  %355 = vst [vmem:[%s291 + $0xf8] sm:$0xff] %v354
                  %v356 = vld [vmem:[%s290 + $0x200] sm:$0xff]
                  %357 = vst [vmem:[%s291 + $0x100] sm:$0xff] %v356
                  %v358 = vld [vmem:[%s290 + $0x210] sm:$0xff]
                  %359 = vst [vmem:[%s291 + $0x108] sm:$0xff] %v358
                  %v360 = vld [vmem:[%s290 + $0x220] sm:$0xff]
                  %361 = vst [vmem:[%s291 + $0x110] sm:$0xff] %v360
                  %v362 = vld [vmem:[%s290 + $0x230] sm:$0xff]
                  %363 = vst [vmem:[%s291 + $0x118] sm:$0xff] %v362
                  %v364 = vld [vmem:[%s290 + $0x240] sm:$0xff]
                  %365 = vst [vmem:[%s291 + $0x120] sm:$0xff] %v364
                  %v366 = vld [vmem:[%s290 + $0x250] sm:$0xff]
                  %367 = vst [vmem:[%s291 + $0x128] sm:$0xff] %v366
                  %v368 = vld [vmem:[%s290 + $0x260] sm:$0xff]
                  %369 = vst [vmem:[%s291 + $0x130] sm:$0xff] %v368
                  %v370 = vld [vmem:[%s290 + $0x270] sm:$0xff]
                  %371 = vst [vmem:[%s291 + $0x138] sm:$0xff] %v370
                  %v372 = vld [vmem:[%s290 + $0x280] sm:$0xff]
                  %373 = vst [vmem:[%s291 + $0x140] sm:$0xff] %v372
                  %v374 = vld [vmem:[%s290 + $0x290] sm:$0xff]
                  %375 = vst [vmem:[%s291 + $0x148] sm:$0xff] %v374
                  %v376 = vld [vmem:[%s290 + $0x2a0] sm:$0xff]
                  %377 = vst [vmem:[%s291 + $0x150] sm:$0xff] %v376
                  %v378 = vld [vmem:[%s290 + $0x2b0] sm:$0xff]
                  %379 = vst [vmem:[%s291 + $0x158] sm:$0xff] %v378
                  %v380 = vld [vmem:[%s290 + $0x2c0] sm:$0xff]
                  %381 = vst [vmem:[%s291 + $0x160] sm:$0xff] %v380
                  %v382 = vld [vmem:[%s290 + $0x2d0] sm:$0xff]
                  %383 = vst [vmem:[%s291 + $0x168] sm:$0xff] %v382
                  %v384 = vld [vmem:[%s290 + $0x2e0] sm:$0xff]
                  %385 = vst [vmem:[%s291 + $0x170] sm:$0xff] %v384
                  %v386 = vld [vmem:[%s290 + $0x2f0] sm:$0xff]
                  %387 = vst [vmem:[%s291 + $0x178] sm:$0xff] %v386
                  %v388 = vld [vmem:[%s290 + $0x300] sm:$0xff]
                  %389 = vst [vmem:[%s291 + $0x180] sm:$0xff] %v388
                  %v390 = vld [vmem:[%s290 + $0x310] sm:$0xff]
                  %391 = vst [vmem:[%s291 + $0x188] sm:$0xff] %v390
                  %v392 = vld [vmem:[%s290 + $0x320] sm:$0xff]
                  %393 = vst [vmem:[%s291 + $0x190] sm:$0xff] %v392
                  %v394 = vld [vmem:[%s290 + $0x330] sm:$0xff]
                  %395 = vst [vmem:[%s291 + $0x198] sm:$0xff] %v394
                  %v396 = vld [vmem:[%s290 + $0x340] sm:$0xff]
                  %397 = vst [vmem:[%s291 + $0x1a0] sm:$0xff] %v396
                  %v398 = vld [vmem:[%s290 + $0x350] sm:$0xff]
                  %399 = vst [vmem:[%s291 + $0x1a8] sm:$0xff] %v398
                  %v400 = vld [vmem:[%s290 + $0x360] sm:$0xff]
                  %401 = vst [vmem:[%s291 + $0x1b0] sm:$0xff] %v400
                  %v402 = vld [vmem:[%s290 + $0x370] sm:$0xff]
                  %403 = vst [vmem:[%s291 + $0x1b8] sm:$0xff] %v402
                  %v404 = vld [vmem:[%s290 + $0x380] sm:$0xff]
                  %405 = vst [vmem:[%s291 + $0x1c0] sm:$0xff] %v404
                  %v406 = vld [vmem:[%s290 + $0x390] sm:$0xff]
                  %407 = vst [vmem:[%s291 + $0x1c8] sm:$0xff] %v406
                  %v408 = vld [vmem:[%s290 + $0x3a0] sm:$0xff]
                  %409 = vst [vmem:[%s291 + $0x1d0] sm:$0xff] %v408
                  %v410 = vld [vmem:[%s290 + $0x3b0] sm:$0xff]
                  %411 = vst [vmem:[%s291 + $0x1d8] sm:$0xff] %v410
                  %v412 = vld [vmem:[%s290 + $0x3c0] sm:$0xff]
                  %413 = vst [vmem:[%s291 + $0x1e0] sm:$0xff] %v412
                  %v414 = vld [vmem:[%s290 + $0x3d0] sm:$0xff]
                  %415 = vst [vmem:[%s291 + $0x1e8] sm:$0xff] %v414
                  %v416 = vld [vmem:[%s290 + $0x3e0] sm:$0xff]
                  %417 = vst [vmem:[%s291 + $0x1f0] sm:$0xff] %v416
                  %v418 = vld [vmem:[%s290 + $0x3f0] sm:$0xff]
                  %419 = vst [vmem:[%s291 + $0x1f8] sm:$0xff] %v418
                $region56: #{generator_forward.7} parent=50 // loop_footer
                  %s289 = sadd.s32 1, %s285
                $region57: #{generator_forward.7} parent=50 // loop_footer_branch
                  %284 = sbr.rel target = $region53
                $region58: #{generator_forward.7} parent=50 // loop_exit
                  _
              $region51: #{generator_forward.7} parent=35 // pred_fallthru
                _
              // Predicated region
              $region59: #{generator_forward.7} parent=35 // pred_check
                _
              $region60: #{generator_forward.7} parent=35 // pred_check_branch
                %421 = sbr.rel target = $region62
              $region61: #{generator_forward.7} parent=35 // pred_region
                _
              $region62: #{generator_forward.7} parent=35 // pred_fallthru
                _
            $region36: #{generator_forward.7} parent=31 // pred_fallthru
              _
            // Predicated region
            $region37: #{generator_forward.7} parent=31 // pred_check
              _
            $region38: #{generator_forward.7} parent=31 // pred_check_branch
              %143 = sbr.rel target = $region40
            $region39: #{generator_forward.7} parent=31 // pred_region
              %s145 = ssub.s32 256, 1
              loop: start=0, step=1, limit=1
              $region41: #{generator_forward.7} parent=39 // loop_pre_header
                _
              $region42: #{generator_forward.7} parent=39 // loop_header
                %s147 = sphi 0, %s151
                %p148 = scmp.ge.s32.totalorder %s147, 1
                %s152 = sphi %s137, %s137
                %s153 = sphi %s134, %s134
              $region43: #{generator_forward.7} parent=39 // loop_header_branch
                %150 = sbr.rel (%p148) target = $region47
              $region44: #{generator_forward.7} parent=39 // loop_body
                %v154 = vld [vmem:[%s152] sm:%s145]
                %155 = vst [vmem:[%s153] sm:%s145] %v154
                %v156 = vld [vmem:[%s152 + $0x10] sm:%s145]
                %157 = vst [vmem:[%s153 + $0x8] sm:%s145] %v156
                %v158 = vld [vmem:[%s152 + $0x20] sm:%s145]
                %159 = vst [vmem:[%s153 + $0x10] sm:%s145] %v158
                %v160 = vld [vmem:[%s152 + $0x30] sm:%s145]
                %161 = vst [vmem:[%s153 + $0x18] sm:%s145] %v160
                %v162 = vld [vmem:[%s152 + $0x40] sm:%s145]
                %163 = vst [vmem:[%s153 + $0x20] sm:%s145] %v162
                %v164 = vld [vmem:[%s152 + $0x50] sm:%s145]
                %165 = vst [vmem:[%s153 + $0x28] sm:%s145] %v164
                %v166 = vld [vmem:[%s152 + $0x60] sm:%s145]
                %167 = vst [vmem:[%s153 + $0x30] sm:%s145] %v166
                %v168 = vld [vmem:[%s152 + $0x70] sm:%s145]
                %169 = vst [vmem:[%s153 + $0x38] sm:%s145] %v168
                %v170 = vld [vmem:[%s152 + $0x80] sm:%s145]
                %171 = vst [vmem:[%s153 + $0x40] sm:%s145] %v170
                %v172 = vld [vmem:[%s152 + $0x90] sm:%s145]
                %173 = vst [vmem:[%s153 + $0x48] sm:%s145] %v172
                %v174 = vld [vmem:[%s152 + $0xa0] sm:%s145]
                %175 = vst [vmem:[%s153 + $0x50] sm:%s145] %v174
                %v176 = vld [vmem:[%s152 + $0xb0] sm:%s145]
                %177 = vst [vmem:[%s153 + $0x58] sm:%s145] %v176
                %v178 = vld [vmem:[%s152 + $0xc0] sm:%s145]
                %179 = vst [vmem:[%s153 + $0x60] sm:%s145] %v178
                %v180 = vld [vmem:[%s152 + $0xd0] sm:%s145]
                %181 = vst [vmem:[%s153 + $0x68] sm:%s145] %v180
                %v182 = vld [vmem:[%s152 + $0xe0] sm:%s145]
                %183 = vst [vmem:[%s153 + $0x70] sm:%s145] %v182
                %v184 = vld [vmem:[%s152 + $0xf0] sm:%s145]
                %185 = vst [vmem:[%s153 + $0x78] sm:%s145] %v184
                %v186 = vld [vmem:[%s152 + $0x100] sm:%s145]
                %187 = vst [vmem:[%s153 + $0x80] sm:%s145] %v186
                %v188 = vld [vmem:[%s152 + $0x110] sm:%s145]
                %189 = vst [vmem:[%s153 + $0x88] sm:%s145] %v188
                %v190 = vld [vmem:[%s152 + $0x120] sm:%s145]
                %191 = vst [vmem:[%s153 + $0x90] sm:%s145] %v190
                %v192 = vld [vmem:[%s152 + $0x130] sm:%s145]
                %193 = vst [vmem:[%s153 + $0x98] sm:%s145] %v192
                %v194 = vld [vmem:[%s152 + $0x140] sm:%s145]
                %195 = vst [vmem:[%s153 + $0xa0] sm:%s145] %v194
                %v196 = vld [vmem:[%s152 + $0x150] sm:%s145]
                %197 = vst [vmem:[%s153 + $0xa8] sm:%s145] %v196
                %v198 = vld [vmem:[%s152 + $0x160] sm:%s145]
                %199 = vst [vmem:[%s153 + $0xb0] sm:%s145] %v198
                %v200 = vld [vmem:[%s152 + $0x170] sm:%s145]
                %201 = vst [vmem:[%s153 + $0xb8] sm:%s145] %v200
                %v202 = vld [vmem:[%s152 + $0x180] sm:%s145]
                %203 = vst [vmem:[%s153 + $0xc0] sm:%s145] %v202
                %v204 = vld [vmem:[%s152 + $0x190] sm:%s145]
                %205 = vst [vmem:[%s153 + $0xc8] sm:%s145] %v204
                %v206 = vld [vmem:[%s152 + $0x1a0] sm:%s145]
                %207 = vst [vmem:[%s153 + $0xd0] sm:%s145] %v206
                %v208 = vld [vmem:[%s152 + $0x1b0] sm:%s145]
                %209 = vst [vmem:[%s153 + $0xd8] sm:%s145] %v208
                %v210 = vld [vmem:[%s152 + $0x1c0] sm:%s145]
                %211 = vst [vmem:[%s153 + $0xe0] sm:%s145] %v210
                %v212 = vld [vmem:[%s152 + $0x1d0] sm:%s145]
                %213 = vst [vmem:[%s153 + $0xe8] sm:%s145] %v212
                %v214 = vld [vmem:[%s152 + $0x1e0] sm:%s145]
                %215 = vst [vmem:[%s153 + $0xf0] sm:%s145] %v214
                %v216 = vld [vmem:[%s152 + $0x1f0] sm:%s145]
                %217 = vst [vmem:[%s153 + $0xf8] sm:%s145] %v216
                %v218 = vld [vmem:[%s152 + $0x200] sm:%s145]
                %219 = vst [vmem:[%s153 + $0x100] sm:%s145] %v218
                %v220 = vld [vmem:[%s152 + $0x210] sm:%s145]
                %221 = vst [vmem:[%s153 + $0x108] sm:%s145] %v220
                %v222 = vld [vmem:[%s152 + $0x220] sm:%s145]
                %223 = vst [vmem:[%s153 + $0x110] sm:%s145] %v222
                %v224 = vld [vmem:[%s152 + $0x230] sm:%s145]
                %225 = vst [vmem:[%s153 + $0x118] sm:%s145] %v224
                %v226 = vld [vmem:[%s152 + $0x240] sm:%s145]
                %227 = vst [vmem:[%s153 + $0x120] sm:%s145] %v226
                %v228 = vld [vmem:[%s152 + $0x250] sm:%s145]
                %229 = vst [vmem:[%s153 + $0x128] sm:%s145] %v228
                %v230 = vld [vmem:[%s152 + $0x260] sm:%s145]
                %231 = vst [vmem:[%s153 + $0x130] sm:%s145] %v230
                %v232 = vld [vmem:[%s152 + $0x270] sm:%s145]
                %233 = vst [vmem:[%s153 + $0x138] sm:%s145] %v232
                %v234 = vld [vmem:[%s152 + $0x280] sm:%s145]
                %235 = vst [vmem:[%s153 + $0x140] sm:%s145] %v234
                %v236 = vld [vmem:[%s152 + $0x290] sm:%s145]
                %237 = vst [vmem:[%s153 + $0x148] sm:%s145] %v236
                %v238 = vld [vmem:[%s152 + $0x2a0] sm:%s145]
                %239 = vst [vmem:[%s153 + $0x150] sm:%s145] %v238
                %v240 = vld [vmem:[%s152 + $0x2b0] sm:%s145]
                %241 = vst [vmem:[%s153 + $0x158] sm:%s145] %v240
                %v242 = vld [vmem:[%s152 + $0x2c0] sm:%s145]
                %243 = vst [vmem:[%s153 + $0x160] sm:%s145] %v242
                %v244 = vld [vmem:[%s152 + $0x2d0] sm:%s145]
                %245 = vst [vmem:[%s153 + $0x168] sm:%s145] %v244
                %v246 = vld [vmem:[%s152 + $0x2e0] sm:%s145]
                %247 = vst [vmem:[%s153 + $0x170] sm:%s145] %v246
                %v248 = vld [vmem:[%s152 + $0x2f0] sm:%s145]
                %249 = vst [vmem:[%s153 + $0x178] sm:%s145] %v248
                %v250 = vld [vmem:[%s152 + $0x300] sm:%s145]
                %251 = vst [vmem:[%s153 + $0x180] sm:%s145] %v250
                %v252 = vld [vmem:[%s152 + $0x310] sm:%s145]
                %253 = vst [vmem:[%s153 + $0x188] sm:%s145] %v252
                %v254 = vld [vmem:[%s152 + $0x320] sm:%s145]
                %255 = vst [vmem:[%s153 + $0x190] sm:%s145] %v254
                %v256 = vld [vmem:[%s152 + $0x330] sm:%s145]
                %257 = vst [vmem:[%s153 + $0x198] sm:%s145] %v256
                %v258 = vld [vmem:[%s152 + $0x340] sm:%s145]
                %259 = vst [vmem:[%s153 + $0x1a0] sm:%s145] %v258
                %v260 = vld [vmem:[%s152 + $0x350] sm:%s145]
                %261 = vst [vmem:[%s153 + $0x1a8] sm:%s145] %v260
                %v262 = vld [vmem:[%s152 + $0x360] sm:%s145]
                %263 = vst [vmem:[%s153 + $0x1b0] sm:%s145] %v262
                %v264 = vld [vmem:[%s152 + $0x370] sm:%s145]
                %265 = vst [vmem:[%s153 + $0x1b8] sm:%s145] %v264
                %v266 = vld [vmem:[%s152 + $0x380] sm:%s145]
                %267 = vst [vmem:[%s153 + $0x1c0] sm:%s145] %v266
                %v268 = vld [vmem:[%s152 + $0x390] sm:%s145]
                %269 = vst [vmem:[%s153 + $0x1c8] sm:%s145] %v268
                %v270 = vld [vmem:[%s152 + $0x3a0] sm:%s145]
                %271 = vst [vmem:[%s153 + $0x1d0] sm:%s145] %v270
                %v272 = vld [vmem:[%s152 + $0x3b0] sm:%s145]
                %273 = vst [vmem:[%s153 + $0x1d8] sm:%s145] %v272
                %v274 = vld [vmem:[%s152 + $0x3c0] sm:%s145]
                %275 = vst [vmem:[%s153 + $0x1e0] sm:%s145] %v274
                %v276 = vld [vmem:[%s152 + $0x3d0] sm:%s145]
                %277 = vst [vmem:[%s153 + $0x1e8] sm:%s145] %v276
                %v278 = vld [vmem:[%s152 + $0x3e0] sm:%s145]
                %279 = vst [vmem:[%s153 + $0x1f0] sm:%s145] %v278
                %v280 = vld [vmem:[%s152 + $0x3f0] sm:%s145]
                %281 = vst [vmem:[%s153 + $0x1f8] sm:%s145] %v280
              $region45: #{generator_forward.7} parent=39 // loop_footer
                %s151 = sadd.s32 1, %s147
              $region46: #{generator_forward.7} parent=39 // loop_footer_branch
                %146 = sbr.rel target = $region42
              $region47: #{generator_forward.7} parent=39 // loop_exit
                _
            $region40: #{generator_forward.7} parent=31 // pred_fallthru
              _
          $region32: #{generator_forward.7} parent=27 // pred_fallthru
            _
          %422 = vnop
        $region28: #{generator_forward.7} parent=23 // pred_fallthru
          _
      $region24: #{generator_forward.7} parent=5 // pred_fallthru
        _
      %p423 = scmp.le.s32.totalorder 1, %s9
      %p424 = scmp.lt.s32.totalorder %s9, 3
      %p425 = pnand %p423, %p424
      %p426 = pneg %p425
      // Predicated region
      $region63: #{generator_forward.7} parent=5 // pred_check
        _
      $region64: #{generator_forward.7} parent=5 // pred_check_branch
        %428 = sbr.rel (%p425) target = $region66
      $region65: #{generator_forward.7} parent=5 // pred_region
        %s429 = ssub.s32 %s9, 1
        %s430 = sand.u32 %s43, 1
        %s431 = sand.u32 %s43, 1
        %s432 = smul.addr %s431, 512
        %s433 = scalar_lea.vmem [#allocation2], %s432
        // Predicated region
        $region67: #{generator_forward.7} parent=65 // pred_check
          %p434 = pneg %p56
        $region68: #{generator_forward.7} parent=65 // pred_check_branch
          %436 = sbr.rel (%p434) target = $region70
        $region69: #{generator_forward.7} parent=65 // pred_region
          _
        $region70: #{generator_forward.7} parent=65 // pred_fallthru
          _
        %p437 = pneg %p30
        %p438 = pneg %p27
        %s439 = sand.u32 %s43, 1
        %s440 = sand.u32 %s43, 1
        %s441 = smul.addr %s440, 512
        %s442 = scalar_lea.vmem [#allocation2], %s441
        %p443 = pneg %p56
        %p444 = pneg %p53
        %p445 = pneg %p77
        %p446 = pneg %p74
        %p447 = pneg %p103
        %p448 = pneg %p100
        %s449 = sand.u32 %s90, 1
        %s450 = sand.u32 %s90, 1
        %s451 = smul.addr %s450, 32
        %s452 = scalar_lea.vmem [#allocation3], %s451
        %s453 = smul.u32 2, %s14
        %s454 = smul.u32 2, %s14
        %v455 = vld [vmem:[%s0] sm:$0xff]
        %v456 = vld [vmem:[%s0 + $0x8] sm:$0xff]
        %v457 = vld [vmem:[%s0 + $0x10] sm:$0xff]
        %v458 = vld [vmem:[%s0 + $0x18] sm:$0xff]
        %v459 = vld [vmem:[%s433] sm:$0xff]
        %v460 = vld [vmem:[%s433 + $0x8] sm:$0xff]
        %v461 = vld [vmem:[%s433 + $0x10] sm:$0xff]
        %v462 = vld [vmem:[%s433 + $0x18] sm:$0xff]
        %v463 = vld [vmem:[%s433 + $0x20] sm:$0xff]
        %v464 = vld [vmem:[%s433 + $0x28] sm:$0xff]
        %v465 = vld [vmem:[%s433 + $0x30] sm:$0xff]
        %v466 = vld [vmem:[%s433 + $0x38] sm:$0xff]
        %v467 = vld [vmem:[%s433 + $0x40] sm:$0xff]
        %v468 = vld [vmem:[%s433 + $0x48] sm:$0xff]
        %v469 = vld [vmem:[%s433 + $0x50] sm:$0xff]
        %v470 = vld [vmem:[%s433 + $0x58] sm:$0xff]
        %v471 = vld [vmem:[%s433 + $0x60] sm:$0xff]
        %v472 = vld [vmem:[%s433 + $0x68] sm:$0xff]
        %v473 = vld [vmem:[%s433 + $0x70] sm:$0xff]
        %v474 = vld [vmem:[%s433 + $0x78] sm:$0xff]
        %v475 = vld [vmem:[%s433 + $0x80] sm:$0xff]
        %v476 = vld [vmem:[%s433 + $0x88] sm:$0xff]
        %v477 = vld [vmem:[%s433 + $0x90] sm:$0xff]
        %v478 = vld [vmem:[%s433 + $0x98] sm:$0xff]
        %v479 = vld [vmem:[%s433 + $0xa0] sm:$0xff]
        %v480 = vld [vmem:[%s433 + $0xa8] sm:$0xff]
        %v481 = vld [vmem:[%s433 + $0xb0] sm:$0xff]
        %v482 = vld [vmem:[%s433 + $0xb8] sm:$0xff]
        %v483 = vld [vmem:[%s433 + $0xc0] sm:$0xff]
        %v484 = vld [vmem:[%s433 + $0xc8] sm:$0xff]
        %v485 = vld [vmem:[%s433 + $0xd0] sm:$0xff]
        %v486 = vld [vmem:[%s433 + $0xd8] sm:$0xff]
        %v487 = vld [vmem:[%s433 + $0xe0] sm:$0xff]
        %v488 = vld [vmem:[%s433 + $0xe8] sm:$0xff]
        %v489 = vld [vmem:[%s433 + $0xf0] sm:$0xff]
        %v490 = vld [vmem:[%s433 + $0xf8] sm:$0xff]
        %v491 = vld [vmem:[%s433 + $0x100] sm:$0xff]
        %v492 = vld [vmem:[%s433 + $0x108] sm:$0xff]
        %v493 = vld [vmem:[%s433 + $0x110] sm:$0xff]
        %v494 = vld [vmem:[%s433 + $0x118] sm:$0xff]
        %v495 = vld [vmem:[%s433 + $0x120] sm:$0xff]
        %v496 = vld [vmem:[%s433 + $0x128] sm:$0xff]
        %v497 = vld [vmem:[%s433 + $0x130] sm:$0xff]
        %v498 = vld [vmem:[%s433 + $0x138] sm:$0xff]
        %v499 = vld [vmem:[%s433 + $0x140] sm:$0xff]
        %v500 = vld [vmem:[%s433 + $0x148] sm:$0xff]
        %v501 = vld [vmem:[%s433 + $0x150] sm:$0xff]
        %v502 = vld [vmem:[%s433 + $0x158] sm:$0xff]
        %v503 = vld [vmem:[%s433 + $0x160] sm:$0xff]
        %v504 = vld [vmem:[%s433 + $0x168] sm:$0xff]
        %v505 = vld [vmem:[%s433 + $0x170] sm:$0xff]
        %v506 = vld [vmem:[%s433 + $0x178] sm:$0xff]
        %v507 = vld [vmem:[%s433 + $0x180] sm:$0xff]
        %v508 = vld [vmem:[%s433 + $0x188] sm:$0xff]
        %v509 = vld [vmem:[%s433 + $0x190] sm:$0xff]
        %v510 = vld [vmem:[%s433 + $0x198] sm:$0xff]
        %v511 = vld [vmem:[%s433 + $0x1a0] sm:$0xff]
        %v512 = vld [vmem:[%s433 + $0x1a8] sm:$0xff]
        %v513 = vld [vmem:[%s433 + $0x1b0] sm:$0xff]
        %v514 = vld [vmem:[%s433 + $0x1b8] sm:$0xff]
        %v515 = vld [vmem:[%s433 + $0x1c0] sm:$0xff]
        %v516 = vld [vmem:[%s433 + $0x1c8] sm:$0xff]
        %v517 = vld [vmem:[%s433 + $0x1d0] sm:$0xff]
        %v518 = vld [vmem:[%s433 + $0x1d8] sm:$0xff]
        %v519 = vld [vmem:[%s433 + $0x1e0] sm:$0xff]
        %v520 = vld [vmem:[%s433 + $0x1e8] sm:$0xff]
        %v521 = vld [vmem:[%s433 + $0x1f0] sm:$0xff]
        %v522 = vld [vmem:[%s433 + $0x1f8] sm:$0xff]
        %v523 = vld [vmem:[%s2] sm:$0xff]
        %v524 = vld [vmem:[%s2 + $0x8] sm:$0xff]
        %526 = vset.pattern.permute.xlu0 0
        %527 = vperm.xlu0 %526, %v523
        %v528 = vpop.permute.xlu0 %527
        %531 = vset.pattern.permute.xlu0 0
        %532 = vperm.xlu0 %531, %v524
        %v533 = vpop.permute.xlu0 %532
        %v539 = vunpack.c.l.b16 %v455
        %v540 = vunpack.c.h.b16 %v455
        %v541 = vunpack.c.l.b16 %v456
        %v542 = vunpack.c.h.b16 %v456
        %v543 = vunpack.c.l.b16 %v457
        %v544 = vunpack.c.h.b16 %v457
        %v545 = vunpack.c.l.b16 %v458
        %v546 = vunpack.c.h.b16 %v458
        %v547 = vpack.c.b16 %v543, %v539
        %v548 = vpack.c.b16 %v544, %v540
        %v549 = vpack.c.b16 %v545, %v541
        %v550 = vpack.c.b16 %v546, %v542
        %v619 = vunpack.c.l.b16 %v459
        %v620 = vunpack.c.h.b16 %v459
        %v621 = vunpack.c.l.b16 %v460
        %v622 = vunpack.c.h.b16 %v460
        %v623 = vunpack.c.l.b16 %v461
        %v624 = vunpack.c.h.b16 %v461
        %v625 = vunpack.c.l.b16 %v462
        %v626 = vunpack.c.h.b16 %v462
        %v627 = vunpack.c.l.b16 %v463
        %v628 = vunpack.c.h.b16 %v463
        %v629 = vunpack.c.l.b16 %v464
        %v630 = vunpack.c.h.b16 %v464
        %v631 = vunpack.c.l.b16 %v465
        %v632 = vunpack.c.h.b16 %v465
        %v633 = vunpack.c.l.b16 %v466
        %v634 = vunpack.c.h.b16 %v466
        %v635 = vunpack.c.l.b16 %v467
        %v636 = vunpack.c.h.b16 %v467
        %v637 = vunpack.c.l.b16 %v468
        %v638 = vunpack.c.h.b16 %v468
        %v639 = vunpack.c.l.b16 %v469
        %v640 = vunpack.c.h.b16 %v469
        %v641 = vunpack.c.l.b16 %v470
        %v642 = vunpack.c.h.b16 %v470
        %v643 = vunpack.c.l.b16 %v471
        %v644 = vunpack.c.h.b16 %v471
        %v645 = vunpack.c.l.b16 %v472
        %v646 = vunpack.c.h.b16 %v472
        %v647 = vunpack.c.l.b16 %v473
        %v648 = vunpack.c.h.b16 %v473
        %v649 = vunpack.c.l.b16 %v474
        %v650 = vunpack.c.h.b16 %v474
        %v651 = vunpack.c.l.b16 %v475
        %v652 = vunpack.c.h.b16 %v475
        %v653 = vunpack.c.l.b16 %v476
        %v654 = vunpack.c.h.b16 %v476
        %v655 = vunpack.c.l.b16 %v477
        %v656 = vunpack.c.h.b16 %v477
        %v657 = vunpack.c.l.b16 %v478
        %v658 = vunpack.c.h.b16 %v478
        %v659 = vunpack.c.l.b16 %v479
        %v660 = vunpack.c.h.b16 %v479
        %v661 = vunpack.c.l.b16 %v480
        %v662 = vunpack.c.h.b16 %v480
        %v663 = vunpack.c.l.b16 %v481
        %v664 = vunpack.c.h.b16 %v481
        %v665 = vunpack.c.l.b16 %v482
        %v666 = vunpack.c.h.b16 %v482
        %v667 = vunpack.c.l.b16 %v483
        %v668 = vunpack.c.h.b16 %v483
        %v669 = vunpack.c.l.b16 %v484
        %v670 = vunpack.c.h.b16 %v484
        %v671 = vunpack.c.l.b16 %v485
        %v672 = vunpack.c.h.b16 %v485
        %v673 = vunpack.c.l.b16 %v486
        %v674 = vunpack.c.h.b16 %v486
        %v675 = vunpack.c.l.b16 %v487
        %v676 = vunpack.c.h.b16 %v487
        %v677 = vunpack.c.l.b16 %v488
        %v678 = vunpack.c.h.b16 %v488
        %v679 = vunpack.c.l.b16 %v489
        %v680 = vunpack.c.h.b16 %v489
        %v681 = vunpack.c.l.b16 %v490
        %v682 = vunpack.c.h.b16 %v490
        %v683 = vunpack.c.l.b16 %v491
        %v684 = vunpack.c.h.b16 %v491
        %v685 = vunpack.c.l.b16 %v492
        %v686 = vunpack.c.h.b16 %v492
        %v687 = vunpack.c.l.b16 %v493
        %v688 = vunpack.c.h.b16 %v493
        %v689 = vunpack.c.l.b16 %v494
        %v690 = vunpack.c.h.b16 %v494
        %v691 = vunpack.c.l.b16 %v495
        %v692 = vunpack.c.h.b16 %v495
        %v693 = vunpack.c.l.b16 %v496
        %v694 = vunpack.c.h.b16 %v496
        %v695 = vunpack.c.l.b16 %v497
        %v696 = vunpack.c.h.b16 %v497
        %v697 = vunpack.c.l.b16 %v498
        %v698 = vunpack.c.h.b16 %v498
        %v699 = vunpack.c.l.b16 %v499
        %v700 = vunpack.c.h.b16 %v499
        %v701 = vunpack.c.l.b16 %v500
        %v702 = vunpack.c.h.b16 %v500
        %v703 = vunpack.c.l.b16 %v501
        %v704 = vunpack.c.h.b16 %v501
        %v705 = vunpack.c.l.b16 %v502
        %v706 = vunpack.c.h.b16 %v502
        %v707 = vunpack.c.l.b16 %v503
        %v708 = vunpack.c.h.b16 %v503
        %v709 = vunpack.c.l.b16 %v504
        %v710 = vunpack.c.h.b16 %v504
        %v711 = vunpack.c.l.b16 %v505
        %v712 = vunpack.c.h.b16 %v505
        %v713 = vunpack.c.l.b16 %v506
        %v714 = vunpack.c.h.b16 %v506
        %v715 = vunpack.c.l.b16 %v507
        %v716 = vunpack.c.h.b16 %v507
        %v717 = vunpack.c.l.b16 %v508
        %v718 = vunpack.c.h.b16 %v508
        %v719 = vunpack.c.l.b16 %v509
        %v720 = vunpack.c.h.b16 %v509
        %v721 = vunpack.c.l.b16 %v510
        %v722 = vunpack.c.h.b16 %v510
        %v723 = vunpack.c.l.b16 %v511
        %v724 = vunpack.c.h.b16 %v511
        %v725 = vunpack.c.l.b16 %v512
        %v726 = vunpack.c.h.b16 %v512
        %v727 = vunpack.c.l.b16 %v513
        %v728 = vunpack.c.h.b16 %v513
        %v729 = vunpack.c.l.b16 %v514
        %v730 = vunpack.c.h.b16 %v514
        %v731 = vunpack.c.l.b16 %v515
        %v732 = vunpack.c.h.b16 %v515
        %v733 = vunpack.c.l.b16 %v516
        %v734 = vunpack.c.h.b16 %v516
        %v735 = vunpack.c.l.b16 %v517
        %v736 = vunpack.c.h.b16 %v517
        %v737 = vunpack.c.l.b16 %v518
        %v738 = vunpack.c.h.b16 %v518
        %v739 = vunpack.c.l.b16 %v519
        %v740 = vunpack.c.h.b16 %v519
        %v741 = vunpack.c.l.b16 %v520
        %v742 = vunpack.c.h.b16 %v520
        %v743 = vunpack.c.l.b16 %v521
        %v744 = vunpack.c.h.b16 %v521
        %v745 = vunpack.c.l.b16 %v522
        %v746 = vunpack.c.h.b16 %v522
        %v747 = vpack.c.b16 %v621, %v619
        %v748 = vpack.c.b16 %v622, %v620
        %v749 = vpack.c.b16 %v625, %v623
        %v750 = vpack.c.b16 %v626, %v624
        %v751 = vpack.c.b16 %v629, %v627
        %v752 = vpack.c.b16 %v630, %v628
        %v753 = vpack.c.b16 %v633, %v631
        %v754 = vpack.c.b16 %v634, %v632
        %v755 = vpack.c.b16 %v637, %v635
        %v756 = vpack.c.b16 %v638, %v636
        %v757 = vpack.c.b16 %v641, %v639
        %v758 = vpack.c.b16 %v642, %v640
        %v759 = vpack.c.b16 %v645, %v643
        %v760 = vpack.c.b16 %v646, %v644
        %v761 = vpack.c.b16 %v649, %v647
        %v762 = vpack.c.b16 %v650, %v648
        %v763 = vpack.c.b16 %v653, %v651
        %v764 = vpack.c.b16 %v654, %v652
        %v765 = vpack.c.b16 %v657, %v655
        %v766 = vpack.c.b16 %v658, %v656
        %v767 = vpack.c.b16 %v661, %v659
        %v768 = vpack.c.b16 %v662, %v660
        %v769 = vpack.c.b16 %v665, %v663
        %v770 = vpack.c.b16 %v666, %v664
        %v771 = vpack.c.b16 %v669, %v667
        %v772 = vpack.c.b16 %v670, %v668
        %v773 = vpack.c.b16 %v673, %v671
        %v774 = vpack.c.b16 %v674, %v672
        %v775 = vpack.c.b16 %v677, %v675
        %v776 = vpack.c.b16 %v678, %v676
        %v777 = vpack.c.b16 %v681, %v679
        %v778 = vpack.c.b16 %v682, %v680
        %v779 = vpack.c.b16 %v685, %v683
        %v780 = vpack.c.b16 %v686, %v684
        %v781 = vpack.c.b16 %v689, %v687
        %v782 = vpack.c.b16 %v690, %v688
        %v783 = vpack.c.b16 %v693, %v691
        %v784 = vpack.c.b16 %v694, %v692
        %v785 = vpack.c.b16 %v697, %v695
        %v786 = vpack.c.b16 %v698, %v696
        %v787 = vpack.c.b16 %v701, %v699
        %v788 = vpack.c.b16 %v702, %v700
        %v789 = vpack.c.b16 %v705, %v703
        %v790 = vpack.c.b16 %v706, %v704
        %v791 = vpack.c.b16 %v709, %v707
        %v792 = vpack.c.b16 %v710, %v708
        %v793 = vpack.c.b16 %v713, %v711
        %v794 = vpack.c.b16 %v714, %v712
        %v795 = vpack.c.b16 %v717, %v715
        %v796 = vpack.c.b16 %v718, %v716
        %v797 = vpack.c.b16 %v721, %v719
        %v798 = vpack.c.b16 %v722, %v720
        %v799 = vpack.c.b16 %v725, %v723
        %v800 = vpack.c.b16 %v726, %v724
        %v801 = vpack.c.b16 %v729, %v727
        %v802 = vpack.c.b16 %v730, %v728
        %v803 = vpack.c.b16 %v733, %v731
        %v804 = vpack.c.b16 %v734, %v732
        %v805 = vpack.c.b16 %v737, %v735
        %v806 = vpack.c.b16 %v738, %v736
        %v807 = vpack.c.b16 %v741, %v739
        %v808 = vpack.c.b16 %v742, %v740
        %v809 = vpack.c.b16 %v745, %v743
        %v810 = vpack.c.b16 %v746, %v744
        %875 = vmatprep.subr.bf16.mxu0 %v762
        %876 = vmatpush1.bf16.msra.mxu0 %v761
        %877 = vmatprep.subr.bf16.mxu0 %v760
        %878 = vmatpush1.bf16.msra.mxu0 %v759
        %879 = vmatprep.subr.bf16.mxu0 %v758
        %880 = vmatpush1.bf16.msra.mxu0 %v757
        %881 = vmatprep.subr.bf16.mxu0 %v756
        %882 = vmatpush1.bf16.msra.mxu0 %v755
        %883 = vmatprep.subr.bf16.mxu0 %v754
        %884 = vmatpush1.bf16.msra.mxu0 %v753
        %885 = vmatprep.subr.bf16.mxu0 %v752
        %886 = vmatpush1.bf16.msra.mxu0 %v751
        %887 = vmatprep.subr.bf16.mxu0 %v750
        %888 = vmatpush1.bf16.msra.mxu0 %v749
        %889 = vmatprep.subr.bf16.mxu0 %v748
        %890 = vmatpush1.bf16.msra.mxu0 %v747
        %891 = vmatprep.subr.bf16.mxu0 %v778
        %892 = vmatpush2.bf16.msra.mxu0 %v777
        %893 = vmatprep.subr.bf16.mxu0 %v776
        %894 = vmatpush2.bf16.msra.mxu0 %v775
        %895 = vmatprep.subr.bf16.mxu0 %v774
        %896 = vmatpush2.bf16.msra.mxu0 %v773
        %897 = vmatprep.subr.bf16.mxu0 %v772
        %898 = vmatpush2.bf16.msra.mxu0 %v771
        %899 = vmatprep.subr.bf16.mxu0 %v770
        %900 = vmatpush2.bf16.msra.mxu0 %v769
        %901 = vmatprep.subr.bf16.mxu0 %v768
        %902 = vmatpush2.bf16.msra.mxu0 %v767
        %903 = vmatprep.subr.bf16.mxu0 %v766
        %904 = vmatpush2.bf16.msra.mxu0 %v765
        %905 = vmatprep.subr.bf16.mxu0 %v764
        %906 = vmatpush2.bf16.msra.mxu0 %v763
        %907 = vmatprep.mubr.bf16.mxu0 %v548
        %908 = vmatmul.mubr.bf16.gmra.mxu0 %v547
        %v909 = vpop.f32.mrf.mxu0
        %v910 = vadd.f32 %v528, %v909
        %v911 = vpop.f32.mrf.mxu0
        %v912 = vadd.f32 %v528, %v911
        %v913 = vpop.f32.mrf.mxu0
        %v914 = vadd.f32 %v533, %v913
        %v915 = vpop.f32.mrf.mxu0
        %v916 = vadd.f32 %v533, %v915
        %917 = vdwg.mxu0
        %918 = vmatprep.subr.bf16.mxu0 %v794
        %919 = vmatpush1.bf16.msra.mxu0 %v793
        %920 = vmatprep.subr.bf16.mxu0 %v792
        %921 = vmatpush1.bf16.msra.mxu0 %v791
        %922 = vmatprep.subr.bf16.mxu0 %v790
        %923 = vmatpush1.bf16.msra.mxu0 %v789
        %924 = vmatprep.subr.bf16.mxu0 %v788
        %925 = vmatpush1.bf16.msra.mxu0 %v787
        %926 = vmatprep.subr.bf16.mxu0 %v786
        %927 = vmatpush1.bf16.msra.mxu0 %v785
        %928 = vmatprep.subr.bf16.mxu0 %v784
        %929 = vmatpush1.bf16.msra.mxu0 %v783
        %930 = vmatprep.subr.bf16.mxu0 %v782
        %931 = vmatpush1.bf16.msra.mxu0 %v781
        %932 = vmatprep.subr.bf16.mxu0 %v780
        %933 = vmatpush1.bf16.msra.mxu0 %v779
        %934 = vmatprep.subr.bf16.mxu0 %v810
        %935 = vmatpush2.bf16.msra.mxu0 %v809
        %936 = vmatprep.subr.bf16.mxu0 %v808
        %937 = vmatpush2.bf16.msra.mxu0 %v807
        %938 = vmatprep.subr.bf16.mxu0 %v806
        %939 = vmatpush2.bf16.msra.mxu0 %v805
        %940 = vmatprep.subr.bf16.mxu0 %v804
        %941 = vmatpush2.bf16.msra.mxu0 %v803
        %942 = vmatprep.subr.bf16.mxu0 %v802
        %943 = vmatpush2.bf16.msra.mxu0 %v801
        %944 = vmatprep.subr.bf16.mxu0 %v800
        %945 = vmatpush2.bf16.msra.mxu0 %v799
        %946 = vmatprep.subr.bf16.mxu0 %v798
        %947 = vmatpush2.bf16.msra.mxu0 %v797
        %948 = vmatprep.subr.bf16.mxu0 %v796
        %949 = vmatpush2.bf16.msra.mxu0 %v795
        %950 = vmatprep.mubr.bf16.mxu0 %v550
        %951 = vmatmul.mubr.bf16.gmra.mxu0 %v549
        %v952 = vpop.f32.mrf.mxu0
        %v953 = vadd.f32 %v910, %v952
        %v954 = vpop.f32.mrf.mxu0
        %v955 = vadd.f32 %v912, %v954
        %v956 = vpop.f32.mrf.mxu0
        %v957 = vadd.f32 %v914, %v956
        %v958 = vpop.f32.mrf.mxu0
        %v959 = vadd.f32 %v916, %v958
        %960 = vdwg.mxu0
        %v961 = vmax.f32 %v953, 0.0
        %v962 = vmax.f32 %v955, 0.0
        %v963 = vmax.f32 %v957, 0.0
        %v964 = vmax.f32 %v959, 0.0
        %965 = vst [vmem:[%s452] sm:$0xff] %v961
        %966 = vst [vmem:[%s452 + $0x8] sm:$0xff] %v962
        %967 = vst [vmem:[%s452 + $0x10] sm:$0xff] %v963
        %968 = vst [vmem:[%s452 + $0x18] sm:$0xff] %v964
        %s969 = sand.u32 %s90, 1
        %s970 = sand.u32 %s90, 1
        %s971 = smul.addr %s970, 32
        %s972 = scalar_lea.vmem [#allocation3], %s971
        // Predicated region
        $region71: #{generator_forward.7} parent=65 // pred_check
          %p973 = pneg %p100
        $region72: #{generator_forward.7} parent=65 // pred_check_branch
          %975 = sbr.rel (%p973) target = $region74
        $region73: #{generator_forward.7} parent=65 // pred_region
          %s976 = smul.u32 2, %s14
          %s977 = smul.addr %s976, 8
          %s978 = scalar_lea.vmem %s3, %s977
          // Predicated region
          $region75: #{generator_forward.7} parent=73 // pred_check
            _
          $region76: #{generator_forward.7} parent=73 // pred_check_branch
            %980 = sbr.rel (0) target = $region78
          $region77: #{generator_forward.7} parent=73 // pred_region
            // Predicated region
            $region79: #{generator_forward.7} parent=77 // pred_check
              _
            $region80: #{generator_forward.7} parent=77 // pred_check_branch
              %982 = sbr.rel (0) target = $region82
            $region81: #{generator_forward.7} parent=77 // pred_region
              loop: start=0, step=1, limit=1
              $region83: #{generator_forward.7} parent=81 // loop_pre_header
                _
              $region84: #{generator_forward.7} parent=81 // loop_header
                %s984 = sphi 0, %s988
                %p985 = scmp.ge.s32.totalorder %s984, 1
                %s989 = sphi %s972, %s972
                %s990 = sphi %s978, %s978
              $region85: #{generator_forward.7} parent=81 // loop_header_branch
                %987 = sbr.rel (%p985) target = $region89
              $region86: #{generator_forward.7} parent=81 // loop_body
                %v991 = vld [vmem:[%s989] sm:$0xff]
                %992 = vst [vmem:[%s990] sm:$0xff] %v991
                %v993 = vld [vmem:[%s989 + $0x8] sm:$0xff]
                %994 = vst [vmem:[%s990 + $0x8] sm:$0xff] %v993
                %v995 = vld [vmem:[%s989 + $0x10] sm:$0xff]
                %996 = vst [vmem:[%s990 + $0x20] sm:$0xff] %v995
                %v997 = vld [vmem:[%s989 + $0x18] sm:$0xff]
                %998 = vst [vmem:[%s990 + $0x28] sm:$0xff] %v997
              $region87: #{generator_forward.7} parent=81 // loop_footer
                %s988 = sadd.s32 1, %s984
              $region88: #{generator_forward.7} parent=81 // loop_footer_branch
                %983 = sbr.rel target = $region84
              $region89: #{generator_forward.7} parent=81 // loop_exit
                _
            $region82: #{generator_forward.7} parent=77 // pred_fallthru
              _
            // Predicated region
            $region90: #{generator_forward.7} parent=77 // pred_check
              _
            $region91: #{generator_forward.7} parent=77 // pred_check_branch
              %1000 = sbr.rel target = $region93
            $region92: #{generator_forward.7} parent=77 // pred_region
              _
            $region93: #{generator_forward.7} parent=77 // pred_fallthru
              _
          $region78: #{generator_forward.7} parent=73 // pred_fallthru
            _
          %1001 = vnop
        $region74: #{generator_forward.7} parent=65 // pred_fallthru
          _
      $region66: #{generator_forward.7} parent=5 // pred_fallthru
        _
      %p1002 = scmp.le.s32.totalorder 2, %s9
      // Predicated region
      $region94: #{generator_forward.7} parent=5 // pred_check
        %p1003 = pneg %p1002
      $region95: #{generator_forward.7} parent=5 // pred_check_branch
        %1005 = sbr.rel (%p1003) target = $region97
      $region96: #{generator_forward.7} parent=5 // pred_region
        %s1006 = ssub.s32 %s9, 2
        // Predicated region
        $region98: #{generator_forward.7} parent=96 // pred_check
          %p1007 = pneg %p106
        $region99: #{generator_forward.7} parent=96 // pred_check_branch
          %1009 = sbr.rel (%p1007) target = $region101
        $region100: #{generator_forward.7} parent=96 // pred_region
          %s1010 = sand.u32 %s91, 1
          %s1011 = sand.u32 %s91, 1
          %s1012 = smul.addr %s1011, 32
          %s1013 = scalar_lea.vmem [#allocation3], %s1012
        $region101: #{generator_forward.7} parent=96 // pred_fallthru
          _
      $region97: #{generator_forward.7} parent=5 // pred_fallthru
        _
    $region6: #{generator_forward.7} parent=1 // loop_footer
      %s13 = sadd.s32 1, %s9
    $region7: #{generator_forward.7} parent=1 // loop_footer_branch
      %8 = sbr.rel target = $region3
    $region8: #{generator_forward.7} parent=1 // loop_exit
      _

// kernel: generator_forward.8
$region0: #{generator_forward.8}
  #allocation0 [shape = 'u32[]', space=smem, size = 0x4, offset = 0x4, fixed_abs, tag = 'smem constant byte address 0x4 - core index']
  #allocation1 [shape = 'u32[144,128]{1,0:T(1,128)}', space=vmem, size = 0x12000, scoped, tag = 'internal scratch']
  %s0 = inlined_call_operand.vmem [shape: bf16[8,256], index: 0, kind: input, shape index: {}]
  %s1 = inlined_call_operand.vmem [shape: bf16[256,2048], index: 1, kind: input, shape index: {}]
  %s2 = inlined_call_operand.vmem [shape: f32[8,1], index: 2, kind: input, shape index: {}]
  %s3 = inlined_call_operand.vmem [shape: f32[8,2048], index: 3, kind: output, shape index: {}]
  %s4 = sld [smem:[#allocation0]]
  $region68: #{generator_forward.8} parent=0
    _
  %s6 = ssub.s32 1, %s4
  %s7 = scalar_select 0, %s6, %s4
  $region1: #{generator_forward.8} parent=0
    #allocation2 [shape = 'u8[1048576]{0}', space=vmem, size = 0x100000, scoped, tag = 'input window, operand 1']
    loop: start=0, step=1, limit=4
    $region2: #{generator_forward.8} parent=1 // loop_pre_header
      _
    $region3: #{generator_forward.8} parent=1 // loop_header
      %s9 = sphi 0, %s13
      %p10 = scmp.ge.s32.totalorder %s9, 4
      %s17 = sphi 0, %s17
      %s19 = sphi 0, %s17
      %s20 = sphi 0, %s19
      %s34 = sphi 0, %s20
      %s40 = sphi 0, %s42
      %s43 = sphi 0, %s40
      %s44 = sphi 0, %s43
      %s60 = sphi 0, %s44
      %s64 = sphi 0, %s64
      %s66 = sphi 0, %s64
      %s67 = sphi 0, %s66
      %s81 = sphi 0, %s67
      %s87 = sphi 0, %s89
      %s90 = sphi 0, %s87
      %s91 = sphi 0, %s90
      %s107 = sphi 0, %s91
    $region4: #{generator_forward.8} parent=1 // loop_header_branch
      %12 = sbr.rel (%p10) target = $region8
    $region5: #{generator_forward.8} parent=1 // loop_body
      %s14 = ssub.s32 %s9, 1
      %s15 = ssub.s32 %s9, 2
      %s16 = sadd.s32 %s9, 1
      %s18 = sadd.s32 %s17, 1
      %p21 = scmp.eq.s32.totalorder %s9, 1
      %p22 = scmp.ne.s32.totalorder %s17, %s19
      %p23 = scmp.eq.s32.totalorder %s9, 0
      %p24 = por %p22, %p23
      %p25 = scmp.ne.s32.totalorder %s17, %s19
      %p26 = scmp.eq.s32.totalorder %s14, 1
      %p27 = por %p25, %p26
      %p28 = scmp.ne.s32.totalorder %s19, %s20
      %p29 = scmp.eq.s32.totalorder %s14, 0
      %p30 = por %p28, %p29
      %p31 = scmp.ne.s32.totalorder %s19, %s20
      %p32 = scmp.eq.s32.totalorder %s15, 1
      %p33 = por %p31, %p32
      %p35 = scmp.ne.s32.totalorder %s20, %s34
      %p36 = scmp.eq.s32.totalorder %s15, 0
      %p37 = por %p35, %p36
      %s38 = ssub.s32 %s9, %s16
      %p39 = scmp.eq.s32.totalorder %s38, 0
      %s41 = sadd.s32 %s40, 1
      %s42 = scalar_select %p39, %s40, %s41
      %p45 = pneg %p39
      %p46 = scmp.eq.s32.totalorder %s9, 1
      %p47 = por %p45, %p46
      %p48 = scmp.ne.s32.totalorder %s40, %s43
      %p49 = scmp.eq.s32.totalorder %s9, 0
      %p50 = por %p48, %p49
      %p51 = scmp.ne.s32.totalorder %s40, %s43
      %p52 = scmp.eq.s32.totalorder %s14, 1
      %p53 = por %p51, %p52
      %p54 = scmp.ne.s32.totalorder %s43, %s44
      %p55 = scmp.eq.s32.totalorder %s14, 0
      %p56 = por %p54, %p55
      %p57 = scmp.ne.s32.totalorder %s43, %s44
      %p58 = scmp.eq.s32.totalorder %s15, 1
      %p59 = por %p57, %p58
      %p61 = scmp.ne.s32.totalorder %s44, %s60
      %p62 = scmp.eq.s32.totalorder %s15, 0
      %p63 = por %p61, %p62
      %s65 = sadd.s32 %s64, 1
      %p68 = scmp.eq.s32.totalorder %s9, 1
      %p69 = scmp.ne.s32.totalorder %s64, %s66
      %p70 = scmp.eq.s32.totalorder %s9, 0
      %p71 = por %p69, %p70
      %p72 = scmp.ne.s32.totalorder %s64, %s66
      %p73 = scmp.eq.s32.totalorder %s14, 1
      %p74 = por %p72, %p73
      %p75 = scmp.ne.s32.totalorder %s66, %s67
      %p76 = scmp.eq.s32.totalorder %s14, 0
      %p77 = por %p75, %p76
      %p78 = scmp.ne.s32.totalorder %s66, %s67
      %p79 = scmp.eq.s32.totalorder %s15, 1
      %p80 = por %p78, %p79
      %p82 = scmp.ne.s32.totalorder %s67, %s81
      %p83 = scmp.eq.s32.totalorder %s15, 0
      %p84 = por %p82, %p83
      %s85 = ssub.s32 %s9, %s16
      %p86 = scmp.eq.s32.totalorder %s85, 0
      %s88 = sadd.s32 %s87, 1
      %s89 = scalar_select %p86, %s87, %s88
      %p92 = pneg %p86
      %p93 = scmp.eq.s32.totalorder %s9, 1
      %p94 = por %p92, %p93
      %p95 = scmp.ne.s32.totalorder %s87, %s90
      %p96 = scmp.eq.s32.totalorder %s9, 0
      %p97 = por %p95, %p96
      %p98 = scmp.ne.s32.totalorder %s87, %s90
      %p99 = scmp.eq.s32.totalorder %s14, 1
      %p100 = por %p98, %p99
      %p101 = scmp.ne.s32.totalorder %s90, %s91
      %p102 = scmp.eq.s32.totalorder %s14, 0
      %p103 = por %p101, %p102
      %p104 = scmp.ne.s32.totalorder %s90, %s91
      %p105 = scmp.eq.s32.totalorder %s15, 1
      %p106 = por %p104, %p105
      %p108 = scmp.ne.s32.totalorder %s91, %s107
      %p109 = scmp.eq.s32.totalorder %s15, 0
      %p110 = por %p108, %p109
      %p111 = scmp.le.s32.totalorder 1, %s9
      %p112 = scmp.lt.s32.totalorder %s9, 3
      %p113 = pnand %p111, %p112
      %p114 = pneg %p113
      // Predicated region
      $region9: #{generator_forward.8} parent=5 // pred_check
        _
      $region10: #{generator_forward.8} parent=5 // pred_check_branch
        %116 = sbr.rel (%p113) target = $region12
      $region11: #{generator_forward.8} parent=5 // pred_region
        %s117 = ssub.s32 %s9, 1
        // Predicated region
        $region13: #{generator_forward.8} parent=11 // pred_check
          %p118 = pneg %p30
        $region14: #{generator_forward.8} parent=11 // pred_check_branch
          %120 = sbr.rel (%p118) target = $region16
        $region15: #{generator_forward.8} parent=11 // pred_region
          _
        $region16: #{generator_forward.8} parent=11 // pred_fallthru
          _
        // Predicated region
        $region17: #{generator_forward.8} parent=11 // pred_check
          %p121 = pneg %p77
        $region18: #{generator_forward.8} parent=11 // pred_check_branch
          %123 = sbr.rel (%p121) target = $region20
        $region19: #{generator_forward.8} parent=11 // pred_region
          _
        $region20: #{generator_forward.8} parent=11 // pred_fallthru
          _
      $region12: #{generator_forward.8} parent=5 // pred_fallthru
        _
      %p124 = scmp.lt.s32.totalorder %s9, 2
      // Predicated region
      $region21: #{generator_forward.8} parent=5 // pred_check
        %p125 = pneg %p124
      $region22: #{generator_forward.8} parent=5 // pred_check_branch
        %127 = sbr.rel (%p125) target = $region24
      $region23: #{generator_forward.8} parent=5 // pred_region
        // Predicated region
        $region25: #{generator_forward.8} parent=23 // pred_check
          %p128 = pneg %p50
        $region26: #{generator_forward.8} parent=23 // pred_check_branch
          %130 = sbr.rel (%p128) target = $region28
        $region27: #{generator_forward.8} parent=23 // pred_region
          %s131 = sand.u32 %s40, 1
          %s132 = sand.u32 %s40, 1
          %s133 = smul.addr %s132, 1024
          %s134 = scalar_lea.vmem [#allocation2], %s133
          %s135 = smul.u32 8, %s9
          %s136 = smul.addr %s135, 4
          %s137 = scalar_lea.vmem %s1, %s136
          // Predicated region
          $region29: #{generator_forward.8} parent=27 // pred_check
            _
          $region30: #{generator_forward.8} parent=27 // pred_check_branch
            %139 = sbr.rel (0) target = $region32
          $region31: #{generator_forward.8} parent=27 // pred_region
            // Predicated region
            $region33: #{generator_forward.8} parent=31 // pred_check
              _
            $region34: #{generator_forward.8} parent=31 // pred_check_branch
              %141 = sbr.rel (0) target = $region36
            $region35: #{generator_forward.8} parent=31 // pred_region
              loop: start=0, step=1, limit=1
              $region37: #{generator_forward.8} parent=35 // loop_pre_header
                _
              $region38: #{generator_forward.8} parent=35 // loop_header
                %s143 = sphi 0, %s147
                %p144 = scmp.ge.s32.totalorder %s143, 1
                %s148 = sphi %s137, %s137
                %s149 = sphi %s134, %s134
              $region39: #{generator_forward.8} parent=35 // loop_header_branch
                %146 = sbr.rel (%p144) target = $region43
              $region40: #{generator_forward.8} parent=35 // loop_body
                %v150 = vld [vmem:[%s148] sm:$0xff]
                %151 = vst [vmem:[%s149] sm:$0xff] %v150
                %v152 = vld [vmem:[%s148 + $0x8] sm:$0xff]
                %153 = vst [vmem:[%s149 + $0x8] sm:$0xff] %v152
                %v154 = vld [vmem:[%s148 + $0x10] sm:$0xff]
                %155 = vst [vmem:[%s149 + $0x10] sm:$0xff] %v154
                %v156 = vld [vmem:[%s148 + $0x18] sm:$0xff]
                %157 = vst [vmem:[%s149 + $0x18] sm:$0xff] %v156
                %v158 = vld [vmem:[%s148 + $0x40] sm:$0xff]
                %159 = vst [vmem:[%s149 + $0x20] sm:$0xff] %v158
                %v160 = vld [vmem:[%s148 + $0x48] sm:$0xff]
                %161 = vst [vmem:[%s149 + $0x28] sm:$0xff] %v160
                %v162 = vld [vmem:[%s148 + $0x50] sm:$0xff]
                %163 = vst [vmem:[%s149 + $0x30] sm:$0xff] %v162
                %v164 = vld [vmem:[%s148 + $0x58] sm:$0xff]
                %165 = vst [vmem:[%s149 + $0x38] sm:$0xff] %v164
                %v166 = vld [vmem:[%s148 + $0x80] sm:$0xff]
                %167 = vst [vmem:[%s149 + $0x40] sm:$0xff] %v166
                %v168 = vld [vmem:[%s148 + $0x88] sm:$0xff]
                %169 = vst [vmem:[%s149 + $0x48] sm:$0xff] %v168
                %v170 = vld [vmem:[%s148 + $0x90] sm:$0xff]
                %171 = vst [vmem:[%s149 + $0x50] sm:$0xff] %v170
                %v172 = vld [vmem:[%s148 + $0x98] sm:$0xff]
                %173 = vst [vmem:[%s149 + $0x58] sm:$0xff] %v172
                %v174 = vld [vmem:[%s148 + $0xc0] sm:$0xff]
                %175 = vst [vmem:[%s149 + $0x60] sm:$0xff] %v174
                %v176 = vld [vmem:[%s148 + $0xc8] sm:$0xff]
                %177 = vst [vmem:[%s149 + $0x68] sm:$0xff] %v176
                %v178 = vld [vmem:[%s148 + $0xd0] sm:$0xff]
                %179 = vst [vmem:[%s149 + $0x70] sm:$0xff] %v178
                %v180 = vld [vmem:[%s148 + $0xd8] sm:$0xff]
                %181 = vst [vmem:[%s149 + $0x78] sm:$0xff] %v180
                %v182 = vld [vmem:[%s148 + $0x100] sm:$0xff]
                %183 = vst [vmem:[%s149 + $0x80] sm:$0xff] %v182
                %v184 = vld [vmem:[%s148 + $0x108] sm:$0xff]
                %185 = vst [vmem:[%s149 + $0x88] sm:$0xff] %v184
                %v186 = vld [vmem:[%s148 + $0x110] sm:$0xff]
                %187 = vst [vmem:[%s149 + $0x90] sm:$0xff] %v186
                %v188 = vld [vmem:[%s148 + $0x118] sm:$0xff]
                %189 = vst [vmem:[%s149 + $0x98] sm:$0xff] %v188
                %v190 = vld [vmem:[%s148 + $0x140] sm:$0xff]
                %191 = vst [vmem:[%s149 + $0xa0] sm:$0xff] %v190
                %v192 = vld [vmem:[%s148 + $0x148] sm:$0xff]
                %193 = vst [vmem:[%s149 + $0xa8] sm:$0xff] %v192
                %v194 = vld [vmem:[%s148 + $0x150] sm:$0xff]
                %195 = vst [vmem:[%s149 + $0xb0] sm:$0xff] %v194
                %v196 = vld [vmem:[%s148 + $0x158] sm:$0xff]
                %197 = vst [vmem:[%s149 + $0xb8] sm:$0xff] %v196
                %v198 = vld [vmem:[%s148 + $0x180] sm:$0xff]
                %199 = vst [vmem:[%s149 + $0xc0] sm:$0xff] %v198
                %v200 = vld [vmem:[%s148 + $0x188] sm:$0xff]
                %201 = vst [vmem:[%s149 + $0xc8] sm:$0xff] %v200
                %v202 = vld [vmem:[%s148 + $0x190] sm:$0xff]
                %203 = vst [vmem:[%s149 + $0xd0] sm:$0xff] %v202
                %v204 = vld [vmem:[%s148 + $0x198] sm:$0xff]
                %205 = vst [vmem:[%s149 + $0xd8] sm:$0xff] %v204
                %v206 = vld [vmem:[%s148 + $0x1c0] sm:$0xff]
                %207 = vst [vmem:[%s149 + $0xe0] sm:$0xff] %v206
                %v208 = vld [vmem:[%s148 + $0x1c8] sm:$0xff]
                %209 = vst [vmem:[%s149 + $0xe8] sm:$0xff] %v208
                %v210 = vld [vmem:[%s148 + $0x1d0] sm:$0xff]
                %211 = vst [vmem:[%s149 + $0xf0] sm:$0xff] %v210
                %v212 = vld [vmem:[%s148 + $0x1d8] sm:$0xff]
                %213 = vst [vmem:[%s149 + $0xf8] sm:$0xff] %v212
                %v214 = vld [vmem:[%s148 + $0x200] sm:$0xff]
                %215 = vst [vmem:[%s149 + $0x100] sm:$0xff] %v214
                %v216 = vld [vmem:[%s148 + $0x208] sm:$0xff]
                %217 = vst [vmem:[%s149 + $0x108] sm:$0xff] %v216
                %v218 = vld [vmem:[%s148 + $0x210] sm:$0xff]
                %219 = vst [vmem:[%s149 + $0x110] sm:$0xff] %v218
                %v220 = vld [vmem:[%s148 + $0x218] sm:$0xff]
                %221 = vst [vmem:[%s149 + $0x118] sm:$0xff] %v220
                %v222 = vld [vmem:[%s148 + $0x240] sm:$0xff]
                %223 = vst [vmem:[%s149 + $0x120] sm:$0xff] %v222
                %v224 = vld [vmem:[%s148 + $0x248] sm:$0xff]
                %225 = vst [vmem:[%s149 + $0x128] sm:$0xff] %v224
                %v226 = vld [vmem:[%s148 + $0x250] sm:$0xff]
                %227 = vst [vmem:[%s149 + $0x130] sm:$0xff] %v226
                %v228 = vld [vmem:[%s148 + $0x258] sm:$0xff]
                %229 = vst [vmem:[%s149 + $0x138] sm:$0xff] %v228
                %v230 = vld [vmem:[%s148 + $0x280] sm:$0xff]
                %231 = vst [vmem:[%s149 + $0x140] sm:$0xff] %v230
                %v232 = vld [vmem:[%s148 + $0x288] sm:$0xff]
                %233 = vst [vmem:[%s149 + $0x148] sm:$0xff] %v232
                %v234 = vld [vmem:[%s148 + $0x290] sm:$0xff]
                %235 = vst [vmem:[%s149 + $0x150] sm:$0xff] %v234
                %v236 = vld [vmem:[%s148 + $0x298] sm:$0xff]
                %237 = vst [vmem:[%s149 + $0x158] sm:$0xff] %v236
                %v238 = vld [vmem:[%s148 + $0x2c0] sm:$0xff]
                %239 = vst [vmem:[%s149 + $0x160] sm:$0xff] %v238
                %v240 = vld [vmem:[%s148 + $0x2c8] sm:$0xff]
                %241 = vst [vmem:[%s149 + $0x168] sm:$0xff] %v240
                %v242 = vld [vmem:[%s148 + $0x2d0] sm:$0xff]
                %243 = vst [vmem:[%s149 + $0x170] sm:$0xff] %v242
                %v244 = vld [vmem:[%s148 + $0x2d8] sm:$0xff]
                %245 = vst [vmem:[%s149 + $0x178] sm:$0xff] %v244
                %v246 = vld [vmem:[%s148 + $0x300] sm:$0xff]
                %247 = vst [vmem:[%s149 + $0x180] sm:$0xff] %v246
                %v248 = vld [vmem:[%s148 + $0x308] sm:$0xff]
                %249 = vst [vmem:[%s149 + $0x188] sm:$0xff] %v248
                %v250 = vld [vmem:[%s148 + $0x310] sm:$0xff]
                %251 = vst [vmem:[%s149 + $0x190] sm:$0xff] %v250
                %v252 = vld [vmem:[%s148 + $0x318] sm:$0xff]
                %253 = vst [vmem:[%s149 + $0x198] sm:$0xff] %v252
                %v254 = vld [vmem:[%s148 + $0x340] sm:$0xff]
                %255 = vst [vmem:[%s149 + $0x1a0] sm:$0xff] %v254
                %v256 = vld [vmem:[%s148 + $0x348] sm:$0xff]
                %257 = vst [vmem:[%s149 + $0x1a8] sm:$0xff] %v256
                %v258 = vld [vmem:[%s148 + $0x350] sm:$0xff]
                %259 = vst [vmem:[%s149 + $0x1b0] sm:$0xff] %v258
                %v260 = vld [vmem:[%s148 + $0x358] sm:$0xff]
                %261 = vst [vmem:[%s149 + $0x1b8] sm:$0xff] %v260
                %v262 = vld [vmem:[%s148 + $0x380] sm:$0xff]
                %263 = vst [vmem:[%s149 + $0x1c0] sm:$0xff] %v262
                %v264 = vld [vmem:[%s148 + $0x388] sm:$0xff]
                %265 = vst [vmem:[%s149 + $0x1c8] sm:$0xff] %v264
                %v266 = vld [vmem:[%s148 + $0x390] sm:$0xff]
                %267 = vst [vmem:[%s149 + $0x1d0] sm:$0xff] %v266
                %v268 = vld [vmem:[%s148 + $0x398] sm:$0xff]
                %269 = vst [vmem:[%s149 + $0x1d8] sm:$0xff] %v268
                %v270 = vld [vmem:[%s148 + $0x3c0] sm:$0xff]
                %271 = vst [vmem:[%s149 + $0x1e0] sm:$0xff] %v270
                %v272 = vld [vmem:[%s148 + $0x3c8] sm:$0xff]
                %273 = vst [vmem:[%s149 + $0x1e8] sm:$0xff] %v272
                %v274 = vld [vmem:[%s148 + $0x3d0] sm:$0xff]
                %275 = vst [vmem:[%s149 + $0x1f0] sm:$0xff] %v274
                %v276 = vld [vmem:[%s148 + $0x3d8] sm:$0xff]
                %277 = vst [vmem:[%s149 + $0x1f8] sm:$0xff] %v276
                %v278 = vld [vmem:[%s148 + $0x400] sm:$0xff]
                %279 = vst [vmem:[%s149 + $0x200] sm:$0xff] %v278
                %v280 = vld [vmem:[%s148 + $0x408] sm:$0xff]
                %281 = vst [vmem:[%s149 + $0x208] sm:$0xff] %v280
                %v282 = vld [vmem:[%s148 + $0x410] sm:$0xff]
                %283 = vst [vmem:[%s149 + $0x210] sm:$0xff] %v282
                %v284 = vld [vmem:[%s148 + $0x418] sm:$0xff]
                %285 = vst [vmem:[%s149 + $0x218] sm:$0xff] %v284
                %v286 = vld [vmem:[%s148 + $0x440] sm:$0xff]
                %287 = vst [vmem:[%s149 + $0x220] sm:$0xff] %v286
                %v288 = vld [vmem:[%s148 + $0x448] sm:$0xff]
                %289 = vst [vmem:[%s149 + $0x228] sm:$0xff] %v288
                %v290 = vld [vmem:[%s148 + $0x450] sm:$0xff]
                %291 = vst [vmem:[%s149 + $0x230] sm:$0xff] %v290
                %v292 = vld [vmem:[%s148 + $0x458] sm:$0xff]
                %293 = vst [vmem:[%s149 + $0x238] sm:$0xff] %v292
                %v294 = vld [vmem:[%s148 + $0x480] sm:$0xff]
                %295 = vst [vmem:[%s149 + $0x240] sm:$0xff] %v294
                %v296 = vld [vmem:[%s148 + $0x488] sm:$0xff]
                %297 = vst [vmem:[%s149 + $0x248] sm:$0xff] %v296
                %v298 = vld [vmem:[%s148 + $0x490] sm:$0xff]
                %299 = vst [vmem:[%s149 + $0x250] sm:$0xff] %v298
                %v300 = vld [vmem:[%s148 + $0x498] sm:$0xff]
                %301 = vst [vmem:[%s149 + $0x258] sm:$0xff] %v300
                %v302 = vld [vmem:[%s148 + $0x4c0] sm:$0xff]
                %303 = vst [vmem:[%s149 + $0x260] sm:$0xff] %v302
                %v304 = vld [vmem:[%s148 + $0x4c8] sm:$0xff]
                %305 = vst [vmem:[%s149 + $0x268] sm:$0xff] %v304
                %v306 = vld [vmem:[%s148 + $0x4d0] sm:$0xff]
                %307 = vst [vmem:[%s149 + $0x270] sm:$0xff] %v306
                %v308 = vld [vmem:[%s148 + $0x4d8] sm:$0xff]
                %309 = vst [vmem:[%s149 + $0x278] sm:$0xff] %v308
                %v310 = vld [vmem:[%s148 + $0x500] sm:$0xff]
                %311 = vst [vmem:[%s149 + $0x280] sm:$0xff] %v310
                %v312 = vld [vmem:[%s148 + $0x508] sm:$0xff]
                %313 = vst [vmem:[%s149 + $0x288] sm:$0xff] %v312
                %v314 = vld [vmem:[%s148 + $0x510] sm:$0xff]
                %315 = vst [vmem:[%s149 + $0x290] sm:$0xff] %v314
                %v316 = vld [vmem:[%s148 + $0x518] sm:$0xff]
                %317 = vst [vmem:[%s149 + $0x298] sm:$0xff] %v316
                %v318 = vld [vmem:[%s148 + $0x540] sm:$0xff]
                %319 = vst [vmem:[%s149 + $0x2a0] sm:$0xff] %v318
                %v320 = vld [vmem:[%s148 + $0x548] sm:$0xff]
                %321 = vst [vmem:[%s149 + $0x2a8] sm:$0xff] %v320
                %v322 = vld [vmem:[%s148 + $0x550] sm:$0xff]
                %323 = vst [vmem:[%s149 + $0x2b0] sm:$0xff] %v322
                %v324 = vld [vmem:[%s148 + $0x558] sm:$0xff]
                %325 = vst [vmem:[%s149 + $0x2b8] sm:$0xff] %v324
                %v326 = vld [vmem:[%s148 + $0x580] sm:$0xff]
                %327 = vst [vmem:[%s149 + $0x2c0] sm:$0xff] %v326
                %v328 = vld [vmem:[%s148 + $0x588] sm:$0xff]
                %329 = vst [vmem:[%s149 + $0x2c8] sm:$0xff] %v328
                %v330 = vld [vmem:[%s148 + $0x590] sm:$0xff]
                %331 = vst [vmem:[%s149 + $0x2d0] sm:$0xff] %v330
                %v332 = vld [vmem:[%s148 + $0x598] sm:$0xff]
                %333 = vst [vmem:[%s149 + $0x2d8] sm:$0xff] %v332
                %v334 = vld [vmem:[%s148 + $0x5c0] sm:$0xff]
                %335 = vst [vmem:[%s149 + $0x2e0] sm:$0xff] %v334
                %v336 = vld [vmem:[%s148 + $0x5c8] sm:$0xff]
                %337 = vst [vmem:[%s149 + $0x2e8] sm:$0xff] %v336
                %v338 = vld [vmem:[%s148 + $0x5d0] sm:$0xff]
                %339 = vst [vmem:[%s149 + $0x2f0] sm:$0xff] %v338
                %v340 = vld [vmem:[%s148 + $0x5d8] sm:$0xff]
                %341 = vst [vmem:[%s149 + $0x2f8] sm:$0xff] %v340
                %v342 = vld [vmem:[%s148 + $0x600] sm:$0xff]
                %343 = vst [vmem:[%s149 + $0x300] sm:$0xff] %v342
                %v344 = vld [vmem:[%s148 + $0x608] sm:$0xff]
                %345 = vst [vmem:[%s149 + $0x308] sm:$0xff] %v344
                %v346 = vld [vmem:[%s148 + $0x610] sm:$0xff]
                %347 = vst [vmem:[%s149 + $0x310] sm:$0xff] %v346
                %v348 = vld [vmem:[%s148 + $0x618] sm:$0xff]
                %349 = vst [vmem:[%s149 + $0x318] sm:$0xff] %v348
                %v350 = vld [vmem:[%s148 + $0x640] sm:$0xff]
                %351 = vst [vmem:[%s149 + $0x320] sm:$0xff] %v350
                %v352 = vld [vmem:[%s148 + $0x648] sm:$0xff]
                %353 = vst [vmem:[%s149 + $0x328] sm:$0xff] %v352
                %v354 = vld [vmem:[%s148 + $0x650] sm:$0xff]
                %355 = vst [vmem:[%s149 + $0x330] sm:$0xff] %v354
                %v356 = vld [vmem:[%s148 + $0x658] sm:$0xff]
                %357 = vst [vmem:[%s149 + $0x338] sm:$0xff] %v356
                %v358 = vld [vmem:[%s148 + $0x680] sm:$0xff]
                %359 = vst [vmem:[%s149 + $0x340] sm:$0xff] %v358
                %v360 = vld [vmem:[%s148 + $0x688] sm:$0xff]
                %361 = vst [vmem:[%s149 + $0x348] sm:$0xff] %v360
                %v362 = vld [vmem:[%s148 + $0x690] sm:$0xff]
                %363 = vst [vmem:[%s149 + $0x350] sm:$0xff] %v362
                %v364 = vld [vmem:[%s148 + $0x698] sm:$0xff]
                %365 = vst [vmem:[%s149 + $0x358] sm:$0xff] %v364
                %v366 = vld [vmem:[%s148 + $0x6c0] sm:$0xff]
                %367 = vst [vmem:[%s149 + $0x360] sm:$0xff] %v366
                %v368 = vld [vmem:[%s148 + $0x6c8] sm:$0xff]
                %369 = vst [vmem:[%s149 + $0x368] sm:$0xff] %v368
                %v370 = vld [vmem:[%s148 + $0x6d0] sm:$0xff]
                %371 = vst [vmem:[%s149 + $0x370] sm:$0xff] %v370
                %v372 = vld [vmem:[%s148 + $0x6d8] sm:$0xff]
                %373 = vst [vmem:[%s149 + $0x378] sm:$0xff] %v372
                %v374 = vld [vmem:[%s148 + $0x700] sm:$0xff]
                %375 = vst [vmem:[%s149 + $0x380] sm:$0xff] %v374
                %v376 = vld [vmem:[%s148 + $0x708] sm:$0xff]
                %377 = vst [vmem:[%s149 + $0x388] sm:$0xff] %v376
                %v378 = vld [vmem:[%s148 + $0x710] sm:$0xff]
                %379 = vst [vmem:[%s149 + $0x390] sm:$0xff] %v378
                %v380 = vld [vmem:[%s148 + $0x718] sm:$0xff]
                %381 = vst [vmem:[%s149 + $0x398] sm:$0xff] %v380
                %v382 = vld [vmem:[%s148 + $0x740] sm:$0xff]
                %383 = vst [vmem:[%s149 + $0x3a0] sm:$0xff] %v382
                %v384 = vld [vmem:[%s148 + $0x748] sm:$0xff]
                %385 = vst [vmem:[%s149 + $0x3a8] sm:$0xff] %v384
                %v386 = vld [vmem:[%s148 + $0x750] sm:$0xff]
                %387 = vst [vmem:[%s149 + $0x3b0] sm:$0xff] %v386
                %v388 = vld [vmem:[%s148 + $0x758] sm:$0xff]
                %389 = vst [vmem:[%s149 + $0x3b8] sm:$0xff] %v388
                %v390 = vld [vmem:[%s148 + $0x780] sm:$0xff]
                %391 = vst [vmem:[%s149 + $0x3c0] sm:$0xff] %v390
                %v392 = vld [vmem:[%s148 + $0x788] sm:$0xff]
                %393 = vst [vmem:[%s149 + $0x3c8] sm:$0xff] %v392
                %v394 = vld [vmem:[%s148 + $0x790] sm:$0xff]
                %395 = vst [vmem:[%s149 + $0x3d0] sm:$0xff] %v394
                %v396 = vld [vmem:[%s148 + $0x798] sm:$0xff]
                %397 = vst [vmem:[%s149 + $0x3d8] sm:$0xff] %v396
                %v398 = vld [vmem:[%s148 + $0x7c0] sm:$0xff]
                %399 = vst [vmem:[%s149 + $0x3e0] sm:$0xff] %v398
                %v400 = vld [vmem:[%s148 + $0x7c8] sm:$0xff]
                %401 = vst [vmem:[%s149 + $0x3e8] sm:$0xff] %v400
                %v402 = vld [vmem:[%s148 + $0x7d0] sm:$0xff]
                %403 = vst [vmem:[%s149 + $0x3f0] sm:$0xff] %v402
                %v404 = vld [vmem:[%s148 + $0x7d8] sm:$0xff]
                %405 = vst [vmem:[%s149 + $0x3f8] sm:$0xff] %v404
              $region41: #{generator_forward.8} parent=35 // loop_footer
                %s147 = sadd.s32 1, %s143
              $region42: #{generator_forward.8} parent=35 // loop_footer_branch
                %142 = sbr.rel target = $region38
              $region43: #{generator_forward.8} parent=35 // loop_exit
                _
            $region36: #{generator_forward.8} parent=31 // pred_fallthru
              _
            // Predicated region
            $region44: #{generator_forward.8} parent=31 // pred_check
              _
            $region45: #{generator_forward.8} parent=31 // pred_check_branch
              %407 = sbr.rel target = $region47
            $region46: #{generator_forward.8} parent=31 // pred_region
              _
            $region47: #{generator_forward.8} parent=31 // pred_fallthru
              _
          $region32: #{generator_forward.8} parent=27 // pred_fallthru
            _
          %408 = vnop
        $region28: #{generator_forward.8} parent=23 // pred_fallthru
          _
      $region24: #{generator_forward.8} parent=5 // pred_fallthru
        _
      %p409 = scmp.le.s32.totalorder 1, %s9
      %p410 = scmp.lt.s32.totalorder %s9, 3
      %p411 = pnand %p409, %p410
      %p412 = pneg %p411
      // Predicated region
      $region48: #{generator_forward.8} parent=5 // pred_check
        _
      $region49: #{generator_forward.8} parent=5 // pred_check_branch
        %414 = sbr.rel (%p411) target = $region51
      $region50: #{generator_forward.8} parent=5 // pred_region
        %s415 = ssub.s32 %s9, 1
        %s416 = sand.u32 %s43, 1
        %s417 = sand.u32 %s43, 1
        %s418 = smul.addr %s417, 1024
        %s419 = scalar_lea.vmem [#allocation2], %s418
        // Predicated region
        $region52: #{generator_forward.8} parent=50 // pred_check
          %p420 = pneg %p56
        $region53: #{generator_forward.8} parent=50 // pred_check_branch
          %422 = sbr.rel (%p420) target = $region55
        $region54: #{generator_forward.8} parent=50 // pred_region
          _
        $region55: #{generator_forward.8} parent=50 // pred_fallthru
          _
        %p423 = pneg %p30
        %p424 = pneg %p27
        %s425 = sand.u32 %s43, 1
        %s426 = sand.u32 %s43, 1
        %s427 = smul.addr %s426, 1024
        %s428 = scalar_lea.vmem [#allocation2], %s427
        %p429 = pneg %p56
        %p430 = pneg %p53
        %p431 = pneg %p77
        %p432 = pneg %p74
        %p433 = pneg %p103
        %p434 = pneg %p100
        %s435 = smul.u32 8, %s14
        %p436 = scmp.lt.s32.totalorder %s435, 15
        %s437 = scalar_select %p436, %s435, 15
        %s438 = smul.addr %s437, 8
        %s439 = scalar_lea.vmem %s3, %s438
        %s440 = smul.u32 8, %s14
        %s441 = smul.u32 8, %s14
        %p442 = scmp.lt.s32.totalorder %s441, 15
        %s443 = scalar_select %p442, %s441, 15
        %s444 = smul.addr %s443, 8
        %s445 = scalar_lea.vmem %s3, %s444
        %s446 = smul.u32 8, %s14
        %v447 = vld [vmem:[%s0] sm:$0xff]
        %v448 = vld [vmem:[%s419] sm:$0xff]
        %v449 = vld [vmem:[%s419 + $0x8] sm:$0xff]
        %v450 = vld [vmem:[%s419 + $0x10] sm:$0xff]
        %v451 = vld [vmem:[%s419 + $0x18] sm:$0xff]
        %v452 = vld [vmem:[%s419 + $0x20] sm:$0xff]
        %v453 = vld [vmem:[%s419 + $0x28] sm:$0xff]
        %v454 = vld [vmem:[%s419 + $0x30] sm:$0xff]
        %v455 = vld [vmem:[%s419 + $0x38] sm:$0xff]
        %v456 = vld [vmem:[%s419 + $0x40] sm:$0xff]
        %v457 = vld [vmem:[%s419 + $0x48] sm:$0xff]
        %v458 = vld [vmem:[%s419 + $0x50] sm:$0xff]
        %v459 = vld [vmem:[%s419 + $0x58] sm:$0xff]
        %v460 = vld [vmem:[%s419 + $0x60] sm:$0xff]
        %v461 = vld [vmem:[%s419 + $0x68] sm:$0xff]
        %v462 = vld [vmem:[%s419 + $0x70] sm:$0xff]
        %v463 = vld [vmem:[%s419 + $0x78] sm:$0xff]
        %v464 = vld [vmem:[%s419 + $0x80] sm:$0xff]
        %v465 = vld [vmem:[%s419 + $0x88] sm:$0xff]
        %v466 = vld [vmem:[%s419 + $0x90] sm:$0xff]
        %v467 = vld [vmem:[%s419 + $0x98] sm:$0xff]
        %v468 = vld [vmem:[%s419 + $0xa0] sm:$0xff]
        %v469 = vld [vmem:[%s419 + $0xa8] sm:$0xff]
        %v470 = vld [vmem:[%s419 + $0xb0] sm:$0xff]
        %v471 = vld [vmem:[%s419 + $0xb8] sm:$0xff]
        %v472 = vld [vmem:[%s419 + $0xc0] sm:$0xff]
        %v473 = vld [vmem:[%s419 + $0xc8] sm:$0xff]
        %v474 = vld [vmem:[%s419 + $0xd0] sm:$0xff]
        %v475 = vld [vmem:[%s419 + $0xd8] sm:$0xff]
        %v476 = vld [vmem:[%s419 + $0xe0] sm:$0xff]
        %v477 = vld [vmem:[%s419 + $0xe8] sm:$0xff]
        %v478 = vld [vmem:[%s419 + $0xf0] sm:$0xff]
        %v479 = vld [vmem:[%s419 + $0xf8] sm:$0xff]
        %v480 = vld [vmem:[%s419 + $0x100] sm:$0xff]
        %v481 = vld [vmem:[%s419 + $0x108] sm:$0xff]
        %v482 = vld [vmem:[%s419 + $0x110] sm:$0xff]
        %v483 = vld [vmem:[%s419 + $0x118] sm:$0xff]
        %v484 = vld [vmem:[%s419 + $0x120] sm:$0xff]
        %v485 = vld [vmem:[%s419 + $0x128] sm:$0xff]
        %v486 = vld [vmem:[%s419 + $0x130] sm:$0xff]
        %v487 = vld [vmem:[%s419 + $0x138] sm:$0xff]
        %v488 = vld [vmem:[%s419 + $0x140] sm:$0xff]
        %v489 = vld [vmem:[%s419 + $0x148] sm:$0xff]
        %v490 = vld [vmem:[%s419 + $0x150] sm:$0xff]
        %v491 = vld [vmem:[%s419 + $0x158] sm:$0xff]
        %v492 = vld [vmem:[%s419 + $0x160] sm:$0xff]
        %v493 = vld [vmem:[%s419 + $0x168] sm:$0xff]
        %v494 = vld [vmem:[%s419 + $0x170] sm:$0xff]
        %v495 = vld [vmem:[%s419 + $0x178] sm:$0xff]
        %v496 = vld [vmem:[%s419 + $0x180] sm:$0xff]
        %v497 = vld [vmem:[%s419 + $0x188] sm:$0xff]
        %v498 = vld [vmem:[%s419 + $0x190] sm:$0xff]
        %v499 = vld [vmem:[%s419 + $0x198] sm:$0xff]
        %v500 = vld [vmem:[%s419 + $0x1a0] sm:$0xff]
        %v501 = vld [vmem:[%s419 + $0x1a8] sm:$0xff]
        %v502 = vld [vmem:[%s419 + $0x1b0] sm:$0xff]
        %v503 = vld [vmem:[%s419 + $0x1b8] sm:$0xff]
        %v504 = vld [vmem:[%s419 + $0x1c0] sm:$0xff]
        %v505 = vld [vmem:[%s419 + $0x1c8] sm:$0xff]
        %v506 = vld [vmem:[%s419 + $0x1d0] sm:$0xff]
        %v507 = vld [vmem:[%s419 + $0x1d8] sm:$0xff]
        %v508 = vld [vmem:[%s419 + $0x1e0] sm:$0xff]
        %v509 = vld [vmem:[%s419 + $0x1e8] sm:$0xff]
        %v510 = vld [vmem:[%s419 + $0x1f0] sm:$0xff]
        %v511 = vld [vmem:[%s419 + $0x1f8] sm:$0xff]
        %v512 = vld [vmem:[%s419 + $0x200] sm:$0xff]
        %v513 = vld [vmem:[%s419 + $0x208] sm:$0xff]
        %v514 = vld [vmem:[%s419 + $0x210] sm:$0xff]
        %v515 = vld [vmem:[%s419 + $0x218] sm:$0xff]
        %v516 = vld [vmem:[%s419 + $0x220] sm:$0xff]
        %v517 = vld [vmem:[%s419 + $0x228] sm:$0xff]
        %v518 = vld [vmem:[%s419 + $0x230] sm:$0xff]
        %v519 = vld [vmem:[%s419 + $0x238] sm:$0xff]
        %v520 = vld [vmem:[%s419 + $0x240] sm:$0xff]
        %v521 = vld [vmem:[%s419 + $0x248] sm:$0xff]
        %v522 = vld [vmem:[%s419 + $0x250] sm:$0xff]
        %v523 = vld [vmem:[%s419 + $0x258] sm:$0xff]
        %v524 = vld [vmem:[%s419 + $0x260] sm:$0xff]
        %v525 = vld [vmem:[%s419 + $0x268] sm:$0xff]
        %v526 = vld [vmem:[%s419 + $0x270] sm:$0xff]
        %v527 = vld [vmem:[%s419 + $0x278] sm:$0xff]
        %v528 = vld [vmem:[%s419 + $0x280] sm:$0xff]
        %v529 = vld [vmem:[%s419 + $0x288] sm:$0xff]
        %v530 = vld [vmem:[%s419 + $0x290] sm:$0xff]
        %v531 = vld [vmem:[%s419 + $0x298] sm:$0xff]
        %v532 = vld [vmem:[%s419 + $0x2a0] sm:$0xff]
        %v533 = vld [vmem:[%s419 + $0x2a8] sm:$0xff]
        %v534 = vld [vmem:[%s419 + $0x2b0] sm:$0xff]
        %v535 = vld [vmem:[%s419 + $0x2b8] sm:$0xff]
        %v536 = vld [vmem:[%s419 + $0x2c0] sm:$0xff]
        %v537 = vld [vmem:[%s419 + $0x2c8] sm:$0xff]
        %v538 = vld [vmem:[%s419 + $0x2d0] sm:$0xff]
        %v539 = vld [vmem:[%s419 + $0x2d8] sm:$0xff]
        %v540 = vld [vmem:[%s419 + $0x2e0] sm:$0xff]
        %v541 = vld [vmem:[%s419 + $0x2e8] sm:$0xff]
        %v542 = vld [vmem:[%s419 + $0x2f0] sm:$0xff]
        %v543 = vld [vmem:[%s419 + $0x2f8] sm:$0xff]
        %v544 = vld [vmem:[%s419 + $0x300] sm:$0xff]
        %v545 = vld [vmem:[%s419 + $0x308] sm:$0xff]
        %v546 = vld [vmem:[%s419 + $0x310] sm:$0xff]
        %v547 = vld [vmem:[%s419 + $0x318] sm:$0xff]
        %v548 = vld [vmem:[%s419 + $0x320] sm:$0xff]
        %v549 = vld [vmem:[%s419 + $0x328] sm:$0xff]
        %v550 = vld [vmem:[%s419 + $0x330] sm:$0xff]
        %v551 = vld [vmem:[%s419 + $0x338] sm:$0xff]
        %v552 = vld [vmem:[%s419 + $0x340] sm:$0xff]
        %v553 = vld [vmem:[%s419 + $0x348] sm:$0xff]
        %v554 = vld [vmem:[%s419 + $0x350] sm:$0xff]
        %v555 = vld [vmem:[%s419 + $0x358] sm:$0xff]
        %v556 = vld [vmem:[%s419 + $0x360] sm:$0xff]
        %v557 = vld [vmem:[%s419 + $0x368] sm:$0xff]
        %v558 = vld [vmem:[%s419 + $0x370] sm:$0xff]
        %v559 = vld [vmem:[%s419 + $0x378] sm:$0xff]
        %v560 = vld [vmem:[%s419 + $0x380] sm:$0xff]
        %v561 = vld [vmem:[%s419 + $0x388] sm:$0xff]
        %v562 = vld [vmem:[%s419 + $0x390] sm:$0xff]
        %v563 = vld [vmem:[%s419 + $0x398] sm:$0xff]
        %v564 = vld [vmem:[%s419 + $0x3a0] sm:$0xff]
        %v565 = vld [vmem:[%s419 + $0x3a8] sm:$0xff]
        %v566 = vld [vmem:[%s419 + $0x3b0] sm:$0xff]
        %v567 = vld [vmem:[%s419 + $0x3b8] sm:$0xff]
        %v568 = vld [vmem:[%s419 + $0x3c0] sm:$0xff]
        %v569 = vld [vmem:[%s419 + $0x3c8] sm:$0xff]
        %v570 = vld [vmem:[%s419 + $0x3d0] sm:$0xff]
        %v571 = vld [vmem:[%s419 + $0x3d8] sm:$0xff]
        %v572 = vld [vmem:[%s419 + $0x3e0] sm:$0xff]
        %v573 = vld [vmem:[%s419 + $0x3e8] sm:$0xff]
        %v574 = vld [vmem:[%s419 + $0x3f0] sm:$0xff]
        %v575 = vld [vmem:[%s419 + $0x3f8] sm:$0xff]
        %v576 = vld [vmem:[%s2] sm:$0xff]
        %578 = vset.pattern.permute.xlu0 0
        %579 = vperm.xlu0 %578, %v576
        %v580 = vpop.permute.xlu0 %579
        %v583 = vunpack.c.l.b16 %v447
        %v584 = vunpack.c.h.b16 %v447
        %v585 = vpack.c.b16 %v583, %v583
        %v586 = vpack.c.b16 %v584, %v584
        %v717 = vunpack.c.l.b16 %v448
        %v718 = vunpack.c.h.b16 %v448
        %v719 = vunpack.c.l.b16 %v449
        %v720 = vunpack.c.h.b16 %v449
        %v721 = vunpack.c.l.b16 %v450
        %v722 = vunpack.c.h.b16 %v450
        %v723 = vunpack.c.l.b16 %v451
        %v724 = vunpack.c.h.b16 %v451
        %v725 = vunpack.c.l.b16 %v452
        %v726 = vunpack.c.h.b16 %v452
        %v727 = vunpack.c.l.b16 %v453
        %v728 = vunpack.c.h.b16 %v453
        %v729 = vunpack.c.l.b16 %v454
        %v730 = vunpack.c.h.b16 %v454
        %v731 = vunpack.c.l.b16 %v455
        %v732 = vunpack.c.h.b16 %v455
        %v733 = vunpack.c.l.b16 %v456
        %v734 = vunpack.c.h.b16 %v456
        %v735 = vunpack.c.l.b16 %v457
        %v736 = vunpack.c.h.b16 %v457
        %v737 = vunpack.c.l.b16 %v458
        %v738 = vunpack.c.h.b16 %v458
        %v739 = vunpack.c.l.b16 %v459
        %v740 = vunpack.c.h.b16 %v459
        %v741 = vunpack.c.l.b16 %v460
        %v742 = vunpack.c.h.b16 %v460
        %v743 = vunpack.c.l.b16 %v461
        %v744 = vunpack.c.h.b16 %v461
        %v745 = vunpack.c.l.b16 %v462
        %v746 = vunpack.c.h.b16 %v462
        %v747 = vunpack.c.l.b16 %v463
        %v748 = vunpack.c.h.b16 %v463
        %v749 = vunpack.c.l.b16 %v464
        %v750 = vunpack.c.h.b16 %v464
        %v751 = vunpack.c.l.b16 %v465
        %v752 = vunpack.c.h.b16 %v465
        %v753 = vunpack.c.l.b16 %v466
        %v754 = vunpack.c.h.b16 %v466
        %v755 = vunpack.c.l.b16 %v467
        %v756 = vunpack.c.h.b16 %v467
        %v757 = vunpack.c.l.b16 %v468
        %v758 = vunpack.c.h.b16 %v468
        %v759 = vunpack.c.l.b16 %v469
        %v760 = vunpack.c.h.b16 %v469
        %v761 = vunpack.c.l.b16 %v470
        %v762 = vunpack.c.h.b16 %v470
        %v763 = vunpack.c.l.b16 %v471
        %v764 = vunpack.c.h.b16 %v471
        %v765 = vunpack.c.l.b16 %v472
        %v766 = vunpack.c.h.b16 %v472
        %v767 = vunpack.c.l.b16 %v473
        %v768 = vunpack.c.h.b16 %v473
        %v769 = vunpack.c.l.b16 %v474
        %v770 = vunpack.c.h.b16 %v474
        %v771 = vunpack.c.l.b16 %v475
        %v772 = vunpack.c.h.b16 %v475
        %v773 = vunpack.c.l.b16 %v476
        %v774 = vunpack.c.h.b16 %v476
        %v775 = vunpack.c.l.b16 %v477
        %v776 = vunpack.c.h.b16 %v477
        %v777 = vunpack.c.l.b16 %v478
        %v778 = vunpack.c.h.b16 %v478
        %v779 = vunpack.c.l.b16 %v479
        %v780 = vunpack.c.h.b16 %v479
        %v781 = vunpack.c.l.b16 %v480
        %v782 = vunpack.c.h.b16 %v480
        %v783 = vunpack.c.l.b16 %v481
        %v784 = vunpack.c.h.b16 %v481
        %v785 = vunpack.c.l.b16 %v482
        %v786 = vunpack.c.h.b16 %v482
        %v787 = vunpack.c.l.b16 %v483
        %v788 = vunpack.c.h.b16 %v483
        %v789 = vunpack.c.l.b16 %v484
        %v790 = vunpack.c.h.b16 %v484
        %v791 = vunpack.c.l.b16 %v485
        %v792 = vunpack.c.h.b16 %v485
        %v793 = vunpack.c.l.b16 %v486
        %v794 = vunpack.c.h.b16 %v486
        %v795 = vunpack.c.l.b16 %v487
        %v796 = vunpack.c.h.b16 %v487
        %v797 = vunpack.c.l.b16 %v488
        %v798 = vunpack.c.h.b16 %v488
        %v799 = vunpack.c.l.b16 %v489
        %v800 = vunpack.c.h.b16 %v489
        %v801 = vunpack.c.l.b16 %v490
        %v802 = vunpack.c.h.b16 %v490
        %v803 = vunpack.c.l.b16 %v491
        %v804 = vunpack.c.h.b16 %v491
        %v805 = vunpack.c.l.b16 %v492
        %v806 = vunpack.c.h.b16 %v492
        %v807 = vunpack.c.l.b16 %v493
        %v808 = vunpack.c.h.b16 %v493
        %v809 = vunpack.c.l.b16 %v494
        %v810 = vunpack.c.h.b16 %v494
        %v811 = vunpack.c.l.b16 %v495
        %v812 = vunpack.c.h.b16 %v495
        %v813 = vunpack.c.l.b16 %v496
        %v814 = vunpack.c.h.b16 %v496
        %v815 = vunpack.c.l.b16 %v497
        %v816 = vunpack.c.h.b16 %v497
        %v817 = vunpack.c.l.b16 %v498
        %v818 = vunpack.c.h.b16 %v498
        %v819 = vunpack.c.l.b16 %v499
        %v820 = vunpack.c.h.b16 %v499
        %v821 = vunpack.c.l.b16 %v500
        %v822 = vunpack.c.h.b16 %v500
        %v823 = vunpack.c.l.b16 %v501
        %v824 = vunpack.c.h.b16 %v501
        %v825 = vunpack.c.l.b16 %v502
        %v826 = vunpack.c.h.b16 %v502
        %v827 = vunpack.c.l.b16 %v503
        %v828 = vunpack.c.h.b16 %v503
        %v829 = vunpack.c.l.b16 %v504
        %v830 = vunpack.c.h.b16 %v504
        %v831 = vunpack.c.l.b16 %v505
        %v832 = vunpack.c.h.b16 %v505
        %v833 = vunpack.c.l.b16 %v506
        %v834 = vunpack.c.h.b16 %v506
        %v835 = vunpack.c.l.b16 %v507
        %v836 = vunpack.c.h.b16 %v507
        %v837 = vunpack.c.l.b16 %v508
        %v838 = vunpack.c.h.b16 %v508
        %v839 = vunpack.c.l.b16 %v509
        %v840 = vunpack.c.h.b16 %v509
        %v841 = vunpack.c.l.b16 %v510
        %v842 = vunpack.c.h.b16 %v510
        %v843 = vunpack.c.l.b16 %v511
        %v844 = vunpack.c.h.b16 %v511
        %v845 = vunpack.c.l.b16 %v512
        %v846 = vunpack.c.h.b16 %v512
        %v847 = vunpack.c.l.b16 %v513
        %v848 = vunpack.c.h.b16 %v513
        %v849 = vunpack.c.l.b16 %v514
        %v850 = vunpack.c.h.b16 %v514
        %v851 = vunpack.c.l.b16 %v515
        %v852 = vunpack.c.h.b16 %v515
        %v853 = vunpack.c.l.b16 %v516
        %v854 = vunpack.c.h.b16 %v516
        %v855 = vunpack.c.l.b16 %v517
        %v856 = vunpack.c.h.b16 %v517
        %v857 = vunpack.c.l.b16 %v518
        %v858 = vunpack.c.h.b16 %v518
        %v859 = vunpack.c.l.b16 %v519
        %v860 = vunpack.c.h.b16 %v519
        %v861 = vunpack.c.l.b16 %v520
        %v862 = vunpack.c.h.b16 %v520
        %v863 = vunpack.c.l.b16 %v521
        %v864 = vunpack.c.h.b16 %v521
        %v865 = vunpack.c.l.b16 %v522
        %v866 = vunpack.c.h.b16 %v522
        %v867 = vunpack.c.l.b16 %v523
        %v868 = vunpack.c.h.b16 %v523
        %v869 = vunpack.c.l.b16 %v524
        %v870 = vunpack.c.h.b16 %v524
        %v871 = vunpack.c.l.b16 %v525
        %v872 = vunpack.c.h.b16 %v525
        %v873 = vunpack.c.l.b16 %v526
        %v874 = vunpack.c.h.b16 %v526
        %v875 = vunpack.c.l.b16 %v527
        %v876 = vunpack.c.h.b16 %v527
        %v877 = vunpack.c.l.b16 %v528
        %v878 = vunpack.c.h.b16 %v528
        %v879 = vunpack.c.l.b16 %v529
        %v880 = vunpack.c.h.b16 %v529
        %v881 = vunpack.c.l.b16 %v530
        %v882 = vunpack.c.h.b16 %v530
        %v883 = vunpack.c.l.b16 %v531
        %v884 = vunpack.c.h.b16 %v531
        %v885 = vunpack.c.l.b16 %v532
        %v886 = vunpack.c.h.b16 %v532
        %v887 = vunpack.c.l.b16 %v533
        %v888 = vunpack.c.h.b16 %v533
        %v889 = vunpack.c.l.b16 %v534
        %v890 = vunpack.c.h.b16 %v534
        %v891 = vunpack.c.l.b16 %v535
        %v892 = vunpack.c.h.b16 %v535
        %v893 = vunpack.c.l.b16 %v536
        %v894 = vunpack.c.h.b16 %v536
        %v895 = vunpack.c.l.b16 %v537
        %v896 = vunpack.c.h.b16 %v537
        %v897 = vunpack.c.l.b16 %v538
        %v898 = vunpack.c.h.b16 %v538
        %v899 = vunpack.c.l.b16 %v539
        %v900 = vunpack.c.h.b16 %v539
        %v901 = vunpack.c.l.b16 %v540
        %v902 = vunpack.c.h.b16 %v540
        %v903 = vunpack.c.l.b16 %v541
        %v904 = vunpack.c.h.b16 %v541
        %v905 = vunpack.c.l.b16 %v542
        %v906 = vunpack.c.h.b16 %v542
        %v907 = vunpack.c.l.b16 %v543
        %v908 = vunpack.c.h.b16 %v543
        %v909 = vunpack.c.l.b16 %v544
        %v910 = vunpack.c.h.b16 %v544
        %v911 = vunpack.c.l.b16 %v545
        %v912 = vunpack.c.h.b16 %v545
        %v913 = vunpack.c.l.b16 %v546
        %v914 = vunpack.c.h.b16 %v546
        %v915 = vunpack.c.l.b16 %v547
        %v916 = vunpack.c.h.b16 %v547
        %v917 = vunpack.c.l.b16 %v548
        %v918 = vunpack.c.h.b16 %v548
        %v919 = vunpack.c.l.b16 %v549
        %v920 = vunpack.c.h.b16 %v549
        %v921 = vunpack.c.l.b16 %v550
        %v922 = vunpack.c.h.b16 %v550
        %v923 = vunpack.c.l.b16 %v551
        %v924 = vunpack.c.h.b16 %v551
        %v925 = vunpack.c.l.b16 %v552
        %v926 = vunpack.c.h.b16 %v552
        %v927 = vunpack.c.l.b16 %v553
        %v928 = vunpack.c.h.b16 %v553
        %v929 = vunpack.c.l.b16 %v554
        %v930 = vunpack.c.h.b16 %v554
        %v931 = vunpack.c.l.b16 %v555
        %v932 = vunpack.c.h.b16 %v555
        %v933 = vunpack.c.l.b16 %v556
        %v934 = vunpack.c.h.b16 %v556
        %v935 = vunpack.c.l.b16 %v557
        %v936 = vunpack.c.h.b16 %v557
        %v937 = vunpack.c.l.b16 %v558
        %v938 = vunpack.c.h.b16 %v558
        %v939 = vunpack.c.l.b16 %v559
        %v940 = vunpack.c.h.b16 %v559
        %v941 = vunpack.c.l.b16 %v560
        %v942 = vunpack.c.h.b16 %v560
        %v943 = vunpack.c.l.b16 %v561
        %v944 = vunpack.c.h.b16 %v561
        %v945 = vunpack.c.l.b16 %v562
        %v946 = vunpack.c.h.b16 %v562
        %v947 = vunpack.c.l.b16 %v563
        %v948 = vunpack.c.h.b16 %v563
        %v949 = vunpack.c.l.b16 %v564
        %v950 = vunpack.c.h.b16 %v564
        %v951 = vunpack.c.l.b16 %v565
        %v952 = vunpack.c.h.b16 %v565
        %v953 = vunpack.c.l.b16 %v566
        %v954 = vunpack.c.h.b16 %v566
        %v955 = vunpack.c.l.b16 %v567
        %v956 = vunpack.c.h.b16 %v567
        %v957 = vunpack.c.l.b16 %v568
        %v958 = vunpack.c.h.b16 %v568
        %v959 = vunpack.c.l.b16 %v569
        %v960 = vunpack.c.h.b16 %v569
        %v961 = vunpack.c.l.b16 %v570
        %v962 = vunpack.c.h.b16 %v570
        %v963 = vunpack.c.l.b16 %v571
        %v964 = vunpack.c.h.b16 %v571
        %v965 = vunpack.c.l.b16 %v572
        %v966 = vunpack.c.h.b16 %v572
        %v967 = vunpack.c.l.b16 %v573
        %v968 = vunpack.c.h.b16 %v573
        %v969 = vunpack.c.l.b16 %v574
        %v970 = vunpack.c.h.b16 %v574
        %v971 = vunpack.c.l.b16 %v575
        %v972 = vunpack.c.h.b16 %v575
        %v973 = vpack.c.b16 %v725, %v717
        %v974 = vpack.c.b16 %v726, %v718
        %v975 = vpack.c.b16 %v727, %v719
        %v976 = vpack.c.b16 %v728, %v720
        %v977 = vpack.c.b16 %v729, %v721
        %v978 = vpack.c.b16 %v730, %v722
        %v979 = vpack.c.b16 %v731, %v723
        %v980 = vpack.c.b16 %v732, %v724
        %v981 = vpack.c.b16 %v741, %v733
        %v982 = vpack.c.b16 %v742, %v734
        %v983 = vpack.c.b16 %v743, %v735
        %v984 = vpack.c.b16 %v744, %v736
        %v985 = vpack.c.b16 %v745, %v737
        %v986 = vpack.c.b16 %v746, %v738
        %v987 = vpack.c.b16 %v747, %v739
        %v988 = vpack.c.b16 %v748, %v740
        %v989 = vpack.c.b16 %v757, %v749
        %v990 = vpack.c.b16 %v758, %v750
        %v991 = vpack.c.b16 %v759, %v751
        %v992 = vpack.c.b16 %v760, %v752
        %v993 = vpack.c.b16 %v761, %v753
        %v994 = vpack.c.b16 %v762, %v754
        %v995 = vpack.c.b16 %v763, %v755
        %v996 = vpack.c.b16 %v764, %v756
        %v997 = vpack.c.b16 %v773, %v765
        %v998 = vpack.c.b16 %v774, %v766
        %v999 = vpack.c.b16 %v775, %v767
        %v1000 = vpack.c.b16 %v776, %v768
        %v1001 = vpack.c.b16 %v777, %v769
        %v1002 = vpack.c.b16 %v778, %v770
        %v1003 = vpack.c.b16 %v779, %v771
        %v1004 = vpack.c.b16 %v780, %v772
        %v1005 = vpack.c.b16 %v789, %v781
        %v1006 = vpack.c.b16 %v790, %v782
        %v1007 = vpack.c.b16 %v791, %v783
        %v1008 = vpack.c.b16 %v792, %v784
        %v1009 = vpack.c.b16 %v793, %v785
        %v1010 = vpack.c.b16 %v794, %v786
        %v1011 = vpack.c.b16 %v795, %v787
        %v1012 = vpack.c.b16 %v796, %v788
        %v1013 = vpack.c.b16 %v805, %v797
        %v1014 = vpack.c.b16 %v806, %v798
        %v1015 = vpack.c.b16 %v807, %v799
        %v1016 = vpack.c.b16 %v808, %v800
        %v1017 = vpack.c.b16 %v809, %v801
        %v1018 = vpack.c.b16 %v810, %v802
        %v1019 = vpack.c.b16 %v811, %v803
        %v1020 = vpack.c.b16 %v812, %v804
        %v1021 = vpack.c.b16 %v821, %v813
        %v1022 = vpack.c.b16 %v822, %v814
        %v1023 = vpack.c.b16 %v823, %v815
        %v1024 = vpack.c.b16 %v824, %v816
        %v1025 = vpack.c.b16 %v825, %v817
        %v1026 = vpack.c.b16 %v826, %v818
        %v1027 = vpack.c.b16 %v827, %v819
        %v1028 = vpack.c.b16 %v828, %v820
        %v1029 = vpack.c.b16 %v837, %v829
        %v1030 = vpack.c.b16 %v838, %v830
        %v1031 = vpack.c.b16 %v839, %v831
        %v1032 = vpack.c.b16 %v840, %v832
        %v1033 = vpack.c.b16 %v841, %v833
        %v1034 = vpack.c.b16 %v842, %v834
        %v1035 = vpack.c.b16 %v843, %v835
        %v1036 = vpack.c.b16 %v844, %v836
        %v1037 = vpack.c.b16 %v853, %v845
        %v1038 = vpack.c.b16 %v854, %v846
        %v1039 = vpack.c.b16 %v855, %v847
        %v1040 = vpack.c.b16 %v856, %v848
        %v1041 = vpack.c.b16 %v857, %v849
        %v1042 = vpack.c.b16 %v858, %v850
        %v1043 = vpack.c.b16 %v859, %v851
        %v1044 = vpack.c.b16 %v860, %v852
        %v1045 = vpack.c.b16 %v869, %v861
        %v1046 = vpack.c.b16 %v870, %v862
        %v1047 = vpack.c.b16 %v871, %v863
        %v1048 = vpack.c.b16 %v872, %v864
        %v1049 = vpack.c.b16 %v873, %v865
        %v1050 = vpack.c.b16 %v874, %v866
        %v1051 = vpack.c.b16 %v875, %v867
        %v1052 = vpack.c.b16 %v876, %v868
        %v1053 = vpack.c.b16 %v885, %v877
        %v1054 = vpack.c.b16 %v886, %v878
        %v1055 = vpack.c.b16 %v887, %v879
        %v1056 = vpack.c.b16 %v888, %v880
        %v1057 = vpack.c.b16 %v889, %v881
        %v1058 = vpack.c.b16 %v890, %v882
        %v1059 = vpack.c.b16 %v891, %v883
        %v1060 = vpack.c.b16 %v892, %v884
        %v1061 = vpack.c.b16 %v901, %v893
        %v1062 = vpack.c.b16 %v902, %v894
        %v1063 = vpack.c.b16 %v903, %v895
        %v1064 = vpack.c.b16 %v904, %v896
        %v1065 = vpack.c.b16 %v905, %v897
        %v1066 = vpack.c.b16 %v906, %v898
        %v1067 = vpack.c.b16 %v907, %v899
        %v1068 = vpack.c.b16 %v908, %v900
        %v1069 = vpack.c.b16 %v917, %v909
        %v1070 = vpack.c.b16 %v918, %v910
        %v1071 = vpack.c.b16 %v919, %v911
        %v1072 = vpack.c.b16 %v920, %v912
        %v1073 = vpack.c.b16 %v921, %v913
        %v1074 = vpack.c.b16 %v922, %v914
        %v1075 = vpack.c.b16 %v923, %v915
        %v1076 = vpack.c.b16 %v924, %v916
        %v1077 = vpack.c.b16 %v933, %v925
        %v1078 = vpack.c.b16 %v934, %v926
        %v1079 = vpack.c.b16 %v935, %v927
        %v1080 = vpack.c.b16 %v936, %v928
        %v1081 = vpack.c.b16 %v937, %v929
        %v1082 = vpack.c.b16 %v938, %v930
        %v1083 = vpack.c.b16 %v939, %v931
        %v1084 = vpack.c.b16 %v940, %v932
        %v1085 = vpack.c.b16 %v949, %v941
        %v1086 = vpack.c.b16 %v950, %v942
        %v1087 = vpack.c.b16 %v951, %v943
        %v1088 = vpack.c.b16 %v952, %v944
        %v1089 = vpack.c.b16 %v953, %v945
        %v1090 = vpack.c.b16 %v954, %v946
        %v1091 = vpack.c.b16 %v955, %v947
        %v1092 = vpack.c.b16 %v956, %v948
        %v1093 = vpack.c.b16 %v965, %v957
        %v1094 = vpack.c.b16 %v966, %v958
        %v1095 = vpack.c.b16 %v967, %v959
        %v1096 = vpack.c.b16 %v968, %v960
        %v1097 = vpack.c.b16 %v969, %v961
        %v1098 = vpack.c.b16 %v970, %v962
        %v1099 = vpack.c.b16 %v971, %v963
        %v1100 = vpack.c.b16 %v972, %v964
        %1229 = vmatprep.subr.bf16.mxu0 %v1030
        %1230 = vmatpush1.bf16.msra.mxu0 %v1029
        %1231 = vmatprep.subr.bf16.mxu0 %v1022
        %1232 = vmatpush1.bf16.msra.mxu0 %v1021
        %1233 = vmatprep.subr.bf16.mxu0 %v1014
        %1234 = vmatpush1.bf16.msra.mxu0 %v1013
        %1235 = vmatprep.subr.bf16.mxu0 %v1006
        %1236 = vmatpush1.bf16.msra.mxu0 %v1005
        %1237 = vmatprep.subr.bf16.mxu0 %v998
        %1238 = vmatpush1.bf16.msra.mxu0 %v997
        %1239 = vmatprep.subr.bf16.mxu0 %v990
        %1240 = vmatpush1.bf16.msra.mxu0 %v989
        %1241 = vmatprep.subr.bf16.mxu0 %v982
        %1242 = vmatpush1.bf16.msra.mxu0 %v981
        %1243 = vmatprep.subr.bf16.mxu0 %v974
        %1244 = vmatpush1.bf16.msra.mxu0 %v973
        %1245 = vmatprep.subr.bf16.mxu0 %v1094
        %1246 = vmatpush2.bf16.msra.mxu0 %v1093
        %1247 = vmatprep.subr.bf16.mxu0 %v1086
        %1248 = vmatpush2.bf16.msra.mxu0 %v1085
        %1249 = vmatprep.subr.bf16.mxu0 %v1078
        %1250 = vmatpush2.bf16.msra.mxu0 %v1077
        %1251 = vmatprep.subr.bf16.mxu0 %v1070
        %1252 = vmatpush2.bf16.msra.mxu0 %v1069
        %1253 = vmatprep.subr.bf16.mxu0 %v1062
        %1254 = vmatpush2.bf16.msra.mxu0 %v1061
        %1255 = vmatprep.subr.bf16.mxu0 %v1054
        %1256 = vmatpush2.bf16.msra.mxu0 %v1053
        %1257 = vmatprep.subr.bf16.mxu0 %v1046
        %1258 = vmatpush2.bf16.msra.mxu0 %v1045
        %1259 = vmatprep.subr.bf16.mxu0 %v1038
        %1260 = vmatpush2.bf16.msra.mxu0 %v1037
        %1261 = vmatprep.mubr.bf16.mxu0 %v586
        %1262 = vmatmul.mubr.bf16.gmra.mxu0 %v585
        %v1263 = vpop.f32.mrf.mxu0
        %v1264 = vadd.f32 %v580, %v1263
        %v1265 = vpop.f32.mrf.mxu0
        %v1266 = vadd.f32 %v580, %v1265
        %v1267 = vpop.f32.mrf.mxu0
        %v1268 = vpop.f32.mrf.mxu0
        %1269 = vdwg.mxu0
        %1270 = vmatprep.subr.bf16.mxu0 %v1032
        %1271 = vmatpush1.bf16.msra.mxu0 %v1031
        %1272 = vmatprep.subr.bf16.mxu0 %v1024
        %1273 = vmatpush1.bf16.msra.mxu0 %v1023
        %1274 = vmatprep.subr.bf16.mxu0 %v1016
        %1275 = vmatpush1.bf16.msra.mxu0 %v1015
        %1276 = vmatprep.subr.bf16.mxu0 %v1008
        %1277 = vmatpush1.bf16.msra.mxu0 %v1007
        %1278 = vmatprep.subr.bf16.mxu0 %v1000
        %1279 = vmatpush1.bf16.msra.mxu0 %v999
        %1280 = vmatprep.subr.bf16.mxu0 %v992
        %1281 = vmatpush1.bf16.msra.mxu0 %v991
        %1282 = vmatprep.subr.bf16.mxu0 %v984
        %1283 = vmatpush1.bf16.msra.mxu0 %v983
        %1284 = vmatprep.subr.bf16.mxu0 %v976
        %1285 = vmatpush1.bf16.msra.mxu0 %v975
        %1286 = vmatprep.subr.bf16.mxu0 %v1096
        %1287 = vmatpush2.bf16.msra.mxu0 %v1095
        %1288 = vmatprep.subr.bf16.mxu0 %v1088
        %1289 = vmatpush2.bf16.msra.mxu0 %v1087
        %1290 = vmatprep.subr.bf16.mxu0 %v1080
        %1291 = vmatpush2.bf16.msra.mxu0 %v1079
        %1292 = vmatprep.subr.bf16.mxu0 %v1072
        %1293 = vmatpush2.bf16.msra.mxu0 %v1071
        %1294 = vmatprep.subr.bf16.mxu0 %v1064
        %1295 = vmatpush2.bf16.msra.mxu0 %v1063
        %1296 = vmatprep.subr.bf16.mxu0 %v1056
        %1297 = vmatpush2.bf16.msra.mxu0 %v1055
        %1298 = vmatprep.subr.bf16.mxu0 %v1048
        %1299 = vmatpush2.bf16.msra.mxu0 %v1047
        %1300 = vmatprep.subr.bf16.mxu0 %v1040
        %1301 = vmatpush2.bf16.msra.mxu0 %v1039
        %1302 = vmatprep.mubr.bf16.mxu0 %v586
        %1303 = vmatmul.mubr.bf16.gmra.mxu0 %v585
        %v1304 = vpop.f32.mrf.mxu0
        %v1305 = vadd.f32 %v580, %v1304
        %v1306 = vpop.f32.mrf.mxu0
        %v1307 = vadd.f32 %v580, %v1306
        %v1308 = vpop.f32.mrf.mxu0
        %v1309 = vpop.f32.mrf.mxu0
        %1310 = vdwg.mxu0
        %1311 = vmatprep.subr.bf16.mxu0 %v1034
        %1312 = vmatpush1.bf16.msra.mxu0 %v1033
        %1313 = vmatprep.subr.bf16.mxu0 %v1026
        %1314 = vmatpush1.bf16.msra.mxu0 %v1025
        %1315 = vmatprep.subr.bf16.mxu0 %v1018
        %1316 = vmatpush1.bf16.msra.mxu0 %v1017
        %1317 = vmatprep.subr.bf16.mxu0 %v1010
        %1318 = vmatpush1.bf16.msra.mxu0 %v1009
        %1319 = vmatprep.subr.bf16.mxu0 %v1002
        %1320 = vmatpush1.bf16.msra.mxu0 %v1001
        %1321 = vmatprep.subr.bf16.mxu0 %v994
        %1322 = vmatpush1.bf16.msra.mxu0 %v993
        %1323 = vmatprep.subr.bf16.mxu0 %v986
        %1324 = vmatpush1.bf16.msra.mxu0 %v985
        %1325 = vmatprep.subr.bf16.mxu0 %v978
        %1326 = vmatpush1.bf16.msra.mxu0 %v977
        %1327 = vmatprep.subr.bf16.mxu0 %v1098
        %1328 = vmatpush2.bf16.msra.mxu0 %v1097
        %1329 = vmatprep.subr.bf16.mxu0 %v1090
        %1330 = vmatpush2.bf16.msra.mxu0 %v1089
        %1331 = vmatprep.subr.bf16.mxu0 %v1082
        %1332 = vmatpush2.bf16.msra.mxu0 %v1081
        %1333 = vmatprep.subr.bf16.mxu0 %v1074
        %1334 = vmatpush2.bf16.msra.mxu0 %v1073
        %1335 = vmatprep.subr.bf16.mxu0 %v1066
        %1336 = vmatpush2.bf16.msra.mxu0 %v1065
        %1337 = vmatprep.subr.bf16.mxu0 %v1058
        %1338 = vmatpush2.bf16.msra.mxu0 %v1057
        %1339 = vmatprep.subr.bf16.mxu0 %v1050
        %1340 = vmatpush2.bf16.msra.mxu0 %v1049
        %1341 = vmatprep.subr.bf16.mxu0 %v1042
        %1342 = vmatpush2.bf16.msra.mxu0 %v1041
        %1343 = vmatprep.mubr.bf16.mxu0 %v586
        %1344 = vmatmul.mubr.bf16.gmra.mxu0 %v585
        %v1345 = vpop.f32.mrf.mxu0
        %v1346 = vadd.f32 %v580, %v1345
        %v1347 = vpop.f32.mrf.mxu0
        %v1348 = vadd.f32 %v580, %v1347
        %v1349 = vpop.f32.mrf.mxu0
        %v1350 = vpop.f32.mrf.mxu0
        %1351 = vdwg.mxu0
        %1352 = vmatprep.subr.bf16.mxu0 %v1036
        %1353 = vmatpush1.bf16.msra.mxu0 %v1035
        %1354 = vmatprep.subr.bf16.mxu0 %v1028
        %1355 = vmatpush1.bf16.msra.mxu0 %v1027
        %1356 = vmatprep.subr.bf16.mxu0 %v1020
        %1357 = vmatpush1.bf16.msra.mxu0 %v1019
        %1358 = vmatprep.subr.bf16.mxu0 %v1012
        %1359 = vmatpush1.bf16.msra.mxu0 %v1011
        %1360 = vmatprep.subr.bf16.mxu0 %v1004
        %1361 = vmatpush1.bf16.msra.mxu0 %v1003
        %1362 = vmatprep.subr.bf16.mxu0 %v996
        %1363 = vmatpush1.bf16.msra.mxu0 %v995
        %1364 = vmatprep.subr.bf16.mxu0 %v988
        %1365 = vmatpush1.bf16.msra.mxu0 %v987
        %1366 = vmatprep.subr.bf16.mxu0 %v980
        %1367 = vmatpush1.bf16.msra.mxu0 %v979
        %1368 = vmatprep.subr.bf16.mxu0 %v1100
        %1369 = vmatpush2.bf16.msra.mxu0 %v1099
        %1370 = vmatprep.subr.bf16.mxu0 %v1092
        %1371 = vmatpush2.bf16.msra.mxu0 %v1091
        %1372 = vmatprep.subr.bf16.mxu0 %v1084
        %1373 = vmatpush2.bf16.msra.mxu0 %v1083
        %1374 = vmatprep.subr.bf16.mxu0 %v1076
        %1375 = vmatpush2.bf16.msra.mxu0 %v1075
        %1376 = vmatprep.subr.bf16.mxu0 %v1068
        %1377 = vmatpush2.bf16.msra.mxu0 %v1067
        %1378 = vmatprep.subr.bf16.mxu0 %v1060
        %1379 = vmatpush2.bf16.msra.mxu0 %v1059
        %1380 = vmatprep.subr.bf16.mxu0 %v1052
        %1381 = vmatpush2.bf16.msra.mxu0 %v1051
        %1382 = vmatprep.subr.bf16.mxu0 %v1044
        %1383 = vmatpush2.bf16.msra.mxu0 %v1043
        %1384 = vmatprep.mubr.bf16.mxu0 %v586
        %1385 = vmatmul.mubr.bf16.gmra.mxu0 %v585
        %v1386 = vpop.f32.mrf.mxu0
        %v1387 = vadd.f32 %v580, %v1386
        %v1388 = vpop.f32.mrf.mxu0
        %v1389 = vadd.f32 %v580, %v1388
        %v1390 = vpop.f32.mrf.mxu0
        %v1391 = vpop.f32.mrf.mxu0
        %1392 = vdwg.mxu0
        %v1393 = vmax.f32 %v1264, 0.0
        %v1394 = vmax.f32 %v1266, 0.0
        %v1395 = vmax.f32 %v1305, 0.0
        %v1396 = vmax.f32 %v1307, 0.0
        %v1397 = vmax.f32 %v1346, 0.0
        %v1398 = vmax.f32 %v1348, 0.0
        %v1399 = vmax.f32 %v1387, 0.0
        %v1400 = vmax.f32 %v1389, 0.0
        %1401 = vst [vmem:[%s445] sm:$0xff] %v1393
        %1402 = vst [vmem:[%s445 + $0x8] sm:$0xff] %v1394
        %1403 = vst [vmem:[%s445 + $0x10] sm:$0xff] %v1395
        %1404 = vst [vmem:[%s445 + $0x18] sm:$0xff] %v1396
        %1405 = vst [vmem:[%s445 + $0x20] sm:$0xff] %v1397
        %1406 = vst [vmem:[%s445 + $0x28] sm:$0xff] %v1398
        %1407 = vst [vmem:[%s445 + $0x30] sm:$0xff] %v1399
        %1408 = vst [vmem:[%s445 + $0x38] sm:$0xff] %v1400
        %s1409 = smul.u32 8, %s14
        %p1410 = scmp.lt.s32.totalorder %s1409, 15
        %s1411 = scalar_select %p1410, %s1409, 15
        %s1412 = smul.addr %s1411, 8
        %s1413 = scalar_lea.vmem %s3, %s1412
        // Predicated region
        $region56: #{generator_forward.8} parent=50 // pred_check
          %p1414 = pneg %p100
        $region57: #{generator_forward.8} parent=50 // pred_check_branch
          %1416 = sbr.rel (%p1414) target = $region59
        $region58: #{generator_forward.8} parent=50 // pred_region
          %s1417 = smul.u32 8, %s14
        $region59: #{generator_forward.8} parent=50 // pred_fallthru
          _
      $region51: #{generator_forward.8} parent=5 // pred_fallthru
        _
      %p1418 = scmp.le.s32.totalorder 2, %s9
      // Predicated region
      $region60: #{generator_forward.8} parent=5 // pred_check
        %p1419 = pneg %p1418
      $region61: #{generator_forward.8} parent=5 // pred_check_branch
        %1421 = sbr.rel (%p1419) target = $region63
      $region62: #{generator_forward.8} parent=5 // pred_region
        %s1422 = ssub.s32 %s9, 2
        // Predicated region
        $region64: #{generator_forward.8} parent=62 // pred_check
          %p1423 = pneg %p106
        $region65: #{generator_forward.8} parent=62 // pred_check_branch
          %1425 = sbr.rel (%p1423) target = $region67
        $region66: #{generator_forward.8} parent=62 // pred_region
          %s1426 = smul.u32 8, %s15
          %p1427 = scmp.lt.s32.totalorder %s1426, 15
          %s1428 = scalar_select %p1427, %s1426, 15
          %s1429 = smul.addr %s1428, 8
          %s1430 = scalar_lea.vmem %s3, %s1429
        $region67: #{generator_forward.8} parent=62 // pred_fallthru
          _
      $region63: #{generator_forward.8} parent=5 // pred_fallthru
        _
    $region6: #{generator_forward.8} parent=1 // loop_footer
      %s13 = sadd.s32 1, %s9
    $region7: #{generator_forward.8} parent=1 // loop_footer_branch
      %8 = sbr.rel target = $region3
    $region8: #{generator_forward.8} parent=1 // loop_exit
      _

// kernel: generator_forward.9
$region0: #{generator_forward.9}
  #allocation0 [shape = 'u32[]', space=smem, size = 0x4, offset = 0x4, fixed_abs, tag = 'smem constant byte address 0x4 - core index']
  #allocation1 [shape = 'u32[144,128]{1,0:T(1,128)}', space=vmem, size = 0x12000, scoped, tag = 'internal scratch']
  %s0 = inlined_call_operand.vmem [shape: bf16[3,128], index: 0, kind: input, shape index: {}]
  %s1 = inlined_call_operand.vmem [shape: bf16[128,8192], index: 1, kind: input, shape index: {}]
  %s2 = inlined_call_operand.vmem [shape: f32[3,1], index: 2, kind: input, shape index: {}]
  %s3 = inlined_call_operand.vmem [shape: f32[3,8192], index: 3, kind: output, shape index: {}]
  %s4 = sld [smem:[#allocation0]]
  $region68: #{generator_forward.9} parent=0
    _
  %s6 = ssub.s32 1, %s4
  %s7 = scalar_select 0, %s6, %s4
  $region1: #{generator_forward.9} parent=0
    #allocation2 [shape = 'u8[1048576]{0}', space=vmem, size = 0x100000, scoped, tag = 'input window, operand 1']
    loop: start=0, step=1, limit=6
    $region2: #{generator_forward.9} parent=1 // loop_pre_header
      _
    $region3: #{generator_forward.9} parent=1 // loop_header
      %s9 = sphi 0, %s13
      %p10 = scmp.ge.s32.totalorder %s9, 6
      %s17 = sphi 0, %s17
      %s19 = sphi 0, %s17
      %s20 = sphi 0, %s19
      %s34 = sphi 0, %s20
      %s40 = sphi 0, %s42
      %s43 = sphi 0, %s40
      %s44 = sphi 0, %s43
      %s60 = sphi 0, %s44
      %s64 = sphi 0, %s64
      %s66 = sphi 0, %s64
      %s67 = sphi 0, %s66
      %s81 = sphi 0, %s67
      %s87 = sphi 0, %s89
      %s90 = sphi 0, %s87
      %s91 = sphi 0, %s90
      %s107 = sphi 0, %s91
    $region4: #{generator_forward.9} parent=1 // loop_header_branch
      %12 = sbr.rel (%p10) target = $region8
    $region5: #{generator_forward.9} parent=1 // loop_body
      %s14 = ssub.s32 %s9, 1
      %s15 = ssub.s32 %s9, 2
      %s16 = sadd.s32 %s9, 1
      %s18 = sadd.s32 %s17, 1
      %p21 = scmp.eq.s32.totalorder %s9, 3
      %p22 = scmp.ne.s32.totalorder %s17, %s19
      %p23 = scmp.eq.s32.totalorder %s9, 0
      %p24 = por %p22, %p23
      %p25 = scmp.ne.s32.totalorder %s17, %s19
      %p26 = scmp.eq.s32.totalorder %s14, 3
      %p27 = por %p25, %p26
      %p28 = scmp.ne.s32.totalorder %s19, %s20
      %p29 = scmp.eq.s32.totalorder %s14, 0
      %p30 = por %p28, %p29
      %p31 = scmp.ne.s32.totalorder %s19, %s20
      %p32 = scmp.eq.s32.totalorder %s15, 3
      %p33 = por %p31, %p32
      %p35 = scmp.ne.s32.totalorder %s20, %s34
      %p36 = scmp.eq.s32.totalorder %s15, 0
      %p37 = por %p35, %p36
      %s38 = ssub.s32 %s9, %s16
      %p39 = scmp.eq.s32.totalorder %s38, 0
      %s41 = sadd.s32 %s40, 1
      %s42 = scalar_select %p39, %s40, %s41
      %p45 = pneg %p39
      %p46 = scmp.eq.s32.totalorder %s9, 3
      %p47 = por %p45, %p46
      %p48 = scmp.ne.s32.totalorder %s40, %s43
      %p49 = scmp.eq.s32.totalorder %s9, 0
      %p50 = por %p48, %p49
      %p51 = scmp.ne.s32.totalorder %s40, %s43
      %p52 = scmp.eq.s32.totalorder %s14, 3
      %p53 = por %p51, %p52
      %p54 = scmp.ne.s32.totalorder %s43, %s44
      %p55 = scmp.eq.s32.totalorder %s14, 0
      %p56 = por %p54, %p55
      %p57 = scmp.ne.s32.totalorder %s43, %s44
      %p58 = scmp.eq.s32.totalorder %s15, 3
      %p59 = por %p57, %p58
      %p61 = scmp.ne.s32.totalorder %s44, %s60
      %p62 = scmp.eq.s32.totalorder %s15, 0
      %p63 = por %p61, %p62
      %s65 = sadd.s32 %s64, 1
      %p68 = scmp.eq.s32.totalorder %s9, 3
      %p69 = scmp.ne.s32.totalorder %s64, %s66
      %p70 = scmp.eq.s32.totalorder %s9, 0
      %p71 = por %p69, %p70
      %p72 = scmp.ne.s32.totalorder %s64, %s66
      %p73 = scmp.eq.s32.totalorder %s14, 3
      %p74 = por %p72, %p73
      %p75 = scmp.ne.s32.totalorder %s66, %s67
      %p76 = scmp.eq.s32.totalorder %s14, 0
      %p77 = por %p75, %p76
      %p78 = scmp.ne.s32.totalorder %s66, %s67
      %p79 = scmp.eq.s32.totalorder %s15, 3
      %p80 = por %p78, %p79
      %p82 = scmp.ne.s32.totalorder %s67, %s81
      %p83 = scmp.eq.s32.totalorder %s15, 0
      %p84 = por %p82, %p83
      %s85 = ssub.s32 %s9, %s16
      %p86 = scmp.eq.s32.totalorder %s85, 0
      %s88 = sadd.s32 %s87, 1
      %s89 = scalar_select %p86, %s87, %s88
      %p92 = pneg %p86
      %p93 = scmp.eq.s32.totalorder %s9, 3
      %p94 = por %p92, %p93
      %p95 = scmp.ne.s32.totalorder %s87, %s90
      %p96 = scmp.eq.s32.totalorder %s9, 0
      %p97 = por %p95, %p96
      %p98 = scmp.ne.s32.totalorder %s87, %s90
      %p99 = scmp.eq.s32.totalorder %s14, 3
      %p100 = por %p98, %p99
      %p101 = scmp.ne.s32.totalorder %s90, %s91
      %p102 = scmp.eq.s32.totalorder %s14, 0
      %p103 = por %p101, %p102
      %p104 = scmp.ne.s32.totalorder %s90, %s91
      %p105 = scmp.eq.s32.totalorder %s15, 3
      %p106 = por %p104, %p105
      %p108 = scmp.ne.s32.totalorder %s91, %s107
      %p109 = scmp.eq.s32.totalorder %s15, 0
      %p110 = por %p108, %p109
      %p111 = scmp.le.s32.totalorder 1, %s9
      %p112 = scmp.lt.s32.totalorder %s9, 5
      %p113 = pnand %p111, %p112
      %p114 = pneg %p113
      // Predicated region
      $region9: #{generator_forward.9} parent=5 // pred_check
        _
      $region10: #{generator_forward.9} parent=5 // pred_check_branch
        %116 = sbr.rel (%p113) target = $region12
      $region11: #{generator_forward.9} parent=5 // pred_region
        %s117 = ssub.s32 %s9, 1
        // Predicated region
        $region13: #{generator_forward.9} parent=11 // pred_check
          %p118 = pneg %p30
        $region14: #{generator_forward.9} parent=11 // pred_check_branch
          %120 = sbr.rel (%p118) target = $region16
        $region15: #{generator_forward.9} parent=11 // pred_region
          _
        $region16: #{generator_forward.9} parent=11 // pred_fallthru
          _
        // Predicated region
        $region17: #{generator_forward.9} parent=11 // pred_check
          %p121 = pneg %p77
        $region18: #{generator_forward.9} parent=11 // pred_check_branch
          %123 = sbr.rel (%p121) target = $region20
        $region19: #{generator_forward.9} parent=11 // pred_region
          _
        $region20: #{generator_forward.9} parent=11 // pred_fallthru
          _
      $region12: #{generator_forward.9} parent=5 // pred_fallthru
        _
      %p124 = scmp.lt.s32.totalorder %s9, 4
      // Predicated region
      $region21: #{generator_forward.9} parent=5 // pred_check
        %p125 = pneg %p124
      $region22: #{generator_forward.9} parent=5 // pred_check_branch
        %127 = sbr.rel (%p125) target = $region24
      $region23: #{generator_forward.9} parent=5 // pred_region
        // Predicated region
        $region25: #{generator_forward.9} parent=23 // pred_check
          %p128 = pneg %p50
        $region26: #{generator_forward.9} parent=23 // pred_check_branch
          %130 = sbr.rel (%p128) target = $region28
        $region27: #{generator_forward.9} parent=23 // pred_region
          %s131 = sand.u32 %s40, 1
          %s132 = sand.u32 %s40, 1
          %s133 = smul.addr %s132, 1024
          %s134 = scalar_lea.vmem [#allocation2], %s133
          %s135 = smul.u32 16, %s9
          %s136 = smul.addr %s135, 4
          %s137 = scalar_lea.vmem %s1, %s136
          // Predicated region
          $region29: #{generator_forward.9} parent=27 // pred_check
            _
          $region30: #{generator_forward.9} parent=27 // pred_check_branch
            %139 = sbr.rel (0) target = $region32
          $region31: #{generator_forward.9} parent=27 // pred_region
            // Predicated region
            $region33: #{generator_forward.9} parent=31 // pred_check
              _
            $region34: #{generator_forward.9} parent=31 // pred_check_branch
              %141 = sbr.rel (0) target = $region36
            $region35: #{generator_forward.9} parent=31 // pred_region
              loop: start=0, step=1, limit=1
              $region37: #{generator_forward.9} parent=35 // loop_pre_header
                _
              $region38: #{generator_forward.9} parent=35 // loop_header
                %s143 = sphi 0, %s147
                %p144 = scmp.ge.s32.totalorder %s143, 1
                %s148 = sphi %s137, %s137
                %s149 = sphi %s134, %s134
              $region39: #{generator_forward.9} parent=35 // loop_header_branch
                %146 = sbr.rel (%p144) target = $region43
              $region40: #{generator_forward.9} parent=35 // loop_body
                %v150 = vld [vmem:[%s148] sm:$0xff]
                %151 = vst [vmem:[%s149] sm:$0xff] %v150
                %v152 = vld [vmem:[%s148 + $0x8] sm:$0xff]
                %153 = vst [vmem:[%s149 + $0x8] sm:$0xff] %v152
                %v154 = vld [vmem:[%s148 + $0x10] sm:$0xff]
                %155 = vst [vmem:[%s149 + $0x10] sm:$0xff] %v154
                %v156 = vld [vmem:[%s148 + $0x18] sm:$0xff]
                %157 = vst [vmem:[%s149 + $0x18] sm:$0xff] %v156
                %v158 = vld [vmem:[%s148 + $0x20] sm:$0xff]
                %159 = vst [vmem:[%s149 + $0x20] sm:$0xff] %v158
                %v160 = vld [vmem:[%s148 + $0x28] sm:$0xff]
                %161 = vst [vmem:[%s149 + $0x28] sm:$0xff] %v160
                %v162 = vld [vmem:[%s148 + $0x30] sm:$0xff]
                %163 = vst [vmem:[%s149 + $0x30] sm:$0xff] %v162
                %v164 = vld [vmem:[%s148 + $0x38] sm:$0xff]
                %165 = vst [vmem:[%s149 + $0x38] sm:$0xff] %v164
                %v166 = vld [vmem:[%s148 + $0x100] sm:$0xff]
                %167 = vst [vmem:[%s149 + $0x40] sm:$0xff] %v166
                %v168 = vld [vmem:[%s148 + $0x108] sm:$0xff]
                %169 = vst [vmem:[%s149 + $0x48] sm:$0xff] %v168
                %v170 = vld [vmem:[%s148 + $0x110] sm:$0xff]
                %171 = vst [vmem:[%s149 + $0x50] sm:$0xff] %v170
                %v172 = vld [vmem:[%s148 + $0x118] sm:$0xff]
                %173 = vst [vmem:[%s149 + $0x58] sm:$0xff] %v172
                %v174 = vld [vmem:[%s148 + $0x120] sm:$0xff]
                %175 = vst [vmem:[%s149 + $0x60] sm:$0xff] %v174
                %v176 = vld [vmem:[%s148 + $0x128] sm:$0xff]
                %177 = vst [vmem:[%s149 + $0x68] sm:$0xff] %v176
                %v178 = vld [vmem:[%s148 + $0x130] sm:$0xff]
                %179 = vst [vmem:[%s149 + $0x70] sm:$0xff] %v178
                %v180 = vld [vmem:[%s148 + $0x138] sm:$0xff]
                %181 = vst [vmem:[%s149 + $0x78] sm:$0xff] %v180
                %v182 = vld [vmem:[%s148 + $0x200] sm:$0xff]
                %183 = vst [vmem:[%s149 + $0x80] sm:$0xff] %v182
                %v184 = vld [vmem:[%s148 + $0x208] sm:$0xff]
                %185 = vst [vmem:[%s149 + $0x88] sm:$0xff] %v184
                %v186 = vld [vmem:[%s148 + $0x210] sm:$0xff]
                %187 = vst [vmem:[%s149 + $0x90] sm:$0xff] %v186
                %v188 = vld [vmem:[%s148 + $0x218] sm:$0xff]
                %189 = vst [vmem:[%s149 + $0x98] sm:$0xff] %v188
                %v190 = vld [vmem:[%s148 + $0x220] sm:$0xff]
                %191 = vst [vmem:[%s149 + $0xa0] sm:$0xff] %v190
                %v192 = vld [vmem:[%s148 + $0x228] sm:$0xff]
                %193 = vst [vmem:[%s149 + $0xa8] sm:$0xff] %v192
                %v194 = vld [vmem:[%s148 + $0x230] sm:$0xff]
                %195 = vst [vmem:[%s149 + $0xb0] sm:$0xff] %v194
                %v196 = vld [vmem:[%s148 + $0x238] sm:$0xff]
                %197 = vst [vmem:[%s149 + $0xb8] sm:$0xff] %v196
                %v198 = vld [vmem:[%s148 + $0x300] sm:$0xff]
                %199 = vst [vmem:[%s149 + $0xc0] sm:$0xff] %v198
                %v200 = vld [vmem:[%s148 + $0x308] sm:$0xff]
                %201 = vst [vmem:[%s149 + $0xc8] sm:$0xff] %v200
                %v202 = vld [vmem:[%s148 + $0x310] sm:$0xff]
                %203 = vst [vmem:[%s149 + $0xd0] sm:$0xff] %v202
                %v204 = vld [vmem:[%s148 + $0x318] sm:$0xff]
                %205 = vst [vmem:[%s149 + $0xd8] sm:$0xff] %v204
                %v206 = vld [vmem:[%s148 + $0x320] sm:$0xff]
                %207 = vst [vmem:[%s149 + $0xe0] sm:$0xff] %v206
                %v208 = vld [vmem:[%s148 + $0x328] sm:$0xff]
                %209 = vst [vmem:[%s149 + $0xe8] sm:$0xff] %v208
                %v210 = vld [vmem:[%s148 + $0x330] sm:$0xff]
                %211 = vst [vmem:[%s149 + $0xf0] sm:$0xff] %v210
                %v212 = vld [vmem:[%s148 + $0x338] sm:$0xff]
                %213 = vst [vmem:[%s149 + $0xf8] sm:$0xff] %v212
                %v214 = vld [vmem:[%s148 + $0x400] sm:$0xff]
                %215 = vst [vmem:[%s149 + $0x100] sm:$0xff] %v214
                %v216 = vld [vmem:[%s148 + $0x408] sm:$0xff]
                %217 = vst [vmem:[%s149 + $0x108] sm:$0xff] %v216
                %v218 = vld [vmem:[%s148 + $0x410] sm:$0xff]
                %219 = vst [vmem:[%s149 + $0x110] sm:$0xff] %v218
                %v220 = vld [vmem:[%s148 + $0x418] sm:$0xff]
                %221 = vst [vmem:[%s149 + $0x118] sm:$0xff] %v220
                %v222 = vld [vmem:[%s148 + $0x420] sm:$0xff]
                %223 = vst [vmem:[%s149 + $0x120] sm:$0xff] %v222
                %v224 = vld [vmem:[%s148 + $0x428] sm:$0xff]
                %225 = vst [vmem:[%s149 + $0x128] sm:$0xff] %v224
                %v226 = vld [vmem:[%s148 + $0x430] sm:$0xff]
                %227 = vst [vmem:[%s149 + $0x130] sm:$0xff] %v226
                %v228 = vld [vmem:[%s148 + $0x438] sm:$0xff]
                %229 = vst [vmem:[%s149 + $0x138] sm:$0xff] %v228
                %v230 = vld [vmem:[%s148 + $0x500] sm:$0xff]
                %231 = vst [vmem:[%s149 + $0x140] sm:$0xff] %v230
                %v232 = vld [vmem:[%s148 + $0x508] sm:$0xff]
                %233 = vst [vmem:[%s149 + $0x148] sm:$0xff] %v232
                %v234 = vld [vmem:[%s148 + $0x510] sm:$0xff]
                %235 = vst [vmem:[%s149 + $0x150] sm:$0xff] %v234
                %v236 = vld [vmem:[%s148 + $0x518] sm:$0xff]
                %237 = vst [vmem:[%s149 + $0x158] sm:$0xff] %v236
                %v238 = vld [vmem:[%s148 + $0x520] sm:$0xff]
                %239 = vst [vmem:[%s149 + $0x160] sm:$0xff] %v238
                %v240 = vld [vmem:[%s148 + $0x528] sm:$0xff]
                %241 = vst [vmem:[%s149 + $0x168] sm:$0xff] %v240
                %v242 = vld [vmem:[%s148 + $0x530] sm:$0xff]
                %243 = vst [vmem:[%s149 + $0x170] sm:$0xff] %v242
                %v244 = vld [vmem:[%s148 + $0x538] sm:$0xff]
                %245 = vst [vmem:[%s149 + $0x178] sm:$0xff] %v244
                %v246 = vld [vmem:[%s148 + $0x600] sm:$0xff]
                %247 = vst [vmem:[%s149 + $0x180] sm:$0xff] %v246
                %v248 = vld [vmem:[%s148 + $0x608] sm:$0xff]
                %249 = vst [vmem:[%s149 + $0x188] sm:$0xff] %v248
                %v250 = vld [vmem:[%s148 + $0x610] sm:$0xff]
                %251 = vst [vmem:[%s149 + $0x190] sm:$0xff] %v250
                %v252 = vld [vmem:[%s148 + $0x618] sm:$0xff]
                %253 = vst [vmem:[%s149 + $0x198] sm:$0xff] %v252
                %v254 = vld [vmem:[%s148 + $0x620] sm:$0xff]
                %255 = vst [vmem:[%s149 + $0x1a0] sm:$0xff] %v254
                %v256 = vld [vmem:[%s148 + $0x628] sm:$0xff]
                %257 = vst [vmem:[%s149 + $0x1a8] sm:$0xff] %v256
                %v258 = vld [vmem:[%s148 + $0x630] sm:$0xff]
                %259 = vst [vmem:[%s149 + $0x1b0] sm:$0xff] %v258
                %v260 = vld [vmem:[%s148 + $0x638] sm:$0xff]
                %261 = vst [vmem:[%s149 + $0x1b8] sm:$0xff] %v260
                %v262 = vld [vmem:[%s148 + $0x700] sm:$0xff]
                %263 = vst [vmem:[%s149 + $0x1c0] sm:$0xff] %v262
                %v264 = vld [vmem:[%s148 + $0x708] sm:$0xff]
                %265 = vst [vmem:[%s149 + $0x1c8] sm:$0xff] %v264
                %v266 = vld [vmem:[%s148 + $0x710] sm:$0xff]
                %267 = vst [vmem:[%s149 + $0x1d0] sm:$0xff] %v266
                %v268 = vld [vmem:[%s148 + $0x718] sm:$0xff]
                %269 = vst [vmem:[%s149 + $0x1d8] sm:$0xff] %v268
                %v270 = vld [vmem:[%s148 + $0x720] sm:$0xff]
                %271 = vst [vmem:[%s149 + $0x1e0] sm:$0xff] %v270
                %v272 = vld [vmem:[%s148 + $0x728] sm:$0xff]
                %273 = vst [vmem:[%s149 + $0x1e8] sm:$0xff] %v272
                %v274 = vld [vmem:[%s148 + $0x730] sm:$0xff]
                %275 = vst [vmem:[%s149 + $0x1f0] sm:$0xff] %v274
                %v276 = vld [vmem:[%s148 + $0x738] sm:$0xff]
                %277 = vst [vmem:[%s149 + $0x1f8] sm:$0xff] %v276
                %v278 = vld [vmem:[%s148 + $0x800] sm:$0xff]
                %279 = vst [vmem:[%s149 + $0x200] sm:$0xff] %v278
                %v280 = vld [vmem:[%s148 + $0x808] sm:$0xff]
                %281 = vst [vmem:[%s149 + $0x208] sm:$0xff] %v280
                %v282 = vld [vmem:[%s148 + $0x810] sm:$0xff]
                %283 = vst [vmem:[%s149 + $0x210] sm:$0xff] %v282
                %v284 = vld [vmem:[%s148 + $0x818] sm:$0xff]
                %285 = vst [vmem:[%s149 + $0x218] sm:$0xff] %v284
                %v286 = vld [vmem:[%s148 + $0x820] sm:$0xff]
                %287 = vst [vmem:[%s149 + $0x220] sm:$0xff] %v286
                %v288 = vld [vmem:[%s148 + $0x828] sm:$0xff]
                %289 = vst [vmem:[%s149 + $0x228] sm:$0xff] %v288
                %v290 = vld [vmem:[%s148 + $0x830] sm:$0xff]
                %291 = vst [vmem:[%s149 + $0x230] sm:$0xff] %v290
                %v292 = vld [vmem:[%s148 + $0x838] sm:$0xff]
                %293 = vst [vmem:[%s149 + $0x238] sm:$0xff] %v292
                %v294 = vld [vmem:[%s148 + $0x900] sm:$0xff]
                %295 = vst [vmem:[%s149 + $0x240] sm:$0xff] %v294
                %v296 = vld [vmem:[%s148 + $0x908] sm:$0xff]
                %297 = vst [vmem:[%s149 + $0x248] sm:$0xff] %v296
                %v298 = vld [vmem:[%s148 + $0x910] sm:$0xff]
                %299 = vst [vmem:[%s149 + $0x250] sm:$0xff] %v298
                %v300 = vld [vmem:[%s148 + $0x918] sm:$0xff]
                %301 = vst [vmem:[%s149 + $0x258] sm:$0xff] %v300
                %v302 = vld [vmem:[%s148 + $0x920] sm:$0xff]
                %303 = vst [vmem:[%s149 + $0x260] sm:$0xff] %v302
                %v304 = vld [vmem:[%s148 + $0x928] sm:$0xff]
                %305 = vst [vmem:[%s149 + $0x268] sm:$0xff] %v304
                %v306 = vld [vmem:[%s148 + $0x930] sm:$0xff]
                %307 = vst [vmem:[%s149 + $0x270] sm:$0xff] %v306
                %v308 = vld [vmem:[%s148 + $0x938] sm:$0xff]
                %309 = vst [vmem:[%s149 + $0x278] sm:$0xff] %v308
                %v310 = vld [vmem:[%s148 + $0xa00] sm:$0xff]
                %311 = vst [vmem:[%s149 + $0x280] sm:$0xff] %v310
                %v312 = vld [vmem:[%s148 + $0xa08] sm:$0xff]
                %313 = vst [vmem:[%s149 + $0x288] sm:$0xff] %v312
                %v314 = vld [vmem:[%s148 + $0xa10] sm:$0xff]
                %315 = vst [vmem:[%s149 + $0x290] sm:$0xff] %v314
                %v316 = vld [vmem:[%s148 + $0xa18] sm:$0xff]
                %317 = vst [vmem:[%s149 + $0x298] sm:$0xff] %v316
                %v318 = vld [vmem:[%s148 + $0xa20] sm:$0xff]
                %319 = vst [vmem:[%s149 + $0x2a0] sm:$0xff] %v318
                %v320 = vld [vmem:[%s148 + $0xa28] sm:$0xff]
                %321 = vst [vmem:[%s149 + $0x2a8] sm:$0xff] %v320
                %v322 = vld [vmem:[%s148 + $0xa30] sm:$0xff]
                %323 = vst [vmem:[%s149 + $0x2b0] sm:$0xff] %v322
                %v324 = vld [vmem:[%s148 + $0xa38] sm:$0xff]
                %325 = vst [vmem:[%s149 + $0x2b8] sm:$0xff] %v324
                %v326 = vld [vmem:[%s148 + $0xb00] sm:$0xff]
                %327 = vst [vmem:[%s149 + $0x2c0] sm:$0xff] %v326
                %v328 = vld [vmem:[%s148 + $0xb08] sm:$0xff]
                %329 = vst [vmem:[%s149 + $0x2c8] sm:$0xff] %v328
                %v330 = vld [vmem:[%s148 + $0xb10] sm:$0xff]
                %331 = vst [vmem:[%s149 + $0x2d0] sm:$0xff] %v330
                %v332 = vld [vmem:[%s148 + $0xb18] sm:$0xff]
                %333 = vst [vmem:[%s149 + $0x2d8] sm:$0xff] %v332
                %v334 = vld [vmem:[%s148 + $0xb20] sm:$0xff]
                %335 = vst [vmem:[%s149 + $0x2e0] sm:$0xff] %v334
                %v336 = vld [vmem:[%s148 + $0xb28] sm:$0xff]
                %337 = vst [vmem:[%s149 + $0x2e8] sm:$0xff] %v336
                %v338 = vld [vmem:[%s148 + $0xb30] sm:$0xff]
                %339 = vst [vmem:[%s149 + $0x2f0] sm:$0xff] %v338
                %v340 = vld [vmem:[%s148 + $0xb38] sm:$0xff]
                %341 = vst [vmem:[%s149 + $0x2f8] sm:$0xff] %v340
                %v342 = vld [vmem:[%s148 + $0xc00] sm:$0xff]
                %343 = vst [vmem:[%s149 + $0x300] sm:$0xff] %v342
                %v344 = vld [vmem:[%s148 + $0xc08] sm:$0xff]
                %345 = vst [vmem:[%s149 + $0x308] sm:$0xff] %v344
                %v346 = vld [vmem:[%s148 + $0xc10] sm:$0xff]
                %347 = vst [vmem:[%s149 + $0x310] sm:$0xff] %v346
                %v348 = vld [vmem:[%s148 + $0xc18] sm:$0xff]
                %349 = vst [vmem:[%s149 + $0x318] sm:$0xff] %v348
                %v350 = vld [vmem:[%s148 + $0xc20] sm:$0xff]
                %351 = vst [vmem:[%s149 + $0x320] sm:$0xff] %v350
                %v352 = vld [vmem:[%s148 + $0xc28] sm:$0xff]
                %353 = vst [vmem:[%s149 + $0x328] sm:$0xff] %v352
                %v354 = vld [vmem:[%s148 + $0xc30] sm:$0xff]
                %355 = vst [vmem:[%s149 + $0x330] sm:$0xff] %v354
                %v356 = vld [vmem:[%s148 + $0xc38] sm:$0xff]
                %357 = vst [vmem:[%s149 + $0x338] sm:$0xff] %v356
                %v358 = vld [vmem:[%s148 + $0xd00] sm:$0xff]
                %359 = vst [vmem:[%s149 + $0x340] sm:$0xff] %v358
                %v360 = vld [vmem:[%s148 + $0xd08] sm:$0xff]
                %361 = vst [vmem:[%s149 + $0x348] sm:$0xff] %v360
                %v362 = vld [vmem:[%s148 + $0xd10] sm:$0xff]
                %363 = vst [vmem:[%s149 + $0x350] sm:$0xff] %v362
                %v364 = vld [vmem:[%s148 + $0xd18] sm:$0xff]
                %365 = vst [vmem:[%s149 + $0x358] sm:$0xff] %v364
                %v366 = vld [vmem:[%s148 + $0xd20] sm:$0xff]
                %367 = vst [vmem:[%s149 + $0x360] sm:$0xff] %v366
                %v368 = vld [vmem:[%s148 + $0xd28] sm:$0xff]
                %369 = vst [vmem:[%s149 + $0x368] sm:$0xff] %v368
                %v370 = vld [vmem:[%s148 + $0xd30] sm:$0xff]
                %371 = vst [vmem:[%s149 + $0x370] sm:$0xff] %v370
                %v372 = vld [vmem:[%s148 + $0xd38] sm:$0xff]
                %373 = vst [vmem:[%s149 + $0x378] sm:$0xff] %v372
                %v374 = vld [vmem:[%s148 + $0xe00] sm:$0xff]
                %375 = vst [vmem:[%s149 + $0x380] sm:$0xff] %v374
                %v376 = vld [vmem:[%s148 + $0xe08] sm:$0xff]
                %377 = vst [vmem:[%s149 + $0x388] sm:$0xff] %v376
                %v378 = vld [vmem:[%s148 + $0xe10] sm:$0xff]
                %379 = vst [vmem:[%s149 + $0x390] sm:$0xff] %v378
                %v380 = vld [vmem:[%s148 + $0xe18] sm:$0xff]
                %381 = vst [vmem:[%s149 + $0x398] sm:$0xff] %v380
                %v382 = vld [vmem:[%s148 + $0xe20] sm:$0xff]
                %383 = vst [vmem:[%s149 + $0x3a0] sm:$0xff] %v382
                %v384 = vld [vmem:[%s148 + $0xe28] sm:$0xff]
                %385 = vst [vmem:[%s149 + $0x3a8] sm:$0xff] %v384
                %v386 = vld [vmem:[%s148 + $0xe30] sm:$0xff]
                %387 = vst [vmem:[%s149 + $0x3b0] sm:$0xff] %v386
                %v388 = vld [vmem:[%s148 + $0xe38] sm:$0xff]
                %389 = vst [vmem:[%s149 + $0x3b8] sm:$0xff] %v388
                %v390 = vld [vmem:[%s148 + $0xf00] sm:$0xff]
                %391 = vst [vmem:[%s149 + $0x3c0] sm:$0xff] %v390
                %v392 = vld [vmem:[%s148 + $0xf08] sm:$0xff]
                %393 = vst [vmem:[%s149 + $0x3c8] sm:$0xff] %v392
                %v394 = vld [vmem:[%s148 + $0xf10] sm:$0xff]
                %395 = vst [vmem:[%s149 + $0x3d0] sm:$0xff] %v394
                %v396 = vld [vmem:[%s148 + $0xf18] sm:$0xff]
                %397 = vst [vmem:[%s149 + $0x3d8] sm:$0xff] %v396
                %v398 = vld [vmem:[%s148 + $0xf20] sm:$0xff]
                %399 = vst [vmem:[%s149 + $0x3e0] sm:$0xff] %v398
                %v400 = vld [vmem:[%s148 + $0xf28] sm:$0xff]
                %401 = vst [vmem:[%s149 + $0x3e8] sm:$0xff] %v400
                %v402 = vld [vmem:[%s148 + $0xf30] sm:$0xff]
                %403 = vst [vmem:[%s149 + $0x3f0] sm:$0xff] %v402
                %v404 = vld [vmem:[%s148 + $0xf38] sm:$0xff]
                %405 = vst [vmem:[%s149 + $0x3f8] sm:$0xff] %v404
              $region41: #{generator_forward.9} parent=35 // loop_footer
                %s147 = sadd.s32 1, %s143
              $region42: #{generator_forward.9} parent=35 // loop_footer_branch
                %142 = sbr.rel target = $region38
              $region43: #{generator_forward.9} parent=35 // loop_exit
                _
            $region36: #{generator_forward.9} parent=31 // pred_fallthru
              _
            // Predicated region
            $region44: #{generator_forward.9} parent=31 // pred_check
              _
            $region45: #{generator_forward.9} parent=31 // pred_check_branch
              %407 = sbr.rel target = $region47
            $region46: #{generator_forward.9} parent=31 // pred_region
              _
            $region47: #{generator_forward.9} parent=31 // pred_fallthru
              _
          $region32: #{generator_forward.9} parent=27 // pred_fallthru
            _
          %408 = vnop
        $region28: #{generator_forward.9} parent=23 // pred_fallthru
          _
      $region24: #{generator_forward.9} parent=5 // pred_fallthru
        _
      %p409 = scmp.le.s32.totalorder 1, %s9
      %p410 = scmp.lt.s32.totalorder %s9, 5
      %p411 = pnand %p409, %p410
      %p412 = pneg %p411
      // Predicated region
      $region48: #{generator_forward.9} parent=5 // pred_check
        _
      $region49: #{generator_forward.9} parent=5 // pred_check_branch
        %414 = sbr.rel (%p411) target = $region51
      $region50: #{generator_forward.9} parent=5 // pred_region
        %s415 = ssub.s32 %s9, 1
        %s416 = sand.u32 %s43, 1
        %s417 = sand.u32 %s43, 1
        %s418 = smul.addr %s417, 1024
        %s419 = scalar_lea.vmem [#allocation2], %s418
        // Predicated region
        $region52: #{generator_forward.9} parent=50 // pred_check
          %p420 = pneg %p56
        $region53: #{generator_forward.9} parent=50 // pred_check_branch
          %422 = sbr.rel (%p420) target = $region55
        $region54: #{generator_forward.9} parent=50 // pred_region
          _
        $region55: #{generator_forward.9} parent=50 // pred_fallthru
          _
        %p423 = pneg %p30
        %p424 = pneg %p27
        %s425 = sand.u32 %s43, 1
        %s426 = sand.u32 %s43, 1
        %s427 = smul.addr %s426, 1024
        %s428 = scalar_lea.vmem [#allocation2], %s427
        %p429 = pneg %p56
        %p430 = pneg %p53
        %p431 = pneg %p77
        %p432 = pneg %p74
        %p433 = pneg %p103
        %p434 = pneg %p100
        %s435 = smul.u32 16, %s14
        %p436 = scmp.lt.s32.totalorder %s435, 63
        %s437 = scalar_select %p436, %s435, 63
        %s438 = smul.addr %s437, 4
        %s439 = scalar_lea.vmem %s3, %s438
        %s440 = smul.u32 16, %s14
        %s441 = smul.u32 16, %s14
        %p442 = scmp.lt.s32.totalorder %s441, 63
        %s443 = scalar_select %p442, %s441, 63
        %s444 = smul.addr %s443, 4
        %s445 = scalar_lea.vmem %s3, %s444
        %s446 = smul.u32 16, %s14
        %v448 = vld [vmem:[%s0] sm:$0x3]
        %v449 = vld [vmem:[%s419] sm:$0xff]
        %v450 = vld [vmem:[%s419 + $0x8] sm:$0xff]
        %v451 = vld [vmem:[%s419 + $0x10] sm:$0xff]
        %v452 = vld [vmem:[%s419 + $0x18] sm:$0xff]
        %v453 = vld [vmem:[%s419 + $0x20] sm:$0xff]
        %v454 = vld [vmem:[%s419 + $0x28] sm:$0xff]
        %v455 = vld [vmem:[%s419 + $0x30] sm:$0xff]
        %v456 = vld [vmem:[%s419 + $0x38] sm:$0xff]
        %v457 = vld [vmem:[%s419 + $0x40] sm:$0xff]
        %v458 = vld [vmem:[%s419 + $0x48] sm:$0xff]
        %v459 = vld [vmem:[%s419 + $0x50] sm:$0xff]
        %v460 = vld [vmem:[%s419 + $0x58] sm:$0xff]
        %v461 = vld [vmem:[%s419 + $0x60] sm:$0xff]
        %v462 = vld [vmem:[%s419 + $0x68] sm:$0xff]
        %v463 = vld [vmem:[%s419 + $0x70] sm:$0xff]
        %v464 = vld [vmem:[%s419 + $0x78] sm:$0xff]
        %v465 = vld [vmem:[%s419 + $0x80] sm:$0xff]
        %v466 = vld [vmem:[%s419 + $0x88] sm:$0xff]
        %v467 = vld [vmem:[%s419 + $0x90] sm:$0xff]
        %v468 = vld [vmem:[%s419 + $0x98] sm:$0xff]
        %v469 = vld [vmem:[%s419 + $0xa0] sm:$0xff]
        %v470 = vld [vmem:[%s419 + $0xa8] sm:$0xff]
        %v471 = vld [vmem:[%s419 + $0xb0] sm:$0xff]
        %v472 = vld [vmem:[%s419 + $0xb8] sm:$0xff]
        %v473 = vld [vmem:[%s419 + $0xc0] sm:$0xff]
        %v474 = vld [vmem:[%s419 + $0xc8] sm:$0xff]
        %v475 = vld [vmem:[%s419 + $0xd0] sm:$0xff]
        %v476 = vld [vmem:[%s419 + $0xd8] sm:$0xff]
        %v477 = vld [vmem:[%s419 + $0xe0] sm:$0xff]
        %v478 = vld [vmem:[%s419 + $0xe8] sm:$0xff]
        %v479 = vld [vmem:[%s419 + $0xf0] sm:$0xff]
        %v480 = vld [vmem:[%s419 + $0xf8] sm:$0xff]
        %v481 = vld [vmem:[%s419 + $0x100] sm:$0xff]
        %v482 = vld [vmem:[%s419 + $0x108] sm:$0xff]
        %v483 = vld [vmem:[%s419 + $0x110] sm:$0xff]
        %v484 = vld [vmem:[%s419 + $0x118] sm:$0xff]
        %v485 = vld [vmem:[%s419 + $0x120] sm:$0xff]
        %v486 = vld [vmem:[%s419 + $0x128] sm:$0xff]
        %v487 = vld [vmem:[%s419 + $0x130] sm:$0xff]
        %v488 = vld [vmem:[%s419 + $0x138] sm:$0xff]
        %v489 = vld [vmem:[%s419 + $0x140] sm:$0xff]
        %v490 = vld [vmem:[%s419 + $0x148] sm:$0xff]
        %v491 = vld [vmem:[%s419 + $0x150] sm:$0xff]
        %v492 = vld [vmem:[%s419 + $0x158] sm:$0xff]
        %v493 = vld [vmem:[%s419 + $0x160] sm:$0xff]
        %v494 = vld [vmem:[%s419 + $0x168] sm:$0xff]
        %v495 = vld [vmem:[%s419 + $0x170] sm:$0xff]
        %v496 = vld [vmem:[%s419 + $0x178] sm:$0xff]
        %v497 = vld [vmem:[%s419 + $0x180] sm:$0xff]
        %v498 = vld [vmem:[%s419 + $0x188] sm:$0xff]
        %v499 = vld [vmem:[%s419 + $0x190] sm:$0xff]
        %v500 = vld [vmem:[%s419 + $0x198] sm:$0xff]
        %v501 = vld [vmem:[%s419 + $0x1a0] sm:$0xff]
        %v502 = vld [vmem:[%s419 + $0x1a8] sm:$0xff]
        %v503 = vld [vmem:[%s419 + $0x1b0] sm:$0xff]
        %v504 = vld [vmem:[%s419 + $0x1b8] sm:$0xff]
        %v505 = vld [vmem:[%s419 + $0x1c0] sm:$0xff]
        %v506 = vld [vmem:[%s419 + $0x1c8] sm:$0xff]
        %v507 = vld [vmem:[%s419 + $0x1d0] sm:$0xff]
        %v508 = vld [vmem:[%s419 + $0x1d8] sm:$0xff]
        %v509 = vld [vmem:[%s419 + $0x1e0] sm:$0xff]
        %v510 = vld [vmem:[%s419 + $0x1e8] sm:$0xff]
        %v511 = vld [vmem:[%s419 + $0x1f0] sm:$0xff]
        %v512 = vld [vmem:[%s419 + $0x1f8] sm:$0xff]
        %v513 = vld [vmem:[%s419 + $0x200] sm:$0xff]
        %v514 = vld [vmem:[%s419 + $0x208] sm:$0xff]
        %v515 = vld [vmem:[%s419 + $0x210] sm:$0xff]
        %v516 = vld [vmem:[%s419 + $0x218] sm:$0xff]
        %v517 = vld [vmem:[%s419 + $0x220] sm:$0xff]
        %v518 = vld [vmem:[%s419 + $0x228] sm:$0xff]
        %v519 = vld [vmem:[%s419 + $0x230] sm:$0xff]
        %v520 = vld [vmem:[%s419 + $0x238] sm:$0xff]
        %v521 = vld [vmem:[%s419 + $0x240] sm:$0xff]
        %v522 = vld [vmem:[%s419 + $0x248] sm:$0xff]
        %v523 = vld [vmem:[%s419 + $0x250] sm:$0xff]
        %v524 = vld [vmem:[%s419 + $0x258] sm:$0xff]
        %v525 = vld [vmem:[%s419 + $0x260] sm:$0xff]
        %v526 = vld [vmem:[%s419 + $0x268] sm:$0xff]
        %v527 = vld [vmem:[%s419 + $0x270] sm:$0xff]
        %v528 = vld [vmem:[%s419 + $0x278] sm:$0xff]
        %v529 = vld [vmem:[%s419 + $0x280] sm:$0xff]
        %v530 = vld [vmem:[%s419 + $0x288] sm:$0xff]
        %v531 = vld [vmem:[%s419 + $0x290] sm:$0xff]
        %v532 = vld [vmem:[%s419 + $0x298] sm:$0xff]
        %v533 = vld [vmem:[%s419 + $0x2a0] sm:$0xff]
        %v534 = vld [vmem:[%s419 + $0x2a8] sm:$0xff]
        %v535 = vld [vmem:[%s419 + $0x2b0] sm:$0xff]
        %v536 = vld [vmem:[%s419 + $0x2b8] sm:$0xff]
        %v537 = vld [vmem:[%s419 + $0x2c0] sm:$0xff]
        %v538 = vld [vmem:[%s419 + $0x2c8] sm:$0xff]
        %v539 = vld [vmem:[%s419 + $0x2d0] sm:$0xff]
        %v540 = vld [vmem:[%s419 + $0x2d8] sm:$0xff]
        %v541 = vld [vmem:[%s419 + $0x2e0] sm:$0xff]
        %v542 = vld [vmem:[%s419 + $0x2e8] sm:$0xff]
        %v543 = vld [vmem:[%s419 + $0x2f0] sm:$0xff]
        %v544 = vld [vmem:[%s419 + $0x2f8] sm:$0xff]
        %v545 = vld [vmem:[%s419 + $0x300] sm:$0xff]
        %v546 = vld [vmem:[%s419 + $0x308] sm:$0xff]
        %v547 = vld [vmem:[%s419 + $0x310] sm:$0xff]
        %v548 = vld [vmem:[%s419 + $0x318] sm:$0xff]
        %v549 = vld [vmem:[%s419 + $0x320] sm:$0xff]
        %v550 = vld [vmem:[%s419 + $0x328] sm:$0xff]
        %v551 = vld [vmem:[%s419 + $0x330] sm:$0xff]
        %v552 = vld [vmem:[%s419 + $0x338] sm:$0xff]
        %v553 = vld [vmem:[%s419 + $0x340] sm:$0xff]
        %v554 = vld [vmem:[%s419 + $0x348] sm:$0xff]
        %v555 = vld [vmem:[%s419 + $0x350] sm:$0xff]
        %v556 = vld [vmem:[%s419 + $0x358] sm:$0xff]
        %v557 = vld [vmem:[%s419 + $0x360] sm:$0xff]
        %v558 = vld [vmem:[%s419 + $0x368] sm:$0xff]
        %v559 = vld [vmem:[%s419 + $0x370] sm:$0xff]
        %v560 = vld [vmem:[%s419 + $0x378] sm:$0xff]
        %v561 = vld [vmem:[%s419 + $0x380] sm:$0xff]
        %v562 = vld [vmem:[%s419 + $0x388] sm:$0xff]
        %v563 = vld [vmem:[%s419 + $0x390] sm:$0xff]
        %v564 = vld [vmem:[%s419 + $0x398] sm:$0xff]
        %v565 = vld [vmem:[%s419 + $0x3a0] sm:$0xff]
        %v566 = vld [vmem:[%s419 + $0x3a8] sm:$0xff]
        %v567 = vld [vmem:[%s419 + $0x3b0] sm:$0xff]
        %v568 = vld [vmem:[%s419 + $0x3b8] sm:$0xff]
        %v569 = vld [vmem:[%s419 + $0x3c0] sm:$0xff]
        %v570 = vld [vmem:[%s419 + $0x3c8] sm:$0xff]
        %v571 = vld [vmem:[%s419 + $0x3d0] sm:$0xff]
        %v572 = vld [vmem:[%s419 + $0x3d8] sm:$0xff]
        %v573 = vld [vmem:[%s419 + $0x3e0] sm:$0xff]
        %v574 = vld [vmem:[%s419 + $0x3e8] sm:$0xff]
        %v575 = vld [vmem:[%s419 + $0x3f0] sm:$0xff]
        %v576 = vld [vmem:[%s419 + $0x3f8] sm:$0xff]
        %v577 = vld [vmem:[%s2] sm:$0x7]
        %579 = vset.pattern.permute.xlu0 0
        %580 = vperm.xlu0 %579, %v577
        %v581 = vpop.permute.xlu0 %580
        %v711 = vunpack.c.l.b16 %v449
        %v712 = vunpack.c.h.b16 %v449
        %v713 = vunpack.c.l.b16 %v450
        %v714 = vunpack.c.h.b16 %v450
        %v715 = vunpack.c.l.b16 %v451
        %v716 = vunpack.c.h.b16 %v451
        %v717 = vunpack.c.l.b16 %v452
        %v718 = vunpack.c.h.b16 %v452
        %v719 = vunpack.c.l.b16 %v453
        %v720 = vunpack.c.h.b16 %v453
        %v721 = vunpack.c.l.b16 %v454
        %v722 = vunpack.c.h.b16 %v454
        %v723 = vunpack.c.l.b16 %v455
        %v724 = vunpack.c.h.b16 %v455
        %v725 = vunpack.c.l.b16 %v456
        %v726 = vunpack.c.h.b16 %v456
        %v727 = vunpack.c.l.b16 %v457
        %v728 = vunpack.c.h.b16 %v457
        %v729 = vunpack.c.l.b16 %v458
        %v730 = vunpack.c.h.b16 %v458
        %v731 = vunpack.c.l.b16 %v459
        %v732 = vunpack.c.h.b16 %v459
        %v733 = vunpack.c.l.b16 %v460
        %v734 = vunpack.c.h.b16 %v460
        %v735 = vunpack.c.l.b16 %v461
        %v736 = vunpack.c.h.b16 %v461
        %v737 = vunpack.c.l.b16 %v462
        %v738 = vunpack.c.h.b16 %v462
        %v739 = vunpack.c.l.b16 %v463
        %v740 = vunpack.c.h.b16 %v463
        %v741 = vunpack.c.l.b16 %v464
        %v742 = vunpack.c.h.b16 %v464
        %v743 = vunpack.c.l.b16 %v465
        %v744 = vunpack.c.h.b16 %v465
        %v745 = vunpack.c.l.b16 %v466
        %v746 = vunpack.c.h.b16 %v466
        %v747 = vunpack.c.l.b16 %v467
        %v748 = vunpack.c.h.b16 %v467
        %v749 = vunpack.c.l.b16 %v468
        %v750 = vunpack.c.h.b16 %v468
        %v751 = vunpack.c.l.b16 %v469
        %v752 = vunpack.c.h.b16 %v469
        %v753 = vunpack.c.l.b16 %v470
        %v754 = vunpack.c.h.b16 %v470
        %v755 = vunpack.c.l.b16 %v471
        %v756 = vunpack.c.h.b16 %v471
        %v757 = vunpack.c.l.b16 %v472
        %v758 = vunpack.c.h.b16 %v472
        %v759 = vunpack.c.l.b16 %v473
        %v760 = vunpack.c.h.b16 %v473
        %v761 = vunpack.c.l.b16 %v474
        %v762 = vunpack.c.h.b16 %v474
        %v763 = vunpack.c.l.b16 %v475
        %v764 = vunpack.c.h.b16 %v475
        %v765 = vunpack.c.l.b16 %v476
        %v766 = vunpack.c.h.b16 %v476
        %v767 = vunpack.c.l.b16 %v477
        %v768 = vunpack.c.h.b16 %v477
        %v769 = vunpack.c.l.b16 %v478
        %v770 = vunpack.c.h.b16 %v478
        %v771 = vunpack.c.l.b16 %v479
        %v772 = vunpack.c.h.b16 %v479
        %v773 = vunpack.c.l.b16 %v480
        %v774 = vunpack.c.h.b16 %v480
        %v775 = vunpack.c.l.b16 %v481
        %v776 = vunpack.c.h.b16 %v481
        %v777 = vunpack.c.l.b16 %v482
        %v778 = vunpack.c.h.b16 %v482
        %v779 = vunpack.c.l.b16 %v483
        %v780 = vunpack.c.h.b16 %v483
        %v781 = vunpack.c.l.b16 %v484
        %v782 = vunpack.c.h.b16 %v484
        %v783 = vunpack.c.l.b16 %v485
        %v784 = vunpack.c.h.b16 %v485
        %v785 = vunpack.c.l.b16 %v486
        %v786 = vunpack.c.h.b16 %v486
        %v787 = vunpack.c.l.b16 %v487
        %v788 = vunpack.c.h.b16 %v487
        %v789 = vunpack.c.l.b16 %v488
        %v790 = vunpack.c.h.b16 %v488
        %v791 = vunpack.c.l.b16 %v489
        %v792 = vunpack.c.h.b16 %v489
        %v793 = vunpack.c.l.b16 %v490
        %v794 = vunpack.c.h.b16 %v490
        %v795 = vunpack.c.l.b16 %v491
        %v796 = vunpack.c.h.b16 %v491
        %v797 = vunpack.c.l.b16 %v492
        %v798 = vunpack.c.h.b16 %v492
        %v799 = vunpack.c.l.b16 %v493
        %v800 = vunpack.c.h.b16 %v493
        %v801 = vunpack.c.l.b16 %v494
        %v802 = vunpack.c.h.b16 %v494
        %v803 = vunpack.c.l.b16 %v495
        %v804 = vunpack.c.h.b16 %v495
        %v805 = vunpack.c.l.b16 %v496
        %v806 = vunpack.c.h.b16 %v496
        %v807 = vunpack.c.l.b16 %v497
        %v808 = vunpack.c.h.b16 %v497
        %v809 = vunpack.c.l.b16 %v498
        %v810 = vunpack.c.h.b16 %v498
        %v811 = vunpack.c.l.b16 %v499
        %v812 = vunpack.c.h.b16 %v499
        %v813 = vunpack.c.l.b16 %v500
        %v814 = vunpack.c.h.b16 %v500
        %v815 = vunpack.c.l.b16 %v501
        %v816 = vunpack.c.h.b16 %v501
        %v817 = vunpack.c.l.b16 %v502
        %v818 = vunpack.c.h.b16 %v502
        %v819 = vunpack.c.l.b16 %v503
        %v820 = vunpack.c.h.b16 %v503
        %v821 = vunpack.c.l.b16 %v504
        %v822 = vunpack.c.h.b16 %v504
        %v823 = vunpack.c.l.b16 %v505
        %v824 = vunpack.c.h.b16 %v505
        %v825 = vunpack.c.l.b16 %v506
        %v826 = vunpack.c.h.b16 %v506
        %v827 = vunpack.c.l.b16 %v507
        %v828 = vunpack.c.h.b16 %v507
        %v829 = vunpack.c.l.b16 %v508
        %v830 = vunpack.c.h.b16 %v508
        %v831 = vunpack.c.l.b16 %v509
        %v832 = vunpack.c.h.b16 %v509
        %v833 = vunpack.c.l.b16 %v510
        %v834 = vunpack.c.h.b16 %v510
        %v835 = vunpack.c.l.b16 %v511
        %v836 = vunpack.c.h.b16 %v511
        %v837 = vunpack.c.l.b16 %v512
        %v838 = vunpack.c.h.b16 %v512
        %v839 = vunpack.c.l.b16 %v513
        %v840 = vunpack.c.h.b16 %v513
        %v841 = vunpack.c.l.b16 %v514
        %v842 = vunpack.c.h.b16 %v514
        %v843 = vunpack.c.l.b16 %v515
        %v844 = vunpack.c.h.b16 %v515
        %v845 = vunpack.c.l.b16 %v516
        %v846 = vunpack.c.h.b16 %v516
        %v847 = vunpack.c.l.b16 %v517
        %v848 = vunpack.c.h.b16 %v517
        %v849 = vunpack.c.l.b16 %v518
        %v850 = vunpack.c.h.b16 %v518
        %v851 = vunpack.c.l.b16 %v519
        %v852 = vunpack.c.h.b16 %v519
        %v853 = vunpack.c.l.b16 %v520
        %v854 = vunpack.c.h.b16 %v520
        %v855 = vunpack.c.l.b16 %v521
        %v856 = vunpack.c.h.b16 %v521
        %v857 = vunpack.c.l.b16 %v522
        %v858 = vunpack.c.h.b16 %v522
        %v859 = vunpack.c.l.b16 %v523
        %v860 = vunpack.c.h.b16 %v523
        %v861 = vunpack.c.l.b16 %v524
        %v862 = vunpack.c.h.b16 %v524
        %v863 = vunpack.c.l.b16 %v525
        %v864 = vunpack.c.h.b16 %v525
        %v865 = vunpack.c.l.b16 %v526
        %v866 = vunpack.c.h.b16 %v526
        %v867 = vunpack.c.l.b16 %v527
        %v868 = vunpack.c.h.b16 %v527
        %v869 = vunpack.c.l.b16 %v528
        %v870 = vunpack.c.h.b16 %v528
        %v871 = vunpack.c.l.b16 %v529
        %v872 = vunpack.c.h.b16 %v529
        %v873 = vunpack.c.l.b16 %v530
        %v874 = vunpack.c.h.b16 %v530
        %v875 = vunpack.c.l.b16 %v531
        %v876 = vunpack.c.h.b16 %v531
        %v877 = vunpack.c.l.b16 %v532
        %v878 = vunpack.c.h.b16 %v532
        %v879 = vunpack.c.l.b16 %v533
        %v880 = vunpack.c.h.b16 %v533
        %v881 = vunpack.c.l.b16 %v534
        %v882 = vunpack.c.h.b16 %v534
        %v883 = vunpack.c.l.b16 %v535
        %v884 = vunpack.c.h.b16 %v535
        %v885 = vunpack.c.l.b16 %v536
        %v886 = vunpack.c.h.b16 %v536
        %v887 = vunpack.c.l.b16 %v537
        %v888 = vunpack.c.h.b16 %v537
        %v889 = vunpack.c.l.b16 %v538
        %v890 = vunpack.c.h.b16 %v538
        %v891 = vunpack.c.l.b16 %v539
        %v892 = vunpack.c.h.b16 %v539
        %v893 = vunpack.c.l.b16 %v540
        %v894 = vunpack.c.h.b16 %v540
        %v895 = vunpack.c.l.b16 %v541
        %v896 = vunpack.c.h.b16 %v541
        %v897 = vunpack.c.l.b16 %v542
        %v898 = vunpack.c.h.b16 %v542
        %v899 = vunpack.c.l.b16 %v543
        %v900 = vunpack.c.h.b16 %v543
        %v901 = vunpack.c.l.b16 %v544
        %v902 = vunpack.c.h.b16 %v544
        %v903 = vunpack.c.l.b16 %v545
        %v904 = vunpack.c.h.b16 %v545
        %v905 = vunpack.c.l.b16 %v546
        %v906 = vunpack.c.h.b16 %v546
        %v907 = vunpack.c.l.b16 %v547
        %v908 = vunpack.c.h.b16 %v547
        %v909 = vunpack.c.l.b16 %v548
        %v910 = vunpack.c.h.b16 %v548
        %v911 = vunpack.c.l.b16 %v549
        %v912 = vunpack.c.h.b16 %v549
        %v913 = vunpack.c.l.b16 %v550
        %v914 = vunpack.c.h.b16 %v550
        %v915 = vunpack.c.l.b16 %v551
        %v916 = vunpack.c.h.b16 %v551
        %v917 = vunpack.c.l.b16 %v552
        %v918 = vunpack.c.h.b16 %v552
        %v919 = vunpack.c.l.b16 %v553
        %v920 = vunpack.c.h.b16 %v553
        %v921 = vunpack.c.l.b16 %v554
        %v922 = vunpack.c.h.b16 %v554
        %v923 = vunpack.c.l.b16 %v555
        %v924 = vunpack.c.h.b16 %v555
        %v925 = vunpack.c.l.b16 %v556
        %v926 = vunpack.c.h.b16 %v556
        %v927 = vunpack.c.l.b16 %v557
        %v928 = vunpack.c.h.b16 %v557
        %v929 = vunpack.c.l.b16 %v558
        %v930 = vunpack.c.h.b16 %v558
        %v931 = vunpack.c.l.b16 %v559
        %v932 = vunpack.c.h.b16 %v559
        %v933 = vunpack.c.l.b16 %v560
        %v934 = vunpack.c.h.b16 %v560
        %v935 = vunpack.c.l.b16 %v561
        %v936 = vunpack.c.h.b16 %v561
        %v937 = vunpack.c.l.b16 %v562
        %v938 = vunpack.c.h.b16 %v562
        %v939 = vunpack.c.l.b16 %v563
        %v940 = vunpack.c.h.b16 %v563
        %v941 = vunpack.c.l.b16 %v564
        %v942 = vunpack.c.h.b16 %v564
        %v943 = vunpack.c.l.b16 %v565
        %v944 = vunpack.c.h.b16 %v565
        %v945 = vunpack.c.l.b16 %v566
        %v946 = vunpack.c.h.b16 %v566
        %v947 = vunpack.c.l.b16 %v567
        %v948 = vunpack.c.h.b16 %v567
        %v949 = vunpack.c.l.b16 %v568
        %v950 = vunpack.c.h.b16 %v568
        %v951 = vunpack.c.l.b16 %v569
        %v952 = vunpack.c.h.b16 %v569
        %v953 = vunpack.c.l.b16 %v570
        %v954 = vunpack.c.h.b16 %v570
        %v955 = vunpack.c.l.b16 %v571
        %v956 = vunpack.c.h.b16 %v571
        %v957 = vunpack.c.l.b16 %v572
        %v958 = vunpack.c.h.b16 %v572
        %v959 = vunpack.c.l.b16 %v573
        %v960 = vunpack.c.h.b16 %v573
        %v961 = vunpack.c.l.b16 %v574
        %v962 = vunpack.c.h.b16 %v574
        %v963 = vunpack.c.l.b16 %v575
        %v964 = vunpack.c.h.b16 %v575
        %v965 = vunpack.c.l.b16 %v576
        %v966 = vunpack.c.h.b16 %v576
        %v967 = vpack.c.b16 %v727, %v711
        %v968 = vpack.c.b16 %v728, %v712
        %v969 = vpack.c.b16 %v729, %v713
        %v970 = vpack.c.b16 %v730, %v714
        %v971 = vpack.c.b16 %v731, %v715
        %v972 = vpack.c.b16 %v732, %v716
        %v973 = vpack.c.b16 %v733, %v717
        %v974 = vpack.c.b16 %v734, %v718
        %v975 = vpack.c.b16 %v735, %v719
        %v976 = vpack.c.b16 %v736, %v720
        %v977 = vpack.c.b16 %v737, %v721
        %v978 = vpack.c.b16 %v738, %v722
        %v979 = vpack.c.b16 %v739, %v723
        %v980 = vpack.c.b16 %v740, %v724
        %v981 = vpack.c.b16 %v741, %v725
        %v982 = vpack.c.b16 %v742, %v726
        %v983 = vpack.c.b16 %v759, %v743
        %v984 = vpack.c.b16 %v760, %v744
        %v985 = vpack.c.b16 %v761, %v745
        %v986 = vpack.c.b16 %v762, %v746
        %v987 = vpack.c.b16 %v763, %v747
        %v988 = vpack.c.b16 %v764, %v748
        %v989 = vpack.c.b16 %v765, %v749
        %v990 = vpack.c.b16 %v766, %v750
        %v991 = vpack.c.b16 %v767, %v751
        %v992 = vpack.c.b16 %v768, %v752
        %v993 = vpack.c.b16 %v769, %v753
        %v994 = vpack.c.b16 %v770, %v754
        %v995 = vpack.c.b16 %v771, %v755
        %v996 = vpack.c.b16 %v772, %v756
        %v997 = vpack.c.b16 %v773, %v757
        %v998 = vpack.c.b16 %v774, %v758
        %v999 = vpack.c.b16 %v791, %v775
        %v1000 = vpack.c.b16 %v792, %v776
        %v1001 = vpack.c.b16 %v793, %v777
        %v1002 = vpack.c.b16 %v794, %v778
        %v1003 = vpack.c.b16 %v795, %v779
        %v1004 = vpack.c.b16 %v796, %v780
        %v1005 = vpack.c.b16 %v797, %v781
        %v1006 = vpack.c.b16 %v798, %v782
        %v1007 = vpack.c.b16 %v799, %v783
        %v1008 = vpack.c.b16 %v800, %v784
        %v1009 = vpack.c.b16 %v801, %v785
        %v1010 = vpack.c.b16 %v802, %v786
        %v1011 = vpack.c.b16 %v803, %v787
        %v1012 = vpack.c.b16 %v804, %v788
        %v1013 = vpack.c.b16 %v805, %v789
        %v1014 = vpack.c.b16 %v806, %v790
        %v1015 = vpack.c.b16 %v823, %v807
        %v1016 = vpack.c.b16 %v824, %v808
        %v1017 = vpack.c.b16 %v825, %v809
        %v1018 = vpack.c.b16 %v826, %v810
        %v1019 = vpack.c.b16 %v827, %v811
        %v1020 = vpack.c.b16 %v828, %v812
        %v1021 = vpack.c.b16 %v829, %v813
        %v1022 = vpack.c.b16 %v830, %v814
        %v1023 = vpack.c.b16 %v831, %v815
        %v1024 = vpack.c.b16 %v832, %v816
        %v1025 = vpack.c.b16 %v833, %v817
        %v1026 = vpack.c.b16 %v834, %v818
        %v1027 = vpack.c.b16 %v835, %v819
        %v1028 = vpack.c.b16 %v836, %v820
        %v1029 = vpack.c.b16 %v837, %v821
        %v1030 = vpack.c.b16 %v838, %v822
        %v1031 = vpack.c.b16 %v855, %v839
        %v1032 = vpack.c.b16 %v856, %v840
        %v1033 = vpack.c.b16 %v857, %v841
        %v1034 = vpack.c.b16 %v858, %v842
        %v1035 = vpack.c.b16 %v859, %v843
        %v1036 = vpack.c.b16 %v860, %v844
        %v1037 = vpack.c.b16 %v861, %v845
        %v1038 = vpack.c.b16 %v862, %v846
        %v1039 = vpack.c.b16 %v863, %v847
        %v1040 = vpack.c.b16 %v864, %v848
        %v1041 = vpack.c.b16 %v865, %v849
        %v1042 = vpack.c.b16 %v866, %v850
        %v1043 = vpack.c.b16 %v867, %v851
        %v1044 = vpack.c.b16 %v868, %v852
        %v1045 = vpack.c.b16 %v869, %v853
        %v1046 = vpack.c.b16 %v870, %v854
        %v1047 = vpack.c.b16 %v887, %v871
        %v1048 = vpack.c.b16 %v888, %v872
        %v1049 = vpack.c.b16 %v889, %v873
        %v1050 = vpack.c.b16 %v890, %v874
        %v1051 = vpack.c.b16 %v891, %v875
        %v1052 = vpack.c.b16 %v892, %v876
        %v1053 = vpack.c.b16 %v893, %v877
        %v1054 = vpack.c.b16 %v894, %v878
        %v1055 = vpack.c.b16 %v895, %v879
        %v1056 = vpack.c.b16 %v896, %v880
        %v1057 = vpack.c.b16 %v897, %v881
        %v1058 = vpack.c.b16 %v898, %v882
        %v1059 = vpack.c.b16 %v899, %v883
        %v1060 = vpack.c.b16 %v900, %v884
        %v1061 = vpack.c.b16 %v901, %v885
        %v1062 = vpack.c.b16 %v902, %v886
        %v1063 = vpack.c.b16 %v919, %v903
        %v1064 = vpack.c.b16 %v920, %v904
        %v1065 = vpack.c.b16 %v921, %v905
        %v1066 = vpack.c.b16 %v922, %v906
        %v1067 = vpack.c.b16 %v923, %v907
        %v1068 = vpack.c.b16 %v924, %v908
        %v1069 = vpack.c.b16 %v925, %v909
        %v1070 = vpack.c.b16 %v926, %v910
        %v1071 = vpack.c.b16 %v927, %v911
        %v1072 = vpack.c.b16 %v928, %v912
        %v1073 = vpack.c.b16 %v929, %v913
        %v1074 = vpack.c.b16 %v930, %v914
        %v1075 = vpack.c.b16 %v931, %v915
        %v1076 = vpack.c.b16 %v932, %v916
        %v1077 = vpack.c.b16 %v933, %v917
        %v1078 = vpack.c.b16 %v934, %v918
        %v1079 = vpack.c.b16 %v951, %v935
        %v1080 = vpack.c.b16 %v952, %v936
        %v1081 = vpack.c.b16 %v953, %v937
        %v1082 = vpack.c.b16 %v954, %v938
        %v1083 = vpack.c.b16 %v955, %v939
        %v1084 = vpack.c.b16 %v956, %v940
        %v1085 = vpack.c.b16 %v957, %v941
        %v1086 = vpack.c.b16 %v958, %v942
        %v1087 = vpack.c.b16 %v959, %v943
        %v1088 = vpack.c.b16 %v960, %v944
        %v1089 = vpack.c.b16 %v961, %v945
        %v1090 = vpack.c.b16 %v962, %v946
        %v1091 = vpack.c.b16 %v963, %v947
        %v1092 = vpack.c.b16 %v964, %v948
        %v1093 = vpack.c.b16 %v965, %v949
        %v1094 = vpack.c.b16 %v966, %v950
        %1223 = vmatprep.subr.bf16.mxu0 %v1080
        %1224 = vmatpush1.bf16.msra.mxu0 %v1079
        %1225 = vmatprep.subr.bf16.mxu0 %v1064
        %1226 = vmatpush1.bf16.msra.mxu0 %v1063
        %1227 = vmatprep.subr.bf16.mxu0 %v1048
        %1228 = vmatpush1.bf16.msra.mxu0 %v1047
        %1229 = vmatprep.subr.bf16.mxu0 %v1032
        %1230 = vmatpush1.bf16.msra.mxu0 %v1031
        %1231 = vmatprep.subr.bf16.mxu0 %v1016
        %1232 = vmatpush1.bf16.msra.mxu0 %v1015
        %1233 = vmatprep.subr.bf16.mxu0 %v1000
        %1234 = vmatpush1.bf16.msra.mxu0 %v999
        %1235 = vmatprep.subr.bf16.mxu0 %v984
        %1236 = vmatpush1.bf16.msra.mxu0 %v983
        %1237 = vmatprep.subr.bf16.mxu0 %v968
        %1238 = vmatpush1.bf16.msra.mxu0 %v967
        %1239 = vmatprep.subr.bf16.mxu0 0
        %1240 = vmatpush2.bf16.msra.mxu0 0
        %1241 = vmatprep.subr.bf16.mxu0 0
        %1242 = vmatpush2.bf16.msra.mxu0 0
        %1243 = vmatprep.subr.bf16.mxu0 0
        %1244 = vmatpush2.bf16.msra.mxu0 0
        %1245 = vmatprep.subr.bf16.mxu0 0
        %1246 = vmatpush2.bf16.msra.mxu0 0
        %1247 = vmatprep.subr.bf16.mxu0 0
        %1248 = vmatpush2.bf16.msra.mxu0 0
        %1249 = vmatprep.subr.bf16.mxu0 0
        %1250 = vmatpush2.bf16.msra.mxu0 0
        %1251 = vmatprep.subr.bf16.mxu0 0
        %1252 = vmatpush2.bf16.msra.mxu0 0
        %1253 = vmatprep.subr.bf16.mxu0 0
        %1254 = vmatpush2.bf16.msra.mxu0 0
        %1255 = vmatprep.mubr.bf16.mxu0 0
        %1256 = vmatmul.mubr.bf16.gmra.mxu0 %v448
        %v1257 = vpop.f32.mrf.mxu0
        %v1258 = vadd.f32 %v581, %v1257
        %v1259 = vpop.f32.mrf.mxu0
        %v1260 = vadd.f32 %v581, %v1259
        %v1261 = vpop.f32.mrf.mxu0
        %v1262 = vpop.f32.mrf.mxu0
        %1263 = vdwg.mxu0
        %1264 = vmatprep.subr.bf16.mxu0 %v1082
        %1265 = vmatpush1.bf16.msra.mxu0 %v1081
        %1266 = vmatprep.subr.bf16.mxu0 %v1066
        %1267 = vmatpush1.bf16.msra.mxu0 %v1065
        %1268 = vmatprep.subr.bf16.mxu0 %v1050
        %1269 = vmatpush1.bf16.msra.mxu0 %v1049
        %1270 = vmatprep.subr.bf16.mxu0 %v1034
        %1271 = vmatpush1.bf16.msra.mxu0 %v1033
        %1272 = vmatprep.subr.bf16.mxu0 %v1018
        %1273 = vmatpush1.bf16.msra.mxu0 %v1017
        %1274 = vmatprep.subr.bf16.mxu0 %v1002
        %1275 = vmatpush1.bf16.msra.mxu0 %v1001
        %1276 = vmatprep.subr.bf16.mxu0 %v986
        %1277 = vmatpush1.bf16.msra.mxu0 %v985
        %1278 = vmatprep.subr.bf16.mxu0 %v970
        %1279 = vmatpush1.bf16.msra.mxu0 %v969
        %1280 = vmatprep.subr.bf16.mxu0 0
        %1281 = vmatpush2.bf16.msra.mxu0 0
        %1282 = vmatprep.subr.bf16.mxu0 0
        %1283 = vmatpush2.bf16.msra.mxu0 0
        %1284 = vmatprep.subr.bf16.mxu0 0
        %1285 = vmatpush2.bf16.msra.mxu0 0
        %1286 = vmatprep.subr.bf16.mxu0 0
        %1287 = vmatpush2.bf16.msra.mxu0 0
        %1288 = vmatprep.subr.bf16.mxu0 0
        %1289 = vmatpush2.bf16.msra.mxu0 0
        %1290 = vmatprep.subr.bf16.mxu0 0
        %1291 = vmatpush2.bf16.msra.mxu0 0
        %1292 = vmatprep.subr.bf16.mxu0 0
        %1293 = vmatpush2.bf16.msra.mxu0 0
        %1294 = vmatprep.subr.bf16.mxu0 0
        %1295 = vmatpush2.bf16.msra.mxu0 0
        %1296 = vmatprep.mubr.bf16.mxu0 0
        %1297 = vmatmul.mubr.bf16.gmra.mxu0 %v448
        %v1298 = vpop.f32.mrf.mxu0
        %v1299 = vadd.f32 %v581, %v1298
        %v1300 = vpop.f32.mrf.mxu0
        %v1301 = vadd.f32 %v581, %v1300
        %v1302 = vpop.f32.mrf.mxu0
        %v1303 = vpop.f32.mrf.mxu0
        %1304 = vdwg.mxu0
        %1305 = vmatprep.subr.bf16.mxu0 %v1084
        %1306 = vmatpush1.bf16.msra.mxu0 %v1083
        %1307 = vmatprep.subr.bf16.mxu0 %v1068
        %1308 = vmatpush1.bf16.msra.mxu0 %v1067
        %1309 = vmatprep.subr.bf16.mxu0 %v1052
        %1310 = vmatpush1.bf16.msra.mxu0 %v1051
        %1311 = vmatprep.subr.bf16.mxu0 %v1036
        %1312 = vmatpush1.bf16.msra.mxu0 %v1035
        %1313 = vmatprep.subr.bf16.mxu0 %v1020
        %1314 = vmatpush1.bf16.msra.mxu0 %v1019
        %1315 = vmatprep.subr.bf16.mxu0 %v1004
        %1316 = vmatpush1.bf16.msra.mxu0 %v1003
        %1317 = vmatprep.subr.bf16.mxu0 %v988
        %1318 = vmatpush1.bf16.msra.mxu0 %v987
        %1319 = vmatprep.subr.bf16.mxu0 %v972
        %1320 = vmatpush1.bf16.msra.mxu0 %v971
        %1321 = vmatprep.subr.bf16.mxu0 0
        %1322 = vmatpush2.bf16.msra.mxu0 0
        %1323 = vmatprep.subr.bf16.mxu0 0
        %1324 = vmatpush2.bf16.msra.mxu0 0
        %1325 = vmatprep.subr.bf16.mxu0 0
        %1326 = vmatpush2.bf16.msra.mxu0 0
        %1327 = vmatprep.subr.bf16.mxu0 0
        %1328 = vmatpush2.bf16.msra.mxu0 0
        %1329 = vmatprep.subr.bf16.mxu0 0
        %1330 = vmatpush2.bf16.msra.mxu0 0
        %1331 = vmatprep.subr.bf16.mxu0 0
        %1332 = vmatpush2.bf16.msra.mxu0 0
        %1333 = vmatprep.subr.bf16.mxu0 0
        %1334 = vmatpush2.bf16.msra.mxu0 0
        %1335 = vmatprep.subr.bf16.mxu0 0
        %1336 = vmatpush2.bf16.msra.mxu0 0
        %1337 = vmatprep.mubr.bf16.mxu0 0
        %1338 = vmatmul.mubr.bf16.gmra.mxu0 %v448
        %v1339 = vpop.f32.mrf.mxu0
        %v1340 = vadd.f32 %v581, %v1339
        %v1341 = vpop.f32.mrf.mxu0
        %v1342 = vadd.f32 %v581, %v1341
        %v1343 = vpop.f32.mrf.mxu0
        %v1344 = vpop.f32.mrf.mxu0
        %1345 = vdwg.mxu0
        %1346 = vmatprep.subr.bf16.mxu0 %v1086
        %1347 = vmatpush1.bf16.msra.mxu0 %v1085
        %1348 = vmatprep.subr.bf16.mxu0 %v1070
        %1349 = vmatpush1.bf16.msra.mxu0 %v1069
        %1350 = vmatprep.subr.bf16.mxu0 %v1054
        %1351 = vmatpush1.bf16.msra.mxu0 %v1053
        %1352 = vmatprep.subr.bf16.mxu0 %v1038
        %1353 = vmatpush1.bf16.msra.mxu0 %v1037
        %1354 = vmatprep.subr.bf16.mxu0 %v1022
        %1355 = vmatpush1.bf16.msra.mxu0 %v1021
        %1356 = vmatprep.subr.bf16.mxu0 %v1006
        %1357 = vmatpush1.bf16.msra.mxu0 %v1005
        %1358 = vmatprep.subr.bf16.mxu0 %v990
        %1359 = vmatpush1.bf16.msra.mxu0 %v989
        %1360 = vmatprep.subr.bf16.mxu0 %v974
        %1361 = vmatpush1.bf16.msra.mxu0 %v973
        %1362 = vmatprep.subr.bf16.mxu0 0
        %1363 = vmatpush2.bf16.msra.mxu0 0
        %1364 = vmatprep.subr.bf16.mxu0 0
        %1365 = vmatpush2.bf16.msra.mxu0 0
        %1366 = vmatprep.subr.bf16.mxu0 0
        %1367 = vmatpush2.bf16.msra.mxu0 0
        %1368 = vmatprep.subr.bf16.mxu0 0
        %1369 = vmatpush2.bf16.msra.mxu0 0
        %1370 = vmatprep.subr.bf16.mxu0 0
        %1371 = vmatpush2.bf16.msra.mxu0 0
        %1372 = vmatprep.subr.bf16.mxu0 0
        %1373 = vmatpush2.bf16.msra.mxu0 0
        %1374 = vmatprep.subr.bf16.mxu0 0
        %1375 = vmatpush2.bf16.msra.mxu0 0
        %1376 = vmatprep.subr.bf16.mxu0 0
        %1377 = vmatpush2.bf16.msra.mxu0 0
        %1378 = vmatprep.mubr.bf16.mxu0 0
        %1379 = vmatmul.mubr.bf16.gmra.mxu0 %v448
        %v1380 = vpop.f32.mrf.mxu0
        %v1381 = vadd.f32 %v581, %v1380
        %v1382 = vpop.f32.mrf.mxu0
        %v1383 = vadd.f32 %v581, %v1382
        %v1384 = vpop.f32.mrf.mxu0
        %v1385 = vpop.f32.mrf.mxu0
        %1386 = vdwg.mxu0
        %1387 = vmatprep.subr.bf16.mxu0 %v1088
        %1388 = vmatpush1.bf16.msra.mxu0 %v1087
        %1389 = vmatprep.subr.bf16.mxu0 %v1072
        %1390 = vmatpush1.bf16.msra.mxu0 %v1071
        %1391 = vmatprep.subr.bf16.mxu0 %v1056
        %1392 = vmatpush1.bf16.msra.mxu0 %v1055
        %1393 = vmatprep.subr.bf16.mxu0 %v1040
        %1394 = vmatpush1.bf16.msra.mxu0 %v1039
        %1395 = vmatprep.subr.bf16.mxu0 %v1024
        %1396 = vmatpush1.bf16.msra.mxu0 %v1023
        %1397 = vmatprep.subr.bf16.mxu0 %v1008
        %1398 = vmatpush1.bf16.msra.mxu0 %v1007
        %1399 = vmatprep.subr.bf16.mxu0 %v992
        %1400 = vmatpush1.bf16.msra.mxu0 %v991
        %1401 = vmatprep.subr.bf16.mxu0 %v976
        %1402 = vmatpush1.bf16.msra.mxu0 %v975
        %1403 = vmatprep.subr.bf16.mxu0 0
        %1404 = vmatpush2.bf16.msra.mxu0 0
        %1405 = vmatprep.subr.bf16.mxu0 0
        %1406 = vmatpush2.bf16.msra.mxu0 0
        %1407 = vmatprep.subr.bf16.mxu0 0
        %1408 = vmatpush2.bf16.msra.mxu0 0
        %1409 = vmatprep.subr.bf16.mxu0 0
        %1410 = vmatpush2.bf16.msra.mxu0 0
        %1411 = vmatprep.subr.bf16.mxu0 0
        %1412 = vmatpush2.bf16.msra.mxu0 0
        %1413 = vmatprep.subr.bf16.mxu0 0
        %1414 = vmatpush2.bf16.msra.mxu0 0
        %1415 = vmatprep.subr.bf16.mxu0 0
        %1416 = vmatpush2.bf16.msra.mxu0 0
        %1417 = vmatprep.subr.bf16.mxu0 0
        %1418 = vmatpush2.bf16.msra.mxu0 0
        %1419 = vmatprep.mubr.bf16.mxu0 0
        %1420 = vmatmul.mubr.bf16.gmra.mxu0 %v448
        %v1421 = vpop.f32.mrf.mxu0
        %v1422 = vadd.f32 %v581, %v1421
        %v1423 = vpop.f32.mrf.mxu0
        %v1424 = vadd.f32 %v581, %v1423
        %v1425 = vpop.f32.mrf.mxu0
        %v1426 = vpop.f32.mrf.mxu0
        %1427 = vdwg.mxu0
        %1428 = vmatprep.subr.bf16.mxu0 %v1090
        %1429 = vmatpush1.bf16.msra.mxu0 %v1089
        %1430 = vmatprep.subr.bf16.mxu0 %v1074
        %1431 = vmatpush1.bf16.msra.mxu0 %v1073
        %1432 = vmatprep.subr.bf16.mxu0 %v1058
        %1433 = vmatpush1.bf16.msra.mxu0 %v1057
        %1434 = vmatprep.subr.bf16.mxu0 %v1042
        %1435 = vmatpush1.bf16.msra.mxu0 %v1041
        %1436 = vmatprep.subr.bf16.mxu0 %v1026
        %1437 = vmatpush1.bf16.msra.mxu0 %v1025
        %1438 = vmatprep.subr.bf16.mxu0 %v1010
        %1439 = vmatpush1.bf16.msra.mxu0 %v1009
        %1440 = vmatprep.subr.bf16.mxu0 %v994
        %1441 = vmatpush1.bf16.msra.mxu0 %v993
        %1442 = vmatprep.subr.bf16.mxu0 %v978
        %1443 = vmatpush1.bf16.msra.mxu0 %v977
        %1444 = vmatprep.subr.bf16.mxu0 0
        %1445 = vmatpush2.bf16.msra.mxu0 0
        %1446 = vmatprep.subr.bf16.mxu0 0
        %1447 = vmatpush2.bf16.msra.mxu0 0
        %1448 = vmatprep.subr.bf16.mxu0 0
        %1449 = vmatpush2.bf16.msra.mxu0 0
        %1450 = vmatprep.subr.bf16.mxu0 0
        %1451 = vmatpush2.bf16.msra.mxu0 0
        %1452 = vmatprep.subr.bf16.mxu0 0
        %1453 = vmatpush2.bf16.msra.mxu0 0
        %1454 = vmatprep.subr.bf16.mxu0 0
        %1455 = vmatpush2.bf16.msra.mxu0 0
        %1456 = vmatprep.subr.bf16.mxu0 0
        %1457 = vmatpush2.bf16.msra.mxu0 0
        %1458 = vmatprep.subr.bf16.mxu0 0
        %1459 = vmatpush2.bf16.msra.mxu0 0
        %1460 = vmatprep.mubr.bf16.mxu0 0
        %1461 = vmatmul.mubr.bf16.gmra.mxu0 %v448
        %v1462 = vpop.f32.mrf.mxu0
        %v1463 = vadd.f32 %v581, %v1462
        %v1464 = vpop.f32.mrf.mxu0
        %v1465 = vadd.f32 %v581, %v1464
        %v1466 = vpop.f32.mrf.mxu0
        %v1467 = vpop.f32.mrf.mxu0
        %1468 = vdwg.mxu0
        %1469 = vmatprep.subr.bf16.mxu0 %v1092
        %1470 = vmatpush1.bf16.msra.mxu0 %v1091
        %1471 = vmatprep.subr.bf16.mxu0 %v1076
        %1472 = vmatpush1.bf16.msra.mxu0 %v1075
        %1473 = vmatprep.subr.bf16.mxu0 %v1060
        %1474 = vmatpush1.bf16.msra.mxu0 %v1059
        %1475 = vmatprep.subr.bf16.mxu0 %v1044
        %1476 = vmatpush1.bf16.msra.mxu0 %v1043
        %1477 = vmatprep.subr.bf16.mxu0 %v1028
        %1478 = vmatpush1.bf16.msra.mxu0 %v1027
        %1479 = vmatprep.subr.bf16.mxu0 %v1012
        %1480 = vmatpush1.bf16.msra.mxu0 %v1011
        %1481 = vmatprep.subr.bf16.mxu0 %v996
        %1482 = vmatpush1.bf16.msra.mxu0 %v995
        %1483 = vmatprep.subr.bf16.mxu0 %v980
        %1484 = vmatpush1.bf16.msra.mxu0 %v979
        %1485 = vmatprep.subr.bf16.mxu0 0
        %1486 = vmatpush2.bf16.msra.mxu0 0
        %1487 = vmatprep.subr.bf16.mxu0 0
        %1488 = vmatpush2.bf16.msra.mxu0 0
        %1489 = vmatprep.subr.bf16.mxu0 0
        %1490 = vmatpush2.bf16.msra.mxu0 0
        %1491 = vmatprep.subr.bf16.mxu0 0
        %1492 = vmatpush2.bf16.msra.mxu0 0
        %1493 = vmatprep.subr.bf16.mxu0 0
        %1494 = vmatpush2.bf16.msra.mxu0 0
        %1495 = vmatprep.subr.bf16.mxu0 0
        %1496 = vmatpush2.bf16.msra.mxu0 0
        %1497 = vmatprep.subr.bf16.mxu0 0
        %1498 = vmatpush2.bf16.msra.mxu0 0
        %1499 = vmatprep.subr.bf16.mxu0 0
        %1500 = vmatpush2.bf16.msra.mxu0 0
        %1501 = vmatprep.mubr.bf16.mxu0 0
        %1502 = vmatmul.mubr.bf16.gmra.mxu0 %v448
        %v1503 = vpop.f32.mrf.mxu0
        %v1504 = vadd.f32 %v581, %v1503
        %v1505 = vpop.f32.mrf.mxu0
        %v1506 = vadd.f32 %v581, %v1505
        %v1507 = vpop.f32.mrf.mxu0
        %v1508 = vpop.f32.mrf.mxu0
        %1509 = vdwg.mxu0
        %1510 = vmatprep.subr.bf16.mxu0 %v1094
        %1511 = vmatpush1.bf16.msra.mxu0 %v1093
        %1512 = vmatprep.subr.bf16.mxu0 %v1078
        %1513 = vmatpush1.bf16.msra.mxu0 %v1077
        %1514 = vmatprep.subr.bf16.mxu0 %v1062
        %1515 = vmatpush1.bf16.msra.mxu0 %v1061
        %1516 = vmatprep.subr.bf16.mxu0 %v1046
        %1517 = vmatpush1.bf16.msra.mxu0 %v1045
        %1518 = vmatprep.subr.bf16.mxu0 %v1030
        %1519 = vmatpush1.bf16.msra.mxu0 %v1029
        %1520 = vmatprep.subr.bf16.mxu0 %v1014
        %1521 = vmatpush1.bf16.msra.mxu0 %v1013
        %1522 = vmatprep.subr.bf16.mxu0 %v998
        %1523 = vmatpush1.bf16.msra.mxu0 %v997
        %1524 = vmatprep.subr.bf16.mxu0 %v982
        %1525 = vmatpush1.bf16.msra.mxu0 %v981
        %1526 = vmatprep.subr.bf16.mxu0 0
        %1527 = vmatpush2.bf16.msra.mxu0 0
        %1528 = vmatprep.subr.bf16.mxu0 0
        %1529 = vmatpush2.bf16.msra.mxu0 0
        %1530 = vmatprep.subr.bf16.mxu0 0
        %1531 = vmatpush2.bf16.msra.mxu0 0
        %1532 = vmatprep.subr.bf16.mxu0 0
        %1533 = vmatpush2.bf16.msra.mxu0 0
        %1534 = vmatprep.subr.bf16.mxu0 0
        %1535 = vmatpush2.bf16.msra.mxu0 0
        %1536 = vmatprep.subr.bf16.mxu0 0
        %1537 = vmatpush2.bf16.msra.mxu0 0
        %1538 = vmatprep.subr.bf16.mxu0 0
        %1539 = vmatpush2.bf16.msra.mxu0 0
        %1540 = vmatprep.subr.bf16.mxu0 0
        %1541 = vmatpush2.bf16.msra.mxu0 0
        %1542 = vmatprep.mubr.bf16.mxu0 0
        %1543 = vmatmul.mubr.bf16.gmra.mxu0 %v448
        %v1544 = vpop.f32.mrf.mxu0
        %v1545 = vadd.f32 %v581, %v1544
        %v1546 = vpop.f32.mrf.mxu0
        %v1547 = vadd.f32 %v581, %v1546
        %v1548 = vpop.f32.mrf.mxu0
        %v1549 = vpop.f32.mrf.mxu0
        %1550 = vdwg.mxu0
        %v1551 = vtanh.pop %v1258
        %v1552 = vtanh.pop %v1260
        %v1553 = vtanh.pop %v1299
        %v1554 = vtanh.pop %v1301
        %v1555 = vtanh.pop %v1340
        %v1556 = vtanh.pop %v1342
        %v1557 = vtanh.pop %v1381
        %v1558 = vtanh.pop %v1383
        %v1559 = vtanh.pop %v1422
        %v1560 = vtanh.pop %v1424
        %v1561 = vtanh.pop %v1463
        %v1562 = vtanh.pop %v1465
        %v1563 = vtanh.pop %v1504
        %v1564 = vtanh.pop %v1506
        %v1565 = vtanh.pop %v1545
        %v1566 = vtanh.pop %v1547
        %v1583 = vcombine.low %v1551, %v1552
        %v1584 = vcombine.low %v1553, %v1554
        %v1585 = vcombine.low %v1555, %v1556
        %v1586 = vcombine.low %v1557, %v1558
        %v1587 = vcombine.low %v1559, %v1560
        %v1588 = vcombine.low %v1561, %v1562
        %v1589 = vcombine.low %v1563, %v1564
        %v1590 = vcombine.low %v1565, %v1566
        %1599 = vst [vmem:[%s445] sm:$0x77] %v1583
        %1600 = vst [vmem:[%s445 + $0x8] sm:$0x77] %v1584
        %1601 = vst [vmem:[%s445 + $0x10] sm:$0x77] %v1585
        %1602 = vst [vmem:[%s445 + $0x18] sm:$0x77] %v1586
        %1603 = vst [vmem:[%s445 + $0x20] sm:$0x77] %v1587
        %1604 = vst [vmem:[%s445 + $0x28] sm:$0x77] %v1588
        %1605 = vst [vmem:[%s445 + $0x30] sm:$0x77] %v1589
        %1606 = vst [vmem:[%s445 + $0x38] sm:$0x77] %v1590
        %s1607 = smul.u32 16, %s14
        %p1608 = scmp.lt.s32.totalorder %s1607, 63
        %s1609 = scalar_select %p1608, %s1607, 63
        %s1610 = smul.addr %s1609, 4
        %s1611 = scalar_lea.vmem %s3, %s1610
        // Predicated region
        $region56: #{generator_forward.9} parent=50 // pred_check
          %p1612 = pneg %p100
        $region57: #{generator_forward.9} parent=50 // pred_check_branch
          %1614 = sbr.rel (%p1612) target = $region59
        $region58: #{generator_forward.9} parent=50 // pred_region
          %s1615 = smul.u32 16, %s14
        $region59: #{generator_forward.9} parent=50 // pred_fallthru
          _
      $region51: #{generator_forward.9} parent=5 // pred_fallthru
        _
      %p1616 = scmp.le.s32.totalorder 2, %s9
      // Predicated region
      $region60: #{generator_forward.9} parent=5 // pred_check
        %p1617 = pneg %p1616
      $region61: #{generator_forward.9} parent=5 // pred_check_branch
        %1619 = sbr.rel (%p1617) target = $region63
      $region62: #{generator_forward.9} parent=5 // pred_region
        %s1620 = ssub.s32 %s9, 2
        // Predicated region
        $region64: #{generator_forward.9} parent=62 // pred_check
          %p1621 = pneg %p106
        $region65: #{generator_forward.9} parent=62 // pred_check_branch
          %1623 = sbr.rel (%p1621) target = $region67
        $region66: #{generator_forward.9} parent=62 // pred_region
          %s1624 = smul.u32 16, %s15
          %p1625 = scmp.lt.s32.totalorder %s1624, 63
          %s1626 = scalar_select %p1625, %s1624, 63
          %s1627 = smul.addr %s1626, 4
          %s1628 = scalar_lea.vmem %s3, %s1627
        $region67: #{generator_forward.9} parent=62 // pred_fallthru
          _
      $region63: #{generator_forward.9} parent=5 // pred_fallthru
        _
    $region6: #{generator_forward.9} parent=1 // loop_footer
      %s13 = sadd.s32 1, %s9
    $region7: #{generator_forward.9} parent=1 // loop_footer_branch
      %8 = sbr.rel target = $region3
    $region8: #{generator_forward.9} parent=1 // loop_exit
      _

</llo_original>
